<compile_context>
chip_gen: v7x
topology: tpu7x:2x2x1
jax: 0.10.0
libtpu: 0.0.40
codegen_flags: <defaults>
</compile_context>

<pallas_src>
import math
import jax
import jax.numpy as jnp
from jax import lax
from jax.experimental import pallas as pl
from jax.experimental.pallas import tpu as pltpu


def _round_up(x, m):
    return (x + m - 1) // m * m


def _sigmoid_via_tanh(x):
    # Exact identity: sigmoid(x) = 0.5 * tanh(0.5 * x) + 0.5  (1 EUP op)
    return 0.5 * jnp.tanh(0.5 * x) + 0.5


# ---------------------------------------------------------------------------
# Fused kernel: per (Tb, Bb) time-block
#   gx_blk = x_blk @ Wx^T + (bx+bh)            (one MXU matmul, VMEM scratch)
#   for t in block: LSTM cell update with h @ Wh^T (h/c persistent in VMEM)
#   out_blk = hs_blk @ Wfc^T + bfc             (one MXU matmul -> output)
# ---------------------------------------------------------------------------
def lstm_fused_kernel(x_ref, wxT_ref, whT_ref, b_ref, wfcT_ref, bfc_ref,
                      out_ref, gx_sc, hs_sc, h_sc, c_sc):
    # reset the recurrent state at the first time block
    @pl.when(pl.program_id(0) == 0)
    def _():
        h_sc[...] = jnp.zeros_like(h_sc)
        c_sc[...] = jnp.zeros_like(c_sc)

    Tb, Bb, Dp = x_ref.shape
    Hp = h_sc.shape[1]

    # 1) hoisted input projection for the whole block (bf16 in, f32 out)
    x_blk = x_ref[...].reshape(Tb * Bb, Dp)
    gx = jnp.dot(x_blk, wxT_ref[...], preferred_element_type=jnp.float32)
    gx_sc[...] = (gx + b_ref[...]).reshape(Tb, Bb, 4 * Hp)

    # 2) serial recurrence: only h_prev @ Wh^T per step
    def step(i, carry):
        h_prev = h_sc[...]                         # (Bb, Hp) f32
        c_prev = c_sc[...]                         # (Bb, Hp) f32
        gates = gx_sc[i] + jnp.dot(
            h_prev.astype(whT_ref.dtype), whT_ref[...],
            preferred_element_type=jnp.float32)    # (Bb, 4*Hp) f32
        # gate blocks are lane-aligned (Hp is a multiple of 128)
        i_g = _sigmoid_via_tanh(gates[:, 0 * Hp:1 * Hp])
        f_g = _sigmoid_via_tanh(gates[:, 1 * Hp:2 * Hp])
        g_g = jnp.tanh(gates[:, 2 * Hp:3 * Hp])
        o_g = _sigmoid_via_tanh(gates[:, 3 * Hp:4 * Hp])
        c_new = c_prev * f_g + i_g * g_g
        h_new = o_g * jnp.tanh(c_new)
        c_sc[...] = c_new
        h_sc[...] = h_new
        hs_sc[i] = h_new
        return carry

    lax.fori_loop(0, Tb, step, 0, unroll=min(Tb, 8))

    # 3) fused final FC over the block's hidden states
    hs = hs_sc[...].reshape(Tb * Bb, Hp).astype(wfcT_ref.dtype)
    out = jnp.dot(hs, wfcT_ref[...], preferred_element_type=jnp.float32)
    out_ref[...] = (out + bfc_ref[...]).reshape(Tb, Bb, Hp).astype(out_ref.dtype)


# ---------------------------------------------------------------------------
# One-time parameter packing (transpose, per-gate pad H->Hp, pre-sum biases,
# bf16 casts for the MXU operands).  Hoistable out of the forward call.
# ---------------------------------------------------------------------------
def pack_params(params, input_dim, hidden_dim):
    wx, bx, wh, bh, wfc, bfc = params
    D, H = input_dim, hidden_dim
    Dp = _round_up(D, 128)
    Hp = _round_up(H, 128)
    G = 4 * Hp
    wxT_p = jnp.pad(wx.T.reshape(D, 4, H),
                    ((0, Dp - D), (0, 0), (0, Hp - H))
                    ).reshape(Dp, G).astype(jnp.bfloat16)
    whT_p = jnp.pad(wh.T.reshape(H, 4, H),
                    ((0, Hp - H), (0, 0), (0, Hp - H))
                    ).reshape(Hp, G).astype(jnp.bfloat16)
    b_p = jnp.pad((bx + bh).reshape(4, H),
                  ((0, 0), (0, Hp - H))).reshape(1, G).astype(jnp.float32)
    wfcT_p = jnp.pad(wfc.T, ((0, Hp - H), (0, Hp - H))).astype(jnp.bfloat16)
    bfc_p = jnp.pad(bfc, (0, Hp - H)).reshape(1, Hp).astype(jnp.float32)
    return wxT_p, whT_p, b_p, wfcT_p, bfc_p


# ---------------------------------------------------------------------------
# Wrapper: full LSTMModel.forward
# ---------------------------------------------------------------------------
def lstm_model_pallas(x, params, *, time_block=16):
    """x: (B, T, D) float32 -> (B, T, H) float32."""
    wx, bx, wh, bh, wfc, bfc = params
    B, T, D = x.shape
    H = wh.shape[1]

    Dp = _round_up(D, 128)
    Hp = _round_up(H, 128)       # lane-dense gate / output blocks
    G = 4 * Hp
    Bp = _round_up(B, 8)         # single batch chunk (no megacore split)
    Tb = min(time_block, T)
    Tp = _round_up(T, Tb)
    nT = Tp // Tb

    wxT_p, whT_p, b_p, wfcT_p, bfc_p = pack_params(params, D, H)

    # time-major, padded, bf16 input for the MXU
    x_tm = jnp.transpose(x, (1, 0, 2))                            # (T, B, D)
    x_p = jnp.pad(x_tm, ((0, Tp - T), (0, Bp - B), (0, Dp - D))
                  ).astype(jnp.bfloat16)

    # VMEM budget: double-buffered x/out blocks + resident weights + scratch
    need = (2 * (Tb * Bp * Dp * 2 + Tb * Bp * Hp * 4)
            + 2 * (Dp * G * 2 + Hp * G * 2 + Hp * Hp * 2 + G * 4 + Hp * 4)
            + Tb * Bp * G * 4 + Tb * Bp * Hp * 4 + 2 * Bp * Hp * 4
            + (4 << 20))
    vmem_limit = int(min(max(need, 16 << 20), 64 << 20))

    cost = pl.CostEstimate(
        flops=2 * Tp * Bp * Dp * G + 2 * Tp * Bp * Hp * G
              + 2 * Tp * Bp * Hp * Hp + 10 * Tp * Bp * Hp,
        transcendentals=5 * Tp * Bp * Hp,
        bytes_accessed=x_p.size * 2 + Tp * Bp * Hp * 4
                       + Dp * G * 2 + Hp * G * 2 + Hp * Hp * 2,
    )

    out = pl.pallas_call(
        lstm_fused_kernel,
        out_shape=jax.ShapeDtypeStruct((Tp, Bp, Hp), jnp.float32),
        grid_spec=pltpu.PrefetchScalarGridSpec(
            num_scalar_prefetch=0,
            grid=(nT,),                                   # serial time blocks
            in_specs=[
                pl.BlockSpec((Tb, Bp, Dp), lambda t: (t, 0, 0)),   # x block
                pl.BlockSpec((Dp, G), lambda t: (0, 0)),           # Wx^T
                pl.BlockSpec((Hp, G), lambda t: (0, 0)),           # Wh^T
                pl.BlockSpec((1, G), lambda t: (0, 0)),            # bx + bh
                pl.BlockSpec((Hp, Hp), lambda t: (0, 0)),          # Wfc^T
                pl.BlockSpec((1, Hp), lambda t: (0, 0)),           # bfc
            ],
            out_specs=pl.BlockSpec((Tb, Bp, Hp), lambda t: (t, 0, 0)),
            scratch_shapes=[
                pltpu.VMEM((Tb, Bp, G), jnp.float32),    # gates_x block
                pltpu.VMEM((Tb, Bp, Hp), jnp.float32),   # hidden states block
                pltpu.VMEM((Bp, Hp), jnp.float32),       # h state
                pltpu.VMEM((Bp, Hp), jnp.float32),       # c state
            ],
        ),
        compiler_params=pltpu.CompilerParams(
            dimension_semantics=("arbitrary",),
            vmem_limit_bytes=vmem_limit),
        cost_estimate=cost,
    )(x_p, wxT_p, whT_p, b_p, wfcT_p, bfc_p)

    out = out[:T, :B, :H]                                 # unpad
    return jnp.transpose(out, (1, 0, 2))                  # (B, T, H)


# ---------------------------------------------------------------------------
# Parameter init + pure-JAX reference (mirrors the PyTorch module)
# ---------------------------------------------------------------------------
def init_params(key, input_dim, hidden_dim):
    ks = jax.random.split(key, 6)
    std = 1.0 / math.sqrt(hidden_dim)          # LSTMCell.reset_parameters
    wx = jax.random.uniform(ks[0], (4 * hidden_dim, input_dim), jnp.float32, -std, std)
    bx = jax.random.uniform(ks[1], (4 * hidden_dim,), jnp.float32, -std, std)
    wh = jax.random.uniform(ks[2], (4 * hidden_dim, hidden_dim), jnp.float32, -std, std)
    bh = jax.random.uniform(ks[3], (4 * hidden_dim,), jnp.float32, -std, std)
    fstd = 1.0 / math.sqrt(hidden_dim)         # nn.Linear default bound
    wfc = jax.random.uniform(ks[4], (hidden_dim, hidden_dim), jnp.float32, -fstd, fstd)
    bfc = jax.random.uniform(ks[5], (hidden_dim,), jnp.float32, -fstd, fstd)
    return (wx, bx, wh, bh, wfc, bfc)


def lstm_model_ref(x, params):
    wx, bx, wh, bh, wfc, bfc = params
    B, T, D = x.shape
    H = wh.shape[1]

    def step(carry, x_t):
        h, c = carry
        gates = x_t @ wx.T + bx + h @ wh.T + bh
        i = jax.nn.sigmoid(gates[:, 0 * H:1 * H])
        f = jax.nn.sigmoid(gates[:, 1 * H:2 * H])
        g = jnp.tanh(gates[:, 2 * H:3 * H])
        o = jax.nn.sigmoid(gates[:, 3 * H:4 * H])
        c_new = c * f + i * g
        h_new = o * jnp.tanh(c_new)
        return (h_new, c_new), h_new

    h0 = jnp.zeros((B, H), x.dtype)
    c0 = jnp.zeros((B, H), x.dtype)
    _, hs = lax.scan(step, (h0, c0), jnp.transpose(x, (1, 0, 2)))
    out = jnp.transpose(hs, (1, 0, 2))          # (B, T, H)
    return out @ wfc.T + bfc


if __name__ == "__main__":
    key = jax.random.PRNGKey(0)

    # Test 1: canonical small shapes
    B, T, D, H = 2, 8, 16, 32
    kx, kp = jax.random.split(key)
    x = jax.random.normal(kx, (B, T, D), jnp.float32)
    params = init_params(kp, D, H)
    out = jax.block_until_ready(lstm_model_pallas(x, params))
    ref = lstm_model_ref(x, params)
    assert out.shape == (B, T, H)
    # bf16 MXU operands (f32 state / accumulation) -> relaxed tolerance
    assert jnp.allclose(out, ref, atol=3e-2, rtol=3e-2), \
        float(jnp.max(jnp.abs(out - ref)))

    # Test 2: exercises multiple time blocks, time padding, state carry-over
    B2, T2, D2, H2 = 3, 20, 12, 16
    kx2, kp2 = jax.random.split(kp)
    x2 = jax.random.normal(kx2, (B2, T2, D2), jnp.float32)
    params2 = init_params(kp2, D2, H2)
    out2 = jax.block_until_ready(lstm_model_pallas(x2, params2, time_block=16))
    ref2 = lstm_model_ref(x2, params2)
    assert out2.shape == (B2, T2, H2)
    assert jnp.allclose(out2, ref2, atol=3e-2, rtol=3e-2), \
        float(jnp.max(jnp.abs(out2 - ref2)))

    print("KERNEL_OK")
</pallas_src>

<mosaic_0001>
module attributes {stable_mosaic.version = 11 : i64} {
  func.func @lstm_fused_kernel(%arg0: i32, %arg1: memref<8x8x128xbf16, #tpu.memory_space<vmem>>, %arg2: memref<128x512xbf16, #tpu.memory_space<vmem>>, %arg3: memref<128x512xbf16, #tpu.memory_space<vmem>>, %arg4: memref<1x512xf32, #tpu.memory_space<vmem>>, %arg5: memref<128x128xbf16, #tpu.memory_space<vmem>>, %arg6: memref<1x128xf32, #tpu.memory_space<vmem>>, %arg7: memref<8x8x128xf32, #tpu.memory_space<vmem>>, %arg8: memref<8x8x512xf32, #tpu.memory_space<vmem>>, %arg9: memref<8x8x128xf32, #tpu.memory_space<vmem>>, %arg10: memref<8x128xf32, #tpu.memory_space<vmem>>, %arg11: memref<8x128xf32, #tpu.memory_space<vmem>>) attributes {dimension_semantics = [#tpu.dimension_semantics<arbitrary>], iteration_bounds = array<i64: 1>, scalar_prefetch = 0 : i64, scratch_operands = 4 : i64, tpu.core_type = #tpu.core_type<tc>, window_params = [{transform_indices = @transform_0, window_bounds = array<i64: 8, 8, 128>}, {pipeline_mode = #tpu.pipeline_mode<synchronous>, transform_indices = @transform_1, window_bounds = array<i64: 128, 512>}, {pipeline_mode = #tpu.pipeline_mode<synchronous>, transform_indices = @transform_2, window_bounds = array<i64: 128, 512>}, {pipeline_mode = #tpu.pipeline_mode<synchronous>, transform_indices = @transform_3, window_bounds = array<i64: 1, 512>}, {pipeline_mode = #tpu.pipeline_mode<synchronous>, transform_indices = @transform_4, window_bounds = array<i64: 128, 128>}, {pipeline_mode = #tpu.pipeline_mode<synchronous>, transform_indices = @transform_5, window_bounds = array<i64: 1, 128>}, {transform_indices = @transform_6, window_bounds = array<i64: 8, 8, 128>}]} {
    %c0_i32 = arith.constant 0 : i32
    %0 = arith.cmpi eq, %arg0, %c0_i32 : i32
    %1 = arith.extui %0 : i1 to i32
    %c0_i32_0 = arith.constant 0 : i32
    %2 = arith.cmpi ne, %1, %c0_i32_0 : i32
    scf.if %2 {
      %cst_214 = arith.constant 0.000000e+00 : f32
      %390 = vector.broadcast %cst_214 : f32 to vector<8x128xf32>
      %c0_215 = arith.constant 0 : index
      %c0_216 = arith.constant 0 : index
      %391 = vector.load %arg10[%c0_215, %c0_216] : memref<8x128xf32, #tpu.memory_space<vmem>>, vector<8x128xf32>
      tpu.vector_store %arg10[%c0_215, %c0_216], %390 {strides = array<i32>} : memref<8x128xf32, #tpu.memory_space<vmem>>, vector<8x128xf32>,
      %cst_217 = arith.constant 0.000000e+00 : f32
      %392 = vector.broadcast %cst_217 : f32 to vector<8x128xf32>
      %c0_218 = arith.constant 0 : index
      %c0_219 = arith.constant 0 : index
      %393 = vector.load %arg11[%c0_218, %c0_219] : memref<8x128xf32, #tpu.memory_space<vmem>>, vector<8x128xf32>
      tpu.vector_store %arg11[%c0_218, %c0_219], %392 {strides = array<i32>} : memref<8x128xf32, #tpu.memory_space<vmem>>, vector<8x128xf32>,
    } else {
    }
    %c0 = arith.constant 0 : index
    %c0_1 = arith.constant 0 : index
    %c0_2 = arith.constant 0 : index
    %3 = vector.load %arg1[%c0, %c0_1, %c0_2] : memref<8x8x128xbf16, #tpu.memory_space<vmem>>, vector<8x8x128xbf16>
    %4 = vector.shape_cast %3 : vector<8x8x128xbf16> to vector<64x128xbf16>
    %c0_3 = arith.constant 0 : index
    %c0_4 = arith.constant 0 : index
    %5 = vector.load %arg2[%c0_3, %c0_4] : memref<128x512xbf16, #tpu.memory_space<vmem>>, vector<128x512xbf16>
    %cst = arith.constant dense<0.000000e+00> : vector<64x512xf32>
    %6 = tpu.matmul %4, %5, %cst {dimension_numbers = #tpu.dot_dimension_numbers<[1], [0], [0], [1], [0, 0, 1, 1], [], []>} : vector<64x128xbf16>, vector<128x512xbf16>, vector<64x512xf32> -> vector<64x512xf32>
    %c0_5 = arith.constant 0 : index
    %c0_6 = arith.constant 0 : index
    %7 = vector.load %arg4[%c0_5, %c0_6] : memref<1x512xf32, #tpu.memory_space<vmem>>, vector<1x512xf32>
    %8 = vector.broadcast %7 : vector<1x512xf32> to vector<64x512xf32>
    %9 = arith.addf %6, %8 : vector<64x512xf32>
    %10 = vector.shape_cast %9 : vector<64x512xf32> to vector<8x8x512xf32>
    %c0_7 = arith.constant 0 : index
    %c0_8 = arith.constant 0 : index
    %c0_9 = arith.constant 0 : index
    %11 = vector.load %arg8[%c0_7, %c0_8, %c0_9] : memref<8x8x512xf32, #tpu.memory_space<vmem>>, vector<8x8x512xf32>
    tpu.vector_store %arg8[%c0_7, %c0_8, %c0_9], %10 {strides = array<i32>} : memref<8x8x512xf32, #tpu.memory_space<vmem>>, vector<8x8x512xf32>,
    %c0_i32_10 = arith.constant 0 : i32
    %c0_11 = arith.constant 0 : index
    %c0_12 = arith.constant 0 : index
    %12 = vector.load %arg10[%c0_11, %c0_12] : memref<8x128xf32, #tpu.memory_space<vmem>>, vector<8x128xf32>
    %c0_13 = arith.constant 0 : index
    %c0_14 = arith.constant 0 : index
    %13 = vector.load %arg11[%c0_13, %c0_14] : memref<8x128xf32, #tpu.memory_space<vmem>>, vector<8x128xf32>
    %14 = arith.index_cast %c0_i32_10 : i32 to index
    %c0_15 = arith.constant 0 : index
    %c0_16 = arith.constant 0 : index
    %15 = vector.load %arg8[%14, %c0_15, %c0_16] : memref<8x8x512xf32, #tpu.memory_space<vmem>>, vector<1x8x512xf32>
    %16 = vector.shape_cast %15 : vector<1x8x512xf32> to vector<8x512xf32>
    %17 = arith.truncf %12 : vector<8x128xf32> to vector<8x128xbf16>
    %c0_17 = arith.constant 0 : index
    %c0_18 = arith.constant 0 : index
    %18 = vector.load %arg3[%c0_17, %c0_18] : memref<128x512xbf16, #tpu.memory_space<vmem>>, vector<128x512xbf16>
    %cst_19 = arith.constant dense<0.000000e+00> : vector<8x512xf32>
    %19 = tpu.matmul %17, %18, %cst_19 {dimension_numbers = #tpu.dot_dimension_numbers<[1], [0], [0], [1], [0, 0, 1, 1], [], []>} : vector<8x128xbf16>, vector<128x512xbf16>, vector<8x512xf32> -> vector<8x512xf32>
    %20 = arith.addf %16, %19 : vector<8x512xf32>
    %21 = vector.extract_strided_slice %20 {offsets = [0, 0], sizes = [8, 128], strides = [1, 1]} : vector<8x512xf32> to vector<8x128xf32>
    %cst_20 = arith.constant 5.000000e-01 : f32
    %22 = vector.broadcast %cst_20 : f32 to vector<8x128xf32>
    %23 = arith.mulf %22, %21 : vector<8x128xf32>
    %24 = math.tanh %23 : vector<8x128xf32>
    %cst_21 = arith.constant 5.000000e-01 : f32
    %25 = vector.broadcast %cst_21 : f32 to vector<8x128xf32>
    %26 = arith.mulf %25, %24 : vector<8x128xf32>
    %cst_22 = arith.constant 5.000000e-01 : f32
    %27 = vector.broadcast %cst_22 : f32 to vector<8x128xf32>
    %28 = arith.addf %26, %27 : vector<8x128xf32>
    %29 = vector.extract_strided_slice %20 {offsets = [0, 128], sizes = [8, 128], strides = [1, 1]} : vector<8x512xf32> to vector<8x128xf32>
    %cst_23 = arith.constant 5.000000e-01 : f32
    %30 = vector.broadcast %cst_23 : f32 to vector<8x128xf32>
    %31 = arith.mulf %30, %29 : vector<8x128xf32>
    %32 = math.tanh %31 : vector<8x128xf32>
    %cst_24 = arith.constant 5.000000e-01 : f32
    %33 = vector.broadcast %cst_24 : f32 to vector<8x128xf32>
    %34 = arith.mulf %33, %32 : vector<8x128xf32>
    %cst_25 = arith.constant 5.000000e-01 : f32
    %35 = vector.broadcast %cst_25 : f32 to vector<8x128xf32>
    %36 = arith.addf %34, %35 : vector<8x128xf32>
    %37 = vector.extract_strided_slice %20 {offsets = [0, 256], sizes = [8, 128], strides = [1, 1]} : vector<8x512xf32> to vector<8x128xf32>
    %38 = math.tanh %37 : vector<8x128xf32>
    %39 = vector.extract_strided_slice %20 {offsets = [0, 384], sizes = [8, 128], strides = [1, 1]} : vector<8x512xf32> to vector<8x128xf32>
    %cst_26 = arith.constant 5.000000e-01 : f32
    %40 = vector.broadcast %cst_26 : f32 to vector<8x128xf32>
    %41 = arith.mulf %40, %39 : vector<8x128xf32>
    %42 = math.tanh %41 : vector<8x128xf32>
    %cst_27 = arith.constant 5.000000e-01 : f32
    %43 = vector.broadcast %cst_27 : f32 to vector<8x128xf32>
    %44 = arith.mulf %43, %42 : vector<8x128xf32>
    %cst_28 = arith.constant 5.000000e-01 : f32
    %45 = vector.broadcast %cst_28 : f32 to vector<8x128xf32>
    %46 = arith.addf %44, %45 : vector<8x128xf32>
    %47 = arith.mulf %13, %36 : vector<8x128xf32>
    %48 = arith.mulf %28, %38 : vector<8x128xf32>
    %49 = arith.addf %47, %48 : vector<8x128xf32>
    %50 = math.tanh %49 : vector<8x128xf32>
    %51 = arith.mulf %46, %50 : vector<8x128xf32>
    %c0_29 = arith.constant 0 : index
    %c0_30 = arith.constant 0 : index
    %52 = vector.load %arg11[%c0_29, %c0_30] : memref<8x128xf32, #tpu.memory_space<vmem>>, vector<8x128xf32>
    tpu.vector_store %arg11[%c0_29, %c0_30], %49 {strides = array<i32>} : memref<8x128xf32, #tpu.memory_space<vmem>>, vector<8x128xf32>,
    %c0_31 = arith.constant 0 : index
    %c0_32 = arith.constant 0 : index
    %53 = vector.load %arg10[%c0_31, %c0_32] : memref<8x128xf32, #tpu.memory_space<vmem>>, vector<8x128xf32>
    tpu.vector_store %arg10[%c0_31, %c0_32], %51 {strides = array<i32>} : memref<8x128xf32, #tpu.memory_space<vmem>>, vector<8x128xf32>,
    %54 = arith.index_cast %c0_i32_10 : i32 to index
    %c0_33 = arith.constant 0 : index
    %c0_34 = arith.constant 0 : index
    %55 = vector.load %arg9[%54, %c0_33, %c0_34] : memref<8x8x128xf32, #tpu.memory_space<vmem>>, vector<1x8x128xf32>
    %56 = vector.shape_cast %55 : vector<1x8x128xf32> to vector<8x128xf32>
    %57 = vector.shape_cast %51 : vector<8x128xf32> to vector<1x8x128xf32>
    tpu.vector_store %arg9[%54, %c0_33, %c0_34], %57 {strides = array<i32>} : memref<8x8x128xf32, #tpu.memory_space<vmem>>, vector<1x8x128xf32>,
    %c1_i32 = arith.constant 1 : i32
    %c0_35 = arith.constant 0 : index
    %c0_36 = arith.constant 0 : index
    %58 = vector.load %arg10[%c0_35, %c0_36] : memref<8x128xf32, #tpu.memory_space<vmem>>, vector<8x128xf32>
    %c0_37 = arith.constant 0 : index
    %c0_38 = arith.constant 0 : index
    %59 = vector.load %arg11[%c0_37, %c0_38] : memref<8x128xf32, #tpu.memory_space<vmem>>, vector<8x128xf32>
    %60 = arith.index_cast %c1_i32 : i32 to index
    %c0_39 = arith.constant 0 : index
    %c0_40 = arith.constant 0 : index
    %61 = vector.load %arg8[%60, %c0_39, %c0_40] : memref<8x8x512xf32, #tpu.memory_space<vmem>>, vector<1x8x512xf32>
    %62 = vector.shape_cast %61 : vector<1x8x512xf32> to vector<8x512xf32>
    %63 = arith.truncf %58 : vector<8x128xf32> to vector<8x128xbf16>
    %c0_41 = arith.constant 0 : index
    %c0_42 = arith.constant 0 : index
    %64 = vector.load %arg3[%c0_41, %c0_42] : memref<128x512xbf16, #tpu.memory_space<vmem>>, vector<128x512xbf16>
    %cst_43 = arith.constant dense<0.000000e+00> : vector<8x512xf32>
    %65 = tpu.matmul %63, %64, %cst_43 {dimension_numbers = #tpu.dot_dimension_numbers<[1], [0], [0], [1], [0, 0, 1, 1], [], []>} : vector<8x128xbf16>, vector<128x512xbf16>, vector<8x512xf32> -> vector<8x512xf32>
    %66 = arith.addf %62, %65 : vector<8x512xf32>
    %67 = vector.extract_strided_slice %66 {offsets = [0, 0], sizes = [8, 128], strides = [1, 1]} : vector<8x512xf32> to vector<8x128xf32>
    %cst_44 = arith.constant 5.000000e-01 : f32
    %68 = vector.broadcast %cst_44 : f32 to vector<8x128xf32>
    %69 = arith.mulf %68, %67 : vector<8x128xf32>
    %70 = math.tanh %69 : vector<8x128xf32>
    %cst_45 = arith.constant 5.000000e-01 : f32
    %71 = vector.broadcast %cst_45 : f32 to vector<8x128xf32>
    %72 = arith.mulf %71, %70 : vector<8x128xf32>
    %cst_46 = arith.constant 5.000000e-01 : f32
    %73 = vector.broadcast %cst_46 : f32 to vector<8x128xf32>
    %74 = arith.addf %72, %73 : vector<8x128xf32>
    %75 = vector.extract_strided_slice %66 {offsets = [0, 128], sizes = [8, 128], strides = [1, 1]} : vector<8x512xf32> to vector<8x128xf32>
    %cst_47 = arith.constant 5.000000e-01 : f32
    %76 = vector.broadcast %cst_47 : f32 to vector<8x128xf32>
    %77 = arith.mulf %76, %75 : vector<8x128xf32>
    %78 = math.tanh %77 : vector<8x128xf32>
    %cst_48 = arith.constant 5.000000e-01 : f32
    %79 = vector.broadcast %cst_48 : f32 to vector<8x128xf32>
    %80 = arith.mulf %79, %78 : vector<8x128xf32>
    %cst_49 = arith.constant 5.000000e-01 : f32
    %81 = vector.broadcast %cst_49 : f32 to vector<8x128xf32>
    %82 = arith.addf %80, %81 : vector<8x128xf32>
    %83 = vector.extract_strided_slice %66 {offsets = [0, 256], sizes = [8, 128], strides = [1, 1]} : vector<8x512xf32> to vector<8x128xf32>
    %84 = math.tanh %83 : vector<8x128xf32>
    %85 = vector.extract_strided_slice %66 {offsets = [0, 384], sizes = [8, 128], strides = [1, 1]} : vector<8x512xf32> to vector<8x128xf32>
    %cst_50 = arith.constant 5.000000e-01 : f32
    %86 = vector.broadcast %cst_50 : f32 to vector<8x128xf32>
    %87 = arith.mulf %86, %85 : vector<8x128xf32>
    %88 = math.tanh %87 : vector<8x128xf32>
    %cst_51 = arith.constant 5.000000e-01 : f32
    %89 = vector.broadcast %cst_51 : f32 to vector<8x128xf32>
    %90 = arith.mulf %89, %88 : vector<8x128xf32>
    %cst_52 = arith.constant 5.000000e-01 : f32
    %91 = vector.broadcast %cst_52 : f32 to vector<8x128xf32>
    %92 = arith.addf %90, %91 : vector<8x128xf32>
    %93 = arith.mulf %59, %82 : vector<8x128xf32>
    %94 = arith.mulf %74, %84 : vector<8x128xf32>
    %95 = arith.addf %93, %94 : vector<8x128xf32>
    %96 = math.tanh %95 : vector<8x128xf32>
    %97 = arith.mulf %92, %96 : vector<8x128xf32>
    %c0_53 = arith.constant 0 : index
    %c0_54 = arith.constant 0 : index
    %98 = vector.load %arg11[%c0_53, %c0_54] : memref<8x128xf32, #tpu.memory_space<vmem>>, vector<8x128xf32>
    tpu.vector_store %arg11[%c0_53, %c0_54], %95 {strides = array<i32>} : memref<8x128xf32, #tpu.memory_space<vmem>>, vector<8x128xf32>,
    %c0_55 = arith.constant 0 : index
    %c0_56 = arith.constant 0 : index
    %99 = vector.load %arg10[%c0_55, %c0_56] : memref<8x128xf32, #tpu.memory_space<vmem>>, vector<8x128xf32>
    tpu.vector_store %arg10[%c0_55, %c0_56], %97 {strides = array<i32>} : memref<8x128xf32, #tpu.memory_space<vmem>>, vector<8x128xf32>,
    %100 = arith.index_cast %c1_i32 : i32 to index
    %c0_57 = arith.constant 0 : index
    %c0_58 = arith.constant 0 : index
    %101 = vector.load %arg9[%100, %c0_57, %c0_58] : memref<8x8x128xf32, #tpu.memory_space<vmem>>, vector<1x8x128xf32>
    %102 = vector.shape_cast %101 : vector<1x8x128xf32> to vector<8x128xf32>
    %103 = vector.shape_cast %97 : vector<8x128xf32> to vector<1x8x128xf32>
    tpu.vector_store %arg9[%100, %c0_57, %c0_58], %103 {strides = array<i32>} : memref<8x8x128xf32, #tpu.memory_space<vmem>>, vector<1x8x128xf32>,
    %c2_i32 = arith.constant 2 : i32
    %c0_59 = arith.constant 0 : index
    %c0_60 = arith.constant 0 : index
    %104 = vector.load %arg10[%c0_59, %c0_60] : memref<8x128xf32, #tpu.memory_space<vmem>>, vector<8x128xf32>
    %c0_61 = arith.constant 0 : index
    %c0_62 = arith.constant 0 : index
    %105 = vector.load %arg11[%c0_61, %c0_62] : memref<8x128xf32, #tpu.memory_space<vmem>>, vector<8x128xf32>
    %106 = arith.index_cast %c2_i32 : i32 to index
    %c0_63 = arith.constant 0 : index
    %c0_64 = arith.constant 0 : index
    %107 = vector.load %arg8[%106, %c0_63, %c0_64] : memref<8x8x512xf32, #tpu.memory_space<vmem>>, vector<1x8x512xf32>
    %108 = vector.shape_cast %107 : vector<1x8x512xf32> to vector<8x512xf32>
    %109 = arith.truncf %104 : vector<8x128xf32> to vector<8x128xbf16>
    %c0_65 = arith.constant 0 : index
    %c0_66 = arith.constant 0 : index
    %110 = vector.load %arg3[%c0_65, %c0_66] : memref<128x512xbf16, #tpu.memory_space<vmem>>, vector<128x512xbf16>
    %cst_67 = arith.constant dense<0.000000e+00> : vector<8x512xf32>
    %111 = tpu.matmul %109, %110, %cst_67 {dimension_numbers = #tpu.dot_dimension_numbers<[1], [0], [0], [1], [0, 0, 1, 1], [], []>} : vector<8x128xbf16>, vector<128x512xbf16>, vector<8x512xf32> -> vector<8x512xf32>
    %112 = arith.addf %108, %111 : vector<8x512xf32>
    %113 = vector.extract_strided_slice %112 {offsets = [0, 0], sizes = [8, 128], strides = [1, 1]} : vector<8x512xf32> to vector<8x128xf32>
    %cst_68 = arith.constant 5.000000e-01 : f32
    %114 = vector.broadcast %cst_68 : f32 to vector<8x128xf32>
    %115 = arith.mulf %114, %113 : vector<8x128xf32>
    %116 = math.tanh %115 : vector<8x128xf32>
    %cst_69 = arith.constant 5.000000e-01 : f32
    %117 = vector.broadcast %cst_69 : f32 to vector<8x128xf32>
    %118 = arith.mulf %117, %116 : vector<8x128xf32>
    %cst_70 = arith.constant 5.000000e-01 : f32
    %119 = vector.broadcast %cst_70 : f32 to vector<8x128xf32>
    %120 = arith.addf %118, %119 : vector<8x128xf32>
    %121 = vector.extract_strided_slice %112 {offsets = [0, 128], sizes = [8, 128], strides = [1, 1]} : vector<8x512xf32> to vector<8x128xf32>
    %cst_71 = arith.constant 5.000000e-01 : f32
    %122 = vector.broadcast %cst_71 : f32 to vector<8x128xf32>
    %123 = arith.mulf %122, %121 : vector<8x128xf32>
    %124 = math.tanh %123 : vector<8x128xf32>
    %cst_72 = arith.constant 5.000000e-01 : f32
    %125 = vector.broadcast %cst_72 : f32 to vector<8x128xf32>
    %126 = arith.mulf %125, %124 : vector<8x128xf32>
    %cst_73 = arith.constant 5.000000e-01 : f32
    %127 = vector.broadcast %cst_73 : f32 to vector<8x128xf32>
    %128 = arith.addf %126, %127 : vector<8x128xf32>
    %129 = vector.extract_strided_slice %112 {offsets = [0, 256], sizes = [8, 128], strides = [1, 1]} : vector<8x512xf32> to vector<8x128xf32>
    %130 = math.tanh %129 : vector<8x128xf32>
    %131 = vector.extract_strided_slice %112 {offsets = [0, 384], sizes = [8, 128], strides = [1, 1]} : vector<8x512xf32> to vector<8x128xf32>
    %cst_74 = arith.constant 5.000000e-01 : f32
    %132 = vector.broadcast %cst_74 : f32 to vector<8x128xf32>
    %133 = arith.mulf %132, %131 : vector<8x128xf32>
    %134 = math.tanh %133 : vector<8x128xf32>
    %cst_75 = arith.constant 5.000000e-01 : f32
    %135 = vector.broadcast %cst_75 : f32 to vector<8x128xf32>
    %136 = arith.mulf %135, %134 : vector<8x128xf32>
    %cst_76 = arith.constant 5.000000e-01 : f32
    %137 = vector.broadcast %cst_76 : f32 to vector<8x128xf32>
    %138 = arith.addf %136, %137 : vector<8x128xf32>
    %139 = arith.mulf %105, %128 : vector<8x128xf32>
    %140 = arith.mulf %120, %130 : vector<8x128xf32>
    %141 = arith.addf %139, %140 : vector<8x128xf32>
    %142 = math.tanh %141 : vector<8x128xf32>
    %143 = arith.mulf %138, %142 : vector<8x128xf32>
    %c0_77 = arith.constant 0 : index
    %c0_78 = arith.constant 0 : index
    %144 = vector.load %arg11[%c0_77, %c0_78] : memref<8x128xf32, #tpu.memory_space<vmem>>, vector<8x128xf32>
    tpu.vector_store %arg11[%c0_77, %c0_78], %141 {strides = array<i32>} : memref<8x128xf32, #tpu.memory_space<vmem>>, vector<8x128xf32>,
    %c0_79 = arith.constant 0 : index
    %c0_80 = arith.constant 0 : index
    %145 = vector.load %arg10[%c0_79, %c0_80] : memref<8x128xf32, #tpu.memory_space<vmem>>, vector<8x128xf32>
    tpu.vector_store %arg10[%c0_79, %c0_80], %143 {strides = array<i32>} : memref<8x128xf32, #tpu.memory_space<vmem>>, vector<8x128xf32>,
    %146 = arith.index_cast %c2_i32 : i32 to index
    %c0_81 = arith.constant 0 : index
    %c0_82 = arith.constant 0 : index
    %147 = vector.load %arg9[%146, %c0_81, %c0_82] : memref<8x8x128xf32, #tpu.memory_space<vmem>>, vector<1x8x128xf32>
    %148 = vector.shape_cast %147 : vector<1x8x128xf32> to vector<8x128xf32>
    %149 = vector.shape_cast %143 : vector<8x128xf32> to vector<1x8x128xf32>
    tpu.vector_store %arg9[%146, %c0_81, %c0_82], %149 {strides = array<i32>} : memref<8x8x128xf32, #tpu.memory_space<vmem>>, vector<1x8x128xf32>,
    %c3_i32 = arith.constant 3 : i32
    %c0_83 = arith.constant 0 : index
    %c0_84 = arith.constant 0 : index
    %150 = vector.load %arg10[%c0_83, %c0_84] : memref<8x128xf32, #tpu.memory_space<vmem>>, vector<8x128xf32>
    %c0_85 = arith.constant 0 : index
    %c0_86 = arith.constant 0 : index
    %151 = vector.load %arg11[%c0_85, %c0_86] : memref<8x128xf32, #tpu.memory_space<vmem>>, vector<8x128xf32>
    %152 = arith.index_cast %c3_i32 : i32 to index
    %c0_87 = arith.constant 0 : index
    %c0_88 = arith.constant 0 : index
    %153 = vector.load %arg8[%152, %c0_87, %c0_88] : memref<8x8x512xf32, #tpu.memory_space<vmem>>, vector<1x8x512xf32>
    %154 = vector.shape_cast %153 : vector<1x8x512xf32> to vector<8x512xf32>
    %155 = arith.truncf %150 : vector<8x128xf32> to vector<8x128xbf16>
    %c0_89 = arith.constant 0 : index
    %c0_90 = arith.constant 0 : index
    %156 = vector.load %arg3[%c0_89, %c0_90] : memref<128x512xbf16, #tpu.memory_space<vmem>>, vector<128x512xbf16>
    %cst_91 = arith.constant dense<0.000000e+00> : vector<8x512xf32>
    %157 = tpu.matmul %155, %156, %cst_91 {dimension_numbers = #tpu.dot_dimension_numbers<[1], [0], [0], [1], [0, 0, 1, 1], [], []>} : vector<8x128xbf16>, vector<128x512xbf16>, vector<8x512xf32> -> vector<8x512xf32>
    %158 = arith.addf %154, %157 : vector<8x512xf32>
    %159 = vector.extract_strided_slice %158 {offsets = [0, 0], sizes = [8, 128], strides = [1, 1]} : vector<8x512xf32> to vector<8x128xf32>
    %cst_92 = arith.constant 5.000000e-01 : f32
    %160 = vector.broadcast %cst_92 : f32 to vector<8x128xf32>
    %161 = arith.mulf %160, %159 : vector<8x128xf32>
    %162 = math.tanh %161 : vector<8x128xf32>
    %cst_93 = arith.constant 5.000000e-01 : f32
    %163 = vector.broadcast %cst_93 : f32 to vector<8x128xf32>
    %164 = arith.mulf %163, %162 : vector<8x128xf32>
    %cst_94 = arith.constant 5.000000e-01 : f32
    %165 = vector.broadcast %cst_94 : f32 to vector<8x128xf32>
    %166 = arith.addf %164, %165 : vector<8x128xf32>
    %167 = vector.extract_strided_slice %158 {offsets = [0, 128], sizes = [8, 128], strides = [1, 1]} : vector<8x512xf32> to vector<8x128xf32>
    %cst_95 = arith.constant 5.000000e-01 : f32
    %168 = vector.broadcast %cst_95 : f32 to vector<8x128xf32>
    %169 = arith.mulf %168, %167 : vector<8x128xf32>
    %170 = math.tanh %169 : vector<8x128xf32>
    %cst_96 = arith.constant 5.000000e-01 : f32
    %171 = vector.broadcast %cst_96 : f32 to vector<8x128xf32>
    %172 = arith.mulf %171, %170 : vector<8x128xf32>
    %cst_97 = arith.constant 5.000000e-01 : f32
    %173 = vector.broadcast %cst_97 : f32 to vector<8x128xf32>
    %174 = arith.addf %172, %173 : vector<8x128xf32>
    %175 = vector.extract_strided_slice %158 {offsets = [0, 256], sizes = [8, 128], strides = [1, 1]} : vector<8x512xf32> to vector<8x128xf32>
    %176 = math.tanh %175 : vector<8x128xf32>
    %177 = vector.extract_strided_slice %158 {offsets = [0, 384], sizes = [8, 128], strides = [1, 1]} : vector<8x512xf32> to vector<8x128xf32>
    %cst_98 = arith.constant 5.000000e-01 : f32
    %178 = vector.broadcast %cst_98 : f32 to vector<8x128xf32>
    %179 = arith.mulf %178, %177 : vector<8x128xf32>
    %180 = math.tanh %179 : vector<8x128xf32>
    %cst_99 = arith.constant 5.000000e-01 : f32
    %181 = vector.broadcast %cst_99 : f32 to vector<8x128xf32>
    %182 = arith.mulf %181, %180 : vector<8x128xf32>
    %cst_100 = arith.constant 5.000000e-01 : f32
    %183 = vector.broadcast %cst_100 : f32 to vector<8x128xf32>
    %184 = arith.addf %182, %183 : vector<8x128xf32>
    %185 = arith.mulf %151, %174 : vector<8x128xf32>
    %186 = arith.mulf %166, %176 : vector<8x128xf32>
    %187 = arith.addf %185, %186 : vector<8x128xf32>
    %188 = math.tanh %187 : vector<8x128xf32>
    %189 = arith.mulf %184, %188 : vector<8x128xf32>
    %c0_101 = arith.constant 0 : index
    %c0_102 = arith.constant 0 : index
    %190 = vector.load %arg11[%c0_101, %c0_102] : memref<8x128xf32, #tpu.memory_space<vmem>>, vector<8x128xf32>
    tpu.vector_store %arg11[%c0_101, %c0_102], %187 {strides = array<i32>} : memref<8x128xf32, #tpu.memory_space<vmem>>, vector<8x128xf32>,
    %c0_103 = arith.constant 0 : index
    %c0_104 = arith.constant 0 : index
    %191 = vector.load %arg10[%c0_103, %c0_104] : memref<8x128xf32, #tpu.memory_space<vmem>>, vector<8x128xf32>
    tpu.vector_store %arg10[%c0_103, %c0_104], %189 {strides = array<i32>} : memref<8x128xf32, #tpu.memory_space<vmem>>, vector<8x128xf32>,
    %192 = arith.index_cast %c3_i32 : i32 to index
    %c0_105 = arith.constant 0 : index
    %c0_106 = arith.constant 0 : index
    %193 = vector.load %arg9[%192, %c0_105, %c0_106] : memref<8x8x128xf32, #tpu.memory_space<vmem>>, vector<1x8x128xf32>
    %194 = vector.shape_cast %193 : vector<1x8x128xf32> to vector<8x128xf32>
    %195 = vector.shape_cast %189 : vector<8x128xf32> to vector<1x8x128xf32>
    tpu.vector_store %arg9[%192, %c0_105, %c0_106], %195 {strides = array<i32>} : memref<8x8x128xf32, #tpu.memory_space<vmem>>, vector<1x8x128xf32>,
    %c4_i32 = arith.constant 4 : i32
    %c0_107 = arith.constant 0 : index
    %c0_108 = arith.constant 0 : index
    %196 = vector.load %arg10[%c0_107, %c0_108] : memref<8x128xf32, #tpu.memory_space<vmem>>, vector<8x128xf32>
    %c0_109 = arith.constant 0 : index
    %c0_110 = arith.constant 0 : index
    %197 = vector.load %arg11[%c0_109, %c0_110] : memref<8x128xf32, #tpu.memory_space<vmem>>, vector<8x128xf32>
    %198 = arith.index_cast %c4_i32 : i32 to index
    %c0_111 = arith.constant 0 : index
    %c0_112 = arith.constant 0 : index
    %199 = vector.load %arg8[%198, %c0_111, %c0_112] : memref<8x8x512xf32, #tpu.memory_space<vmem>>, vector<1x8x512xf32>
    %200 = vector.shape_cast %199 : vector<1x8x512xf32> to vector<8x512xf32>
    %201 = arith.truncf %196 : vector<8x128xf32> to vector<8x128xbf16>
    %c0_113 = arith.constant 0 : index
    %c0_114 = arith.constant 0 : index
    %202 = vector.load %arg3[%c0_113, %c0_114] : memref<128x512xbf16, #tpu.memory_space<vmem>>, vector<128x512xbf16>
    %cst_115 = arith.constant dense<0.000000e+00> : vector<8x512xf32>
    %203 = tpu.matmul %201, %202, %cst_115 {dimension_numbers = #tpu.dot_dimension_numbers<[1], [0], [0], [1], [0, 0, 1, 1], [], []>} : vector<8x128xbf16>, vector<128x512xbf16>, vector<8x512xf32> -> vector<8x512xf32>
    %204 = arith.addf %200, %203 : vector<8x512xf32>
    %205 = vector.extract_strided_slice %204 {offsets = [0, 0], sizes = [8, 128], strides = [1, 1]} : vector<8x512xf32> to vector<8x128xf32>
    %cst_116 = arith.constant 5.000000e-01 : f32
    %206 = vector.broadcast %cst_116 : f32 to vector<8x128xf32>
    %207 = arith.mulf %206, %205 : vector<8x128xf32>
    %208 = math.tanh %207 : vector<8x128xf32>
    %cst_117 = arith.constant 5.000000e-01 : f32
    %209 = vector.broadcast %cst_117 : f32 to vector<8x128xf32>
    %210 = arith.mulf %209, %208 : vector<8x128xf32>
    %cst_118 = arith.constant 5.000000e-01 : f32
    %211 = vector.broadcast %cst_118 : f32 to vector<8x128xf32>
    %212 = arith.addf %210, %211 : vector<8x128xf32>
    %213 = vector.extract_strided_slice %204 {offsets = [0, 128], sizes = [8, 128], strides = [1, 1]} : vector<8x512xf32> to vector<8x128xf32>
    %cst_119 = arith.constant 5.000000e-01 : f32
    %214 = vector.broadcast %cst_119 : f32 to vector<8x128xf32>
    %215 = arith.mulf %214, %213 : vector<8x128xf32>
    %216 = math.tanh %215 : vector<8x128xf32>
    %cst_120 = arith.constant 5.000000e-01 : f32
    %217 = vector.broadcast %cst_120 : f32 to vector<8x128xf32>
    %218 = arith.mulf %217, %216 : vector<8x128xf32>
    %cst_121 = arith.constant 5.000000e-01 : f32
    %219 = vector.broadcast %cst_121 : f32 to vector<8x128xf32>
    %220 = arith.addf %218, %219 : vector<8x128xf32>
    %221 = vector.extract_strided_slice %204 {offsets = [0, 256], sizes = [8, 128], strides = [1, 1]} : vector<8x512xf32> to vector<8x128xf32>
    %222 = math.tanh %221 : vector<8x128xf32>
    %223 = vector.extract_strided_slice %204 {offsets = [0, 384], sizes = [8, 128], strides = [1, 1]} : vector<8x512xf32> to vector<8x128xf32>
    %cst_122 = arith.constant 5.000000e-01 : f32
    %224 = vector.broadcast %cst_122 : f32 to vector<8x128xf32>
    %225 = arith.mulf %224, %223 : vector<8x128xf32>
    %226 = math.tanh %225 : vector<8x128xf32>
    %cst_123 = arith.constant 5.000000e-01 : f32
    %227 = vector.broadcast %cst_123 : f32 to vector<8x128xf32>
    %228 = arith.mulf %227, %226 : vector<8x128xf32>
    %cst_124 = arith.constant 5.000000e-01 : f32
    %229 = vector.broadcast %cst_124 : f32 to vector<8x128xf32>
    %230 = arith.addf %228, %229 : vector<8x128xf32>
    %231 = arith.mulf %197, %220 : vector<8x128xf32>
    %232 = arith.mulf %212, %222 : vector<8x128xf32>
    %233 = arith.addf %231, %232 : vector<8x128xf32>
    %234 = math.tanh %233 : vector<8x128xf32>
    %235 = arith.mulf %230, %234 : vector<8x128xf32>
    %c0_125 = arith.constant 0 : index
    %c0_126 = arith.constant 0 : index
    %236 = vector.load %arg11[%c0_125, %c0_126] : memref<8x128xf32, #tpu.memory_space<vmem>>, vector<8x128xf32>
    tpu.vector_store %arg11[%c0_125, %c0_126], %233 {strides = array<i32>} : memref<8x128xf32, #tpu.memory_space<vmem>>, vector<8x128xf32>,
    %c0_127 = arith.constant 0 : index
    %c0_128 = arith.constant 0 : index
    %237 = vector.load %arg10[%c0_127, %c0_128] : memref<8x128xf32, #tpu.memory_space<vmem>>, vector<8x128xf32>
    tpu.vector_store %arg10[%c0_127, %c0_128], %235 {strides = array<i32>} : memref<8x128xf32, #tpu.memory_space<vmem>>, vector<8x128xf32>,
    %238 = arith.index_cast %c4_i32 : i32 to index
    %c0_129 = arith.constant 0 : index
    %c0_130 = arith.constant 0 : index
    %239 = vector.load %arg9[%238, %c0_129, %c0_130] : memref<8x8x128xf32, #tpu.memory_space<vmem>>, vector<1x8x128xf32>
    %240 = vector.shape_cast %239 : vector<1x8x128xf32> to vector<8x128xf32>
    %241 = vector.shape_cast %235 : vector<8x128xf32> to vector<1x8x128xf32>
    tpu.vector_store %arg9[%238, %c0_129, %c0_130], %241 {strides = array<i32>} : memref<8x8x128xf32, #tpu.memory_space<vmem>>, vector<1x8x128xf32>,
    %c5_i32 = arith.constant 5 : i32
    %c0_131 = arith.constant 0 : index
    %c0_132 = arith.constant 0 : index
    %242 = vector.load %arg10[%c0_131, %c0_132] : memref<8x128xf32, #tpu.memory_space<vmem>>, vector<8x128xf32>
    %c0_133 = arith.constant 0 : index
    %c0_134 = arith.constant 0 : index
    %243 = vector.load %arg11[%c0_133, %c0_134] : memref<8x128xf32, #tpu.memory_space<vmem>>, vector<8x128xf32>
    %244 = arith.index_cast %c5_i32 : i32 to index
    %c0_135 = arith.constant 0 : index
    %c0_136 = arith.constant 0 : index
    %245 = vector.load %arg8[%244, %c0_135, %c0_136] : memref<8x8x512xf32, #tpu.memory_space<vmem>>, vector<1x8x512xf32>
    %246 = vector.shape_cast %245 : vector<1x8x512xf32> to vector<8x512xf32>
    %247 = arith.truncf %242 : vector<8x128xf32> to vector<8x128xbf16>
    %c0_137 = arith.constant 0 : index
    %c0_138 = arith.constant 0 : index
    %248 = vector.load %arg3[%c0_137, %c0_138] : memref<128x512xbf16, #tpu.memory_space<vmem>>, vector<128x512xbf16>
    %cst_139 = arith.constant dense<0.000000e+00> : vector<8x512xf32>
    %249 = tpu.matmul %247, %248, %cst_139 {dimension_numbers = #tpu.dot_dimension_numbers<[1], [0], [0], [1], [0, 0, 1, 1], [], []>} : vector<8x128xbf16>, vector<128x512xbf16>, vector<8x512xf32> -> vector<8x512xf32>
    %250 = arith.addf %246, %249 : vector<8x512xf32>
    %251 = vector.extract_strided_slice %250 {offsets = [0, 0], sizes = [8, 128], strides = [1, 1]} : vector<8x512xf32> to vector<8x128xf32>
    %cst_140 = arith.constant 5.000000e-01 : f32
    %252 = vector.broadcast %cst_140 : f32 to vector<8x128xf32>
    %253 = arith.mulf %252, %251 : vector<8x128xf32>
    %254 = math.tanh %253 : vector<8x128xf32>
    %cst_141 = arith.constant 5.000000e-01 : f32
    %255 = vector.broadcast %cst_141 : f32 to vector<8x128xf32>
    %256 = arith.mulf %255, %254 : vector<8x128xf32>
    %cst_142 = arith.constant 5.000000e-01 : f32
    %257 = vector.broadcast %cst_142 : f32 to vector<8x128xf32>
    %258 = arith.addf %256, %257 : vector<8x128xf32>
    %259 = vector.extract_strided_slice %250 {offsets = [0, 128], sizes = [8, 128], strides = [1, 1]} : vector<8x512xf32> to vector<8x128xf32>
    %cst_143 = arith.constant 5.000000e-01 : f32
    %260 = vector.broadcast %cst_143 : f32 to vector<8x128xf32>
    %261 = arith.mulf %260, %259 : vector<8x128xf32>
    %262 = math.tanh %261 : vector<8x128xf32>
    %cst_144 = arith.constant 5.000000e-01 : f32
    %263 = vector.broadcast %cst_144 : f32 to vector<8x128xf32>
    %264 = arith.mulf %263, %262 : vector<8x128xf32>
    %cst_145 = arith.constant 5.000000e-01 : f32
    %265 = vector.broadcast %cst_145 : f32 to vector<8x128xf32>
    %266 = arith.addf %264, %265 : vector<8x128xf32>
    %267 = vector.extract_strided_slice %250 {offsets = [0, 256], sizes = [8, 128], strides = [1, 1]} : vector<8x512xf32> to vector<8x128xf32>
    %268 = math.tanh %267 : vector<8x128xf32>
    %269 = vector.extract_strided_slice %250 {offsets = [0, 384], sizes = [8, 128], strides = [1, 1]} : vector<8x512xf32> to vector<8x128xf32>
    %cst_146 = arith.constant 5.000000e-01 : f32
    %270 = vector.broadcast %cst_146 : f32 to vector<8x128xf32>
    %271 = arith.mulf %270, %269 : vector<8x128xf32>
    %272 = math.tanh %271 : vector<8x128xf32>
    %cst_147 = arith.constant 5.000000e-01 : f32
    %273 = vector.broadcast %cst_147 : f32 to vector<8x128xf32>
    %274 = arith.mulf %273, %272 : vector<8x128xf32>
    %cst_148 = arith.constant 5.000000e-01 : f32
    %275 = vector.broadcast %cst_148 : f32 to vector<8x128xf32>
    %276 = arith.addf %274, %275 : vector<8x128xf32>
    %277 = arith.mulf %243, %266 : vector<8x128xf32>
    %278 = arith.mulf %258, %268 : vector<8x128xf32>
    %279 = arith.addf %277, %278 : vector<8x128xf32>
    %280 = math.tanh %279 : vector<8x128xf32>
    %281 = arith.mulf %276, %280 : vector<8x128xf32>
    %c0_149 = arith.constant 0 : index
    %c0_150 = arith.constant 0 : index
    %282 = vector.load %arg11[%c0_149, %c0_150] : memref<8x128xf32, #tpu.memory_space<vmem>>, vector<8x128xf32>
    tpu.vector_store %arg11[%c0_149, %c0_150], %279 {strides = array<i32>} : memref<8x128xf32, #tpu.memory_space<vmem>>, vector<8x128xf32>,
    %c0_151 = arith.constant 0 : index
    %c0_152 = arith.constant 0 : index
    %283 = vector.load %arg10[%c0_151, %c0_152] : memref<8x128xf32, #tpu.memory_space<vmem>>, vector<8x128xf32>
    tpu.vector_store %arg10[%c0_151, %c0_152], %281 {strides = array<i32>} : memref<8x128xf32, #tpu.memory_space<vmem>>, vector<8x128xf32>,
    %284 = arith.index_cast %c5_i32 : i32 to index
    %c0_153 = arith.constant 0 : index
    %c0_154 = arith.constant 0 : index
    %285 = vector.load %arg9[%284, %c0_153, %c0_154] : memref<8x8x128xf32, #tpu.memory_space<vmem>>, vector<1x8x128xf32>
    %286 = vector.shape_cast %285 : vector<1x8x128xf32> to vector<8x128xf32>
    %287 = vector.shape_cast %281 : vector<8x128xf32> to vector<1x8x128xf32>
    tpu.vector_store %arg9[%284, %c0_153, %c0_154], %287 {strides = array<i32>} : memref<8x8x128xf32, #tpu.memory_space<vmem>>, vector<1x8x128xf32>,
    %c6_i32 = arith.constant 6 : i32
    %c0_155 = arith.constant 0 : index
    %c0_156 = arith.constant 0 : index
    %288 = vector.load %arg10[%c0_155, %c0_156] : memref<8x128xf32, #tpu.memory_space<vmem>>, vector<8x128xf32>
    %c0_157 = arith.constant 0 : index
    %c0_158 = arith.constant 0 : index
    %289 = vector.load %arg11[%c0_157, %c0_158] : memref<8x128xf32, #tpu.memory_space<vmem>>, vector<8x128xf32>
    %290 = arith.index_cast %c6_i32 : i32 to index
    %c0_159 = arith.constant 0 : index
    %c0_160 = arith.constant 0 : index
    %291 = vector.load %arg8[%290, %c0_159, %c0_160] : memref<8x8x512xf32, #tpu.memory_space<vmem>>, vector<1x8x512xf32>
    %292 = vector.shape_cast %291 : vector<1x8x512xf32> to vector<8x512xf32>
    %293 = arith.truncf %288 : vector<8x128xf32> to vector<8x128xbf16>
    %c0_161 = arith.constant 0 : index
    %c0_162 = arith.constant 0 : index
    %294 = vector.load %arg3[%c0_161, %c0_162] : memref<128x512xbf16, #tpu.memory_space<vmem>>, vector<128x512xbf16>
    %cst_163 = arith.constant dense<0.000000e+00> : vector<8x512xf32>
    %295 = tpu.matmul %293, %294, %cst_163 {dimension_numbers = #tpu.dot_dimension_numbers<[1], [0], [0], [1], [0, 0, 1, 1], [], []>} : vector<8x128xbf16>, vector<128x512xbf16>, vector<8x512xf32> -> vector<8x512xf32>
    %296 = arith.addf %292, %295 : vector<8x512xf32>
    %297 = vector.extract_strided_slice %296 {offsets = [0, 0], sizes = [8, 128], strides = [1, 1]} : vector<8x512xf32> to vector<8x128xf32>
    %cst_164 = arith.constant 5.000000e-01 : f32
    %298 = vector.broadcast %cst_164 : f32 to vector<8x128xf32>
    %299 = arith.mulf %298, %297 : vector<8x128xf32>
    %300 = math.tanh %299 : vector<8x128xf32>
    %cst_165 = arith.constant 5.000000e-01 : f32
    %301 = vector.broadcast %cst_165 : f32 to vector<8x128xf32>
    %302 = arith.mulf %301, %300 : vector<8x128xf32>
    %cst_166 = arith.constant 5.000000e-01 : f32
    %303 = vector.broadcast %cst_166 : f32 to vector<8x128xf32>
    %304 = arith.addf %302, %303 : vector<8x128xf32>
    %305 = vector.extract_strided_slice %296 {offsets = [0, 128], sizes = [8, 128], strides = [1, 1]} : vector<8x512xf32> to vector<8x128xf32>
    %cst_167 = arith.constant 5.000000e-01 : f32
    %306 = vector.broadcast %cst_167 : f32 to vector<8x128xf32>
    %307 = arith.mulf %306, %305 : vector<8x128xf32>
    %308 = math.tanh %307 : vector<8x128xf32>
    %cst_168 = arith.constant 5.000000e-01 : f32
    %309 = vector.broadcast %cst_168 : f32 to vector<8x128xf32>
    %310 = arith.mulf %309, %308 : vector<8x128xf32>
    %cst_169 = arith.constant 5.000000e-01 : f32
    %311 = vector.broadcast %cst_169 : f32 to vector<8x128xf32>
    %312 = arith.addf %310, %311 : vector<8x128xf32>
    %313 = vector.extract_strided_slice %296 {offsets = [0, 256], sizes = [8, 128], strides = [1, 1]} : vector<8x512xf32> to vector<8x128xf32>
    %314 = math.tanh %313 : vector<8x128xf32>
    %315 = vector.extract_strided_slice %296 {offsets = [0, 384], sizes = [8, 128], strides = [1, 1]} : vector<8x512xf32> to vector<8x128xf32>
    %cst_170 = arith.constant 5.000000e-01 : f32
    %316 = vector.broadcast %cst_170 : f32 to vector<8x128xf32>
    %317 = arith.mulf %316, %315 : vector<8x128xf32>
    %318 = math.tanh %317 : vector<8x128xf32>
    %cst_171 = arith.constant 5.000000e-01 : f32
    %319 = vector.broadcast %cst_171 : f32 to vector<8x128xf32>
    %320 = arith.mulf %319, %318 : vector<8x128xf32>
    %cst_172 = arith.constant 5.000000e-01 : f32
    %321 = vector.broadcast %cst_172 : f32 to vector<8x128xf32>
    %322 = arith.addf %320, %321 : vector<8x128xf32>
    %323 = arith.mulf %289, %312 : vector<8x128xf32>
    %324 = arith.mulf %304, %314 : vector<8x128xf32>
    %325 = arith.addf %323, %324 : vector<8x128xf32>
    %326 = math.tanh %325 : vector<8x128xf32>
    %327 = arith.mulf %322, %326 : vector<8x128xf32>
    %c0_173 = arith.constant 0 : index
    %c0_174 = arith.constant 0 : index
    %328 = vector.load %arg11[%c0_173, %c0_174] : memref<8x128xf32, #tpu.memory_space<vmem>>, vector<8x128xf32>
    tpu.vector_store %arg11[%c0_173, %c0_174], %325 {strides = array<i32>} : memref<8x128xf32, #tpu.memory_space<vmem>>, vector<8x128xf32>,
    %c0_175 = arith.constant 0 : index
    %c0_176 = arith.constant 0 : index
    %329 = vector.load %arg10[%c0_175, %c0_176] : memref<8x128xf32, #tpu.memory_space<vmem>>, vector<8x128xf32>
    tpu.vector_store %arg10[%c0_175, %c0_176], %327 {strides = array<i32>} : memref<8x128xf32, #tpu.memory_space<vmem>>, vector<8x128xf32>,
    %330 = arith.index_cast %c6_i32 : i32 to index
    %c0_177 = arith.constant 0 : index
    %c0_178 = arith.constant 0 : index
    %331 = vector.load %arg9[%330, %c0_177, %c0_178] : memref<8x8x128xf32, #tpu.memory_space<vmem>>, vector<1x8x128xf32>
    %332 = vector.shape_cast %331 : vector<1x8x128xf32> to vector<8x128xf32>
    %333 = vector.shape_cast %327 : vector<8x128xf32> to vector<1x8x128xf32>
    tpu.vector_store %arg9[%330, %c0_177, %c0_178], %333 {strides = array<i32>} : memref<8x8x128xf32, #tpu.memory_space<vmem>>, vector<1x8x128xf32>,
    %c7_i32 = arith.constant 7 : i32
    %c0_179 = arith.constant 0 : index
    %c0_180 = arith.constant 0 : index
    %334 = vector.load %arg10[%c0_179, %c0_180] : memref<8x128xf32, #tpu.memory_space<vmem>>, vector<8x128xf32>
    %c0_181 = arith.constant 0 : index
    %c0_182 = arith.constant 0 : index
    %335 = vector.load %arg11[%c0_181, %c0_182] : memref<8x128xf32, #tpu.memory_space<vmem>>, vector<8x128xf32>
    %336 = arith.index_cast %c7_i32 : i32 to index
    %c0_183 = arith.constant 0 : index
    %c0_184 = arith.constant 0 : index
    %337 = vector.load %arg8[%336, %c0_183, %c0_184] : memref<8x8x512xf32, #tpu.memory_space<vmem>>, vector<1x8x512xf32>
    %338 = vector.shape_cast %337 : vector<1x8x512xf32> to vector<8x512xf32>
    %339 = arith.truncf %334 : vector<8x128xf32> to vector<8x128xbf16>
    %c0_185 = arith.constant 0 : index
    %c0_186 = arith.constant 0 : index
    %340 = vector.load %arg3[%c0_185, %c0_186] : memref<128x512xbf16, #tpu.memory_space<vmem>>, vector<128x512xbf16>
    %cst_187 = arith.constant dense<0.000000e+00> : vector<8x512xf32>
    %341 = tpu.matmul %339, %340, %cst_187 {dimension_numbers = #tpu.dot_dimension_numbers<[1], [0], [0], [1], [0, 0, 1, 1], [], []>} : vector<8x128xbf16>, vector<128x512xbf16>, vector<8x512xf32> -> vector<8x512xf32>
    %342 = arith.addf %338, %341 : vector<8x512xf32>
    %343 = vector.extract_strided_slice %342 {offsets = [0, 0], sizes = [8, 128], strides = [1, 1]} : vector<8x512xf32> to vector<8x128xf32>
    %cst_188 = arith.constant 5.000000e-01 : f32
    %344 = vector.broadcast %cst_188 : f32 to vector<8x128xf32>
    %345 = arith.mulf %344, %343 : vector<8x128xf32>
    %346 = math.tanh %345 : vector<8x128xf32>
    %cst_189 = arith.constant 5.000000e-01 : f32
    %347 = vector.broadcast %cst_189 : f32 to vector<8x128xf32>
    %348 = arith.mulf %347, %346 : vector<8x128xf32>
    %cst_190 = arith.constant 5.000000e-01 : f32
    %349 = vector.broadcast %cst_190 : f32 to vector<8x128xf32>
    %350 = arith.addf %348, %349 : vector<8x128xf32>
    %351 = vector.extract_strided_slice %342 {offsets = [0, 128], sizes = [8, 128], strides = [1, 1]} : vector<8x512xf32> to vector<8x128xf32>
    %cst_191 = arith.constant 5.000000e-01 : f32
    %352 = vector.broadcast %cst_191 : f32 to vector<8x128xf32>
    %353 = arith.mulf %352, %351 : vector<8x128xf32>
    %354 = math.tanh %353 : vector<8x128xf32>
    %cst_192 = arith.constant 5.000000e-01 : f32
    %355 = vector.broadcast %cst_192 : f32 to vector<8x128xf32>
    %356 = arith.mulf %355, %354 : vector<8x128xf32>
    %cst_193 = arith.constant 5.000000e-01 : f32
    %357 = vector.broadcast %cst_193 : f32 to vector<8x128xf32>
    %358 = arith.addf %356, %357 : vector<8x128xf32>
    %359 = vector.extract_strided_slice %342 {offsets = [0, 256], sizes = [8, 128], strides = [1, 1]} : vector<8x512xf32> to vector<8x128xf32>
    %360 = math.tanh %359 : vector<8x128xf32>
    %361 = vector.extract_strided_slice %342 {offsets = [0, 384], sizes = [8, 128], strides = [1, 1]} : vector<8x512xf32> to vector<8x128xf32>
    %cst_194 = arith.constant 5.000000e-01 : f32
    %362 = vector.broadcast %cst_194 : f32 to vector<8x128xf32>
    %363 = arith.mulf %362, %361 : vector<8x128xf32>
    %364 = math.tanh %363 : vector<8x128xf32>
    %cst_195 = arith.constant 5.000000e-01 : f32
    %365 = vector.broadcast %cst_195 : f32 to vector<8x128xf32>
    %366 = arith.mulf %365, %364 : vector<8x128xf32>
    %cst_196 = arith.constant 5.000000e-01 : f32
    %367 = vector.broadcast %cst_196 : f32 to vector<8x128xf32>
    %368 = arith.addf %366, %367 : vector<8x128xf32>
    %369 = arith.mulf %335, %358 : vector<8x128xf32>
    %370 = arith.mulf %350, %360 : vector<8x128xf32>
    %371 = arith.addf %369, %370 : vector<8x128xf32>
    %372 = math.tanh %371 : vector<8x128xf32>
    %373 = arith.mulf %368, %372 : vector<8x128xf32>
    %c0_197 = arith.constant 0 : index
    %c0_198 = arith.constant 0 : index
    %374 = vector.load %arg11[%c0_197, %c0_198] : memref<8x128xf32, #tpu.memory_space<vmem>>, vector<8x128xf32>
    tpu.vector_store %arg11[%c0_197, %c0_198], %371 {strides = array<i32>} : memref<8x128xf32, #tpu.memory_space<vmem>>, vector<8x128xf32>,
    %c0_199 = arith.constant 0 : index
    %c0_200 = arith.constant 0 : index
    %375 = vector.load %arg10[%c0_199, %c0_200] : memref<8x128xf32, #tpu.memory_space<vmem>>, vector<8x128xf32>
    tpu.vector_store %arg10[%c0_199, %c0_200], %373 {strides = array<i32>} : memref<8x128xf32, #tpu.memory_space<vmem>>, vector<8x128xf32>,
    %376 = arith.index_cast %c7_i32 : i32 to index
    %c0_201 = arith.constant 0 : index
    %c0_202 = arith.constant 0 : index
    %377 = vector.load %arg9[%376, %c0_201, %c0_202] : memref<8x8x128xf32, #tpu.memory_space<vmem>>, vector<1x8x128xf32>
    %378 = vector.shape_cast %377 : vector<1x8x128xf32> to vector<8x128xf32>
    %379 = vector.shape_cast %373 : vector<8x128xf32> to vector<1x8x128xf32>
    tpu.vector_store %arg9[%376, %c0_201, %c0_202], %379 {strides = array<i32>} : memref<8x8x128xf32, #tpu.memory_space<vmem>>, vector<1x8x128xf32>,
    %c8_i32 = arith.constant 8 : i32
    %c0_203 = arith.constant 0 : index
    %c0_204 = arith.constant 0 : index
    %c0_205 = arith.constant 0 : index
    %380 = vector.load %arg9[%c0_203, %c0_204, %c0_205] : memref<8x8x128xf32, #tpu.memory_space<vmem>>, vector<8x8x128xf32>
    %381 = vector.shape_cast %380 : vector<8x8x128xf32> to vector<64x128xf32>
    %382 = arith.truncf %381 : vector<64x128xf32> to vector<64x128xbf16>
    %c0_206 = arith.constant 0 : index
    %c0_207 = arith.constant 0 : index
    %383 = vector.load %arg5[%c0_206, %c0_207] : memref<128x128xbf16, #tpu.memory_space<vmem>>, vector<128x128xbf16>
    %cst_208 = arith.constant dense<0.000000e+00> : vector<64x128xf32>
    %384 = tpu.matmul %382, %383, %cst_208 {dimension_numbers = #tpu.dot_dimension_numbers<[1], [0], [0], [1], [0, 0, 1, 1], [], []>} : vector<64x128xbf16>, vector<128x128xbf16>, vector<64x128xf32> -> vector<64x128xf32>
    %c0_209 = arith.constant 0 : index
    %c0_210 = arith.constant 0 : index
    %385 = vector.load %arg6[%c0_209, %c0_210] : memref<1x128xf32, #tpu.memory_space<vmem>>, vector<1x128xf32>
    %386 = vector.broadcast %385 : vector<1x128xf32> to vector<64x128xf32>
    %387 = arith.addf %384, %386 : vector<64x128xf32>
    %388 = vector.shape_cast %387 : vector<64x128xf32> to vector<8x8x128xf32>
    %c0_211 = arith.constant 0 : index
    %c0_212 = arith.constant 0 : index
    %c0_213 = arith.constant 0 : index
    %389 = vector.load %arg7[%c0_211, %c0_212, %c0_213] : memref<8x8x128xf32, #tpu.memory_space<vmem>>, vector<8x8x128xf32>
    tpu.vector_store %arg7[%c0_211, %c0_212, %c0_213], %388 {strides = array<i32>} : memref<8x8x128xf32, #tpu.memory_space<vmem>>, vector<8x8x128xf32>,
    return
  }
  func.func @transform_0(%arg0: i32) -> (i32, i32, i32) {
    %c0_i32 = arith.constant 0 : i32
    %c0_i32_0 = arith.constant 0 : i32
    %c0_i32_1 = arith.constant 0 : i32
    return %arg0, %c0_i32, %c0_i32_0 : i32, i32, i32
  }
  func.func @transform_1(%arg0: i32) -> (i32, i32) {
    %c0_i32 = arith.constant 0 : i32
    %c0_i32_0 = arith.constant 0 : i32
    %c0_i32_1 = arith.constant 0 : i32
    return %c0_i32, %c0_i32_0 : i32, i32
  }
  func.func @transform_2(%arg0: i32) -> (i32, i32) {
    %c0_i32 = arith.constant 0 : i32
    %c0_i32_0 = arith.constant 0 : i32
    %c0_i32_1 = arith.constant 0 : i32
    return %c0_i32, %c0_i32_0 : i32, i32
  }
  func.func @transform_3(%arg0: i32) -> (i32, i32) {
    %c0_i32 = arith.constant 0 : i32
    %c0_i32_0 = arith.constant 0 : i32
    %c0_i32_1 = arith.constant 0 : i32
    return %c0_i32, %c0_i32_0 : i32, i32
  }
  func.func @transform_4(%arg0: i32) -> (i32, i32) {
    %c0_i32 = arith.constant 0 : i32
    %c0_i32_0 = arith.constant 0 : i32
    %c0_i32_1 = arith.constant 0 : i32
    return %c0_i32, %c0_i32_0 : i32, i32
  }
  func.func @transform_5(%arg0: i32) -> (i32, i32) {
    %c0_i32 = arith.constant 0 : i32
    %c0_i32_0 = arith.constant 0 : i32
    %c0_i32_1 = arith.constant 0 : i32
    return %c0_i32, %c0_i32_0 : i32, i32
  }
  func.func @transform_6(%arg0: i32) -> (i32, i32, i32) {
    %c0_i32 = arith.constant 0 : i32
    %c0_i32_0 = arith.constant 0 : i32
    %c0_i32_1 = arith.constant 0 : i32
    return %arg0, %c0_i32, %c0_i32_0 : i32, i32, i32
  }
}

</mosaic_0001>

<llo_original>
// kernel: tpu_custom_call.1
$region0: #{tpu_custom_call.1}
  #allocation0 [shape = 'u32[]', space=smem, size = 0x4, offset = 0x4, fixed_abs, tag = 'smem constant byte address 0x4 - core index']
  #allocation1 [shape = 'u32[144,128]{1,0:T(1,128)}', space=vmem, size = 0x12000, scoped, tag = 'internal scratch']
  #allocation2 [shape = 'f32[8,8,512]{2,1,0:T(8,128)}', space=vmem, size = 0x20000, scoped, tag = 'scratch operand']
  #allocation3 [shape = 'f32[8,8,128]{2,1,0:T(8,128)}', space=vmem, size = 0x8000, scoped, tag = 'scratch operand']
  #allocation4 [shape = 'f32[8,128]{1,0:T(8,128)}', space=vmem, size = 0x1000, scoped, tag = 'scratch operand']
  #allocation5 [shape = 'f32[8,128]{1,0:T(8,128)}', space=vmem, size = 0x1000, scoped, tag = 'scratch operand']
  %s0 = inlined_call_operand.hbm [shape: bf16[8,8,128], index: 0, kind: input, shape index: {}]
  %s1 = inlined_call_operand.hbm [shape: bf16[128,512], index: 1, kind: input, shape index: {}]
  %s2 = inlined_call_operand.hbm [shape: bf16[128,512], index: 2, kind: input, shape index: {}]
  %s3 = inlined_call_operand.vmem [shape: f32[1,512], index: 3, kind: input, shape index: {}]
  %s4 = inlined_call_operand.hbm [shape: bf16[128,128], index: 4, kind: input, shape index: {}]
  %s5 = inlined_call_operand.vmem [shape: f32[1,128], index: 5, kind: input, shape index: {}]
  %s6 = inlined_call_operand.hbm [shape: f32[8,8,128], index: 6, kind: output, shape index: {}]
  %s7 = sld [smem:[#allocation0]]
  $region54: #{tpu_custom_call.1} parent=0
    _
  %s9 = ssub.s32 1, %s7
  %s10 = scalar_select 0, %s9, %s7
  $region1: #{tpu_custom_call.1} parent=0
    #allocation6 [shape = 'u8[16384]{0}', space=vmem, size = 0x4000, scoped, tag = 'input window, operand 0, single buffered']
    #allocation7 [shape = 's32[1]{0}', space=sflag, size = 0x4, scoped, tag = 'scoped memory for tpu_custom_call.1']
    #allocation8 [shape = 's32[1]{0}', space=sflag, size = 0x4, scoped, tag = 'scoped memory for tpu_custom_call.1']
    #allocation9 [shape = 'u8[131072]{0}', space=vmem, size = 0x20000, scoped, tag = 'input window, operand 1, single buffered']
    #allocation10 [shape = 's32[1]{0}', space=sflag, size = 0x4, scoped, tag = 'scoped memory for tpu_custom_call.1']
    #allocation11 [shape = 'u8[131072]{0}', space=vmem, size = 0x20000, scoped, tag = 'input window, operand 2, single buffered']
    #allocation12 [shape = 'u8[32768]{0}', space=vmem, size = 0x8000, scoped, tag = 'input window, operand 4, single buffered']
    #allocation13 [shape = 's32[1]{0}', space=sflag, size = 0x4, scoped, tag = 'scoped memory for tpu_custom_call.1']
    #allocation14 [shape = 'u8[32768]{0}', space=vmem, size = 0x8000, scoped, tag = 'output window, operand 0, single buffered']
    %11 = vsyncpa [#allocation7], 0
    %12 = vsyncpa [#allocation10], 0
    %13 = vsyncpa [#allocation13], 0
    %14 = vsyncpa [#allocation8], 0
    // Predicated region
    $region2: #{tpu_custom_call.1} parent=1 // pred_check
      _
    $region3: #{tpu_custom_call.1} parent=1 // pred_check_branch
      %16 = sbr.rel (0) target = $region5
    $region4: #{tpu_custom_call.1} parent=1 // pred_region
      %s18 = ssub.s32 512, 512
      %19 = vsyncadd [#allocation7], %s18
      %s20 = sshll.u32 [#allocation6], 4
      %s21 = int_to_ptr.vmem [resolvable:$true] %s20
      %26 = dma.hbm_to_vmem [thread:$0]  %s0, 512, %s21, [#allocation7], 64, 64, 4
    $region5: #{tpu_custom_call.1} parent=1 // pred_fallthru
      _
    // Predicated region
    $region6: #{tpu_custom_call.1} parent=1 // pred_check
      _
    $region7: #{tpu_custom_call.1} parent=1 // pred_check_branch
      %28 = sbr.rel (0) target = $region9
    $region8: #{tpu_custom_call.1} parent=1 // pred_region
      %s30 = ssub.s32 4096, 4096
      %31 = vsyncadd [#allocation10], %s30
      %s32 = sshll.u32 [#allocation9], 4
      %s33 = int_to_ptr.vmem [resolvable:$true] %s32
      %38 = dma.hbm_to_vmem [thread:$0]  %s1, 4096, %s33, [#allocation10], 256, 256, 16
    $region9: #{tpu_custom_call.1} parent=1 // pred_fallthru
      _
    // Predicated region
    $region10: #{tpu_custom_call.1} parent=1 // pred_check
      _
    $region11: #{tpu_custom_call.1} parent=1 // pred_check_branch
      %40 = sbr.rel (0) target = $region13
    $region12: #{tpu_custom_call.1} parent=1 // pred_region
      %s42 = ssub.s32 4096, 4096
      %43 = vsyncadd [#allocation10], %s42
      %s44 = sshll.u32 [#allocation11], 4
      %s45 = int_to_ptr.vmem [resolvable:$true] %s44
      %50 = dma.hbm_to_vmem [thread:$0]  %s2, 4096, %s45, [#allocation10], 256, 256, 16
    $region13: #{tpu_custom_call.1} parent=1 // pred_fallthru
      _
    // Predicated region
    $region14: #{tpu_custom_call.1} parent=1 // pred_check
      _
    $region15: #{tpu_custom_call.1} parent=1 // pred_check_branch
      %52 = sbr.rel (0) target = $region17
    $region16: #{tpu_custom_call.1} parent=1 // pred_region
      _
    $region17: #{tpu_custom_call.1} parent=1 // pred_fallthru
      _
    // Predicated region
    $region18: #{tpu_custom_call.1} parent=1 // pred_check
      _
    $region19: #{tpu_custom_call.1} parent=1 // pred_check_branch
      %54 = sbr.rel (0) target = $region21
    $region20: #{tpu_custom_call.1} parent=1 // pred_region
      %s56 = ssub.s32 1024, 1024
      %57 = vsyncadd [#allocation13], %s56
      %s58 = sshll.u32 [#allocation12], 4
      %s59 = int_to_ptr.vmem [resolvable:$true] %s58
      %64 = dma.hbm_to_vmem [thread:$0]  %s4, 1024, %s59, [#allocation13], 64, 64, 4
    $region21: #{tpu_custom_call.1} parent=1 // pred_fallthru
      _
    // Predicated region
    $region22: #{tpu_custom_call.1} parent=1 // pred_check
      _
    $region23: #{tpu_custom_call.1} parent=1 // pred_check_branch
      %66 = sbr.rel (0) target = $region25
    $region24: #{tpu_custom_call.1} parent=1 // pred_region
      _
    $region25: #{tpu_custom_call.1} parent=1 // pred_fallthru
      _
    // Predicated region
    $region26: #{tpu_custom_call.1} parent=1 // pred_check
      _
    $region27: #{tpu_custom_call.1} parent=1 // pred_check_branch
      %68 = sbr.rel (0) target = $region29
    $region28: #{tpu_custom_call.1} parent=1 // pred_region
      %69 = dma.done [#allocation7], 512
    $region29: #{tpu_custom_call.1} parent=1 // pred_fallthru
      _
    // Predicated region
    $region30: #{tpu_custom_call.1} parent=1 // pred_check
      _
    $region31: #{tpu_custom_call.1} parent=1 // pred_check_branch
      %71 = sbr.rel (0) target = $region33
    $region32: #{tpu_custom_call.1} parent=1 // pred_region
      %72 = dma.done [#allocation10], 4096
    $region33: #{tpu_custom_call.1} parent=1 // pred_fallthru
      _
    // Predicated region
    $region34: #{tpu_custom_call.1} parent=1 // pred_check
      _
    $region35: #{tpu_custom_call.1} parent=1 // pred_check_branch
      %74 = sbr.rel (0) target = $region37
    $region36: #{tpu_custom_call.1} parent=1 // pred_region
      %75 = dma.done [#allocation10], 4096
    $region37: #{tpu_custom_call.1} parent=1 // pred_fallthru
      _
    // Predicated region
    $region38: #{tpu_custom_call.1} parent=1 // pred_check
      _
    $region39: #{tpu_custom_call.1} parent=1 // pred_check_branch
      %77 = sbr.rel (0) target = $region41
    $region40: #{tpu_custom_call.1} parent=1 // pred_region
      %78 = dma.done [#allocation13], 1024
    $region41: #{tpu_custom_call.1} parent=1 // pred_fallthru
      _
    %p80 = scmp.eq.s32.totalorder 0, 0
    // Predicated region
    $region42: #{tpu_custom_call.1} parent=1 // pred_check
      %p81 = pneg %p80
    $region43: #{tpu_custom_call.1} parent=1 // pred_check_branch
      %83 = sbr.rel (%p81) target = $region45
    $region44: #{tpu_custom_call.1} parent=1 // pred_region
      %84 = vst [vmem:[#allocation4] sm:$0xff] 0.0
      %85 = vst [vmem:[#allocation5] sm:$0xff] 0.0
    $region45: #{tpu_custom_call.1} parent=1 // pred_fallthru
      _
    %v86 = vld [vmem:[#allocation6] sm:$0xf]
    %v87 = vld [vmem:[#allocation6 + $0x4] sm:$0xf]
    %v88 = vld [vmem:[#allocation6 + $0x8] sm:$0xf]
    %v89 = vld [vmem:[#allocation6 + $0xc] sm:$0xf]
    %v90 = vld [vmem:[#allocation6 + $0x10] sm:$0xf]
    %v91 = vld [vmem:[#allocation6 + $0x14] sm:$0xf]
    %v92 = vld [vmem:[#allocation6 + $0x18] sm:$0xf]
    %v93 = vld [vmem:[#allocation6 + $0x1c] sm:$0xf]
    %v94 = vld [vmem:[#allocation9] sm:$0xff]
    %v95 = vld [vmem:[#allocation9 + $0x8] sm:$0xff]
    %v96 = vld [vmem:[#allocation9 + $0x10] sm:$0xff]
    %v97 = vld [vmem:[#allocation9 + $0x18] sm:$0xff]
    %v98 = vld [vmem:[#allocation9 + $0x20] sm:$0xff]
    %v99 = vld [vmem:[#allocation9 + $0x28] sm:$0xff]
    %v100 = vld [vmem:[#allocation9 + $0x30] sm:$0xff]
    %v101 = vld [vmem:[#allocation9 + $0x38] sm:$0xff]
    %v102 = vld [vmem:[#allocation9 + $0x40] sm:$0xff]
    %v103 = vld [vmem:[#allocation9 + $0x48] sm:$0xff]
    %v104 = vld [vmem:[#allocation9 + $0x50] sm:$0xff]
    %v105 = vld [vmem:[#allocation9 + $0x58] sm:$0xff]
    %v106 = vld [vmem:[#allocation9 + $0x60] sm:$0xff]
    %v107 = vld [vmem:[#allocation9 + $0x68] sm:$0xff]
    %v108 = vld [vmem:[#allocation9 + $0x70] sm:$0xff]
    %v109 = vld [vmem:[#allocation9 + $0x78] sm:$0xff]
    %v110 = vld [vmem:[#allocation9 + $0x80] sm:$0xff]
    %v111 = vld [vmem:[#allocation9 + $0x88] sm:$0xff]
    %v112 = vld [vmem:[#allocation9 + $0x90] sm:$0xff]
    %v113 = vld [vmem:[#allocation9 + $0x98] sm:$0xff]
    %v114 = vld [vmem:[#allocation9 + $0xa0] sm:$0xff]
    %v115 = vld [vmem:[#allocation9 + $0xa8] sm:$0xff]
    %v116 = vld [vmem:[#allocation9 + $0xb0] sm:$0xff]
    %v117 = vld [vmem:[#allocation9 + $0xb8] sm:$0xff]
    %v118 = vld [vmem:[#allocation9 + $0xc0] sm:$0xff]
    %v119 = vld [vmem:[#allocation9 + $0xc8] sm:$0xff]
    %v120 = vld [vmem:[#allocation9 + $0xd0] sm:$0xff]
    %v121 = vld [vmem:[#allocation9 + $0xd8] sm:$0xff]
    %v122 = vld [vmem:[#allocation9 + $0xe0] sm:$0xff]
    %v123 = vld [vmem:[#allocation9 + $0xe8] sm:$0xff]
    %v124 = vld [vmem:[#allocation9 + $0xf0] sm:$0xff]
    %v125 = vld [vmem:[#allocation9 + $0xf8] sm:$0xff]
    %v126 = vld [vmem:[%s3] sm:$0xf]
    %v128 = vlaneseq
    %v129 = vshrl.u32 %v128, 7
    %v130 = vsub.s32 0, %v129
    %v131 = vrot.slane %v126, %v130
    %v132 = vlaneseq
    %v133 = vshrl.u32 %v132, 7
    %v134 = vsub.s32 1, %v133
    %v135 = vrot.slane %v126, %v134
    %v136 = vlaneseq
    %v137 = vshrl.u32 %v136, 7
    %v138 = vsub.s32 2, %v137
    %v139 = vrot.slane %v126, %v138
    %v140 = vlaneseq
    %v141 = vshrl.u32 %v140, 7
    %v142 = vsub.s32 3, %v141
    %v143 = vrot.slane %v126, %v142
    %v156 = vunpack.c.l.b16 %v86
    %v157 = vunpack.c.l.b16 %v87
    %v158 = vunpack.c.l.b16 %v88
    %v159 = vunpack.c.l.b16 %v89
    %v160 = vunpack.c.l.b16 %v90
    %v161 = vunpack.c.l.b16 %v91
    %v162 = vunpack.c.l.b16 %v92
    %v163 = vunpack.c.l.b16 %v93
    %v164 = vpack.c.b16 %v157, %v156
    %v165 = vpack.c.b16 %v159, %v158
    %v166 = vpack.c.b16 %v161, %v160
    %v167 = vpack.c.b16 %v163, %v162
    %v204 = vunpack.c.l.b16 %v94
    %v205 = vunpack.c.h.b16 %v94
    %v206 = vunpack.c.l.b16 %v95
    %v207 = vunpack.c.h.b16 %v95
    %v208 = vunpack.c.l.b16 %v96
    %v209 = vunpack.c.h.b16 %v96
    %v210 = vunpack.c.l.b16 %v97
    %v211 = vunpack.c.h.b16 %v97
    %v212 = vunpack.c.l.b16 %v98
    %v213 = vunpack.c.h.b16 %v98
    %v214 = vunpack.c.l.b16 %v99
    %v215 = vunpack.c.h.b16 %v99
    %v216 = vunpack.c.l.b16 %v100
    %v217 = vunpack.c.h.b16 %v100
    %v218 = vunpack.c.l.b16 %v101
    %v219 = vunpack.c.h.b16 %v101
    %v220 = vunpack.c.l.b16 %v102
    %v221 = vunpack.c.h.b16 %v102
    %v222 = vunpack.c.l.b16 %v103
    %v223 = vunpack.c.h.b16 %v103
    %v224 = vunpack.c.l.b16 %v104
    %v225 = vunpack.c.h.b16 %v104
    %v226 = vunpack.c.l.b16 %v105
    %v227 = vunpack.c.h.b16 %v105
    %v228 = vunpack.c.l.b16 %v106
    %v229 = vunpack.c.h.b16 %v106
    %v230 = vunpack.c.l.b16 %v107
    %v231 = vunpack.c.h.b16 %v107
    %v232 = vunpack.c.l.b16 %v108
    %v233 = vunpack.c.h.b16 %v108
    %v234 = vunpack.c.l.b16 %v109
    %v235 = vunpack.c.h.b16 %v109
    %v236 = vunpack.c.l.b16 %v110
    %v237 = vunpack.c.h.b16 %v110
    %v238 = vunpack.c.l.b16 %v111
    %v239 = vunpack.c.h.b16 %v111
    %v240 = vunpack.c.l.b16 %v112
    %v241 = vunpack.c.h.b16 %v112
    %v242 = vunpack.c.l.b16 %v113
    %v243 = vunpack.c.h.b16 %v113
    %v244 = vunpack.c.l.b16 %v114
    %v245 = vunpack.c.h.b16 %v114
    %v246 = vunpack.c.l.b16 %v115
    %v247 = vunpack.c.h.b16 %v115
    %v248 = vunpack.c.l.b16 %v116
    %v249 = vunpack.c.h.b16 %v116
    %v250 = vunpack.c.l.b16 %v117
    %v251 = vunpack.c.h.b16 %v117
    %v252 = vunpack.c.l.b16 %v118
    %v253 = vunpack.c.h.b16 %v118
    %v254 = vunpack.c.l.b16 %v119
    %v255 = vunpack.c.h.b16 %v119
    %v256 = vunpack.c.l.b16 %v120
    %v257 = vunpack.c.h.b16 %v120
    %v258 = vunpack.c.l.b16 %v121
    %v259 = vunpack.c.h.b16 %v121
    %v260 = vunpack.c.l.b16 %v122
    %v261 = vunpack.c.h.b16 %v122
    %v262 = vunpack.c.l.b16 %v123
    %v263 = vunpack.c.h.b16 %v123
    %v264 = vunpack.c.l.b16 %v124
    %v265 = vunpack.c.h.b16 %v124
    %v266 = vunpack.c.l.b16 %v125
    %v267 = vunpack.c.h.b16 %v125
    %v268 = vpack.c.b16 %v208, %v204
    %v269 = vpack.c.b16 %v209, %v205
    %v270 = vpack.c.b16 %v210, %v206
    %v271 = vpack.c.b16 %v211, %v207
    %v272 = vpack.c.b16 %v216, %v212
    %v273 = vpack.c.b16 %v217, %v213
    %v274 = vpack.c.b16 %v218, %v214
    %v275 = vpack.c.b16 %v219, %v215
    %v276 = vpack.c.b16 %v224, %v220
    %v277 = vpack.c.b16 %v225, %v221
    %v278 = vpack.c.b16 %v226, %v222
    %v279 = vpack.c.b16 %v227, %v223
    %v280 = vpack.c.b16 %v232, %v228
    %v281 = vpack.c.b16 %v233, %v229
    %v282 = vpack.c.b16 %v234, %v230
    %v283 = vpack.c.b16 %v235, %v231
    %v284 = vpack.c.b16 %v240, %v236
    %v285 = vpack.c.b16 %v241, %v237
    %v286 = vpack.c.b16 %v242, %v238
    %v287 = vpack.c.b16 %v243, %v239
    %v288 = vpack.c.b16 %v248, %v244
    %v289 = vpack.c.b16 %v249, %v245
    %v290 = vpack.c.b16 %v250, %v246
    %v291 = vpack.c.b16 %v251, %v247
    %v292 = vpack.c.b16 %v256, %v252
    %v293 = vpack.c.b16 %v257, %v253
    %v294 = vpack.c.b16 %v258, %v254
    %v295 = vpack.c.b16 %v259, %v255
    %v296 = vpack.c.b16 %v264, %v260
    %v297 = vpack.c.b16 %v265, %v261
    %v298 = vpack.c.b16 %v266, %v262
    %v299 = vpack.c.b16 %v267, %v263
    %332 = vmatprep.subr.bf16.mxu0 %v269
    %333 = vmatpush1.bf16.msra.mxu0 %v268
    %334 = vmatprep.subr.bf16.mxu0 %v273
    %335 = vmatpush1.bf16.msra.mxu0 %v272
    %336 = vmatprep.subr.bf16.mxu0 %v277
    %337 = vmatpush1.bf16.msra.mxu0 %v276
    %338 = vmatprep.subr.bf16.mxu0 %v281
    %339 = vmatpush1.bf16.msra.mxu0 %v280
    %340 = vmatprep.subr.bf16.mxu0 %v285
    %341 = vmatpush1.bf16.msra.mxu0 %v284
    %342 = vmatprep.subr.bf16.mxu0 %v289
    %343 = vmatpush1.bf16.msra.mxu0 %v288
    %344 = vmatprep.subr.bf16.mxu0 %v293
    %345 = vmatpush1.bf16.msra.mxu0 %v292
    %346 = vmatprep.subr.bf16.mxu0 %v297
    %347 = vmatpush1.bf16.msra.mxu0 %v296
    %348 = vmatprep.subr.bf16.mxu0 0
    %349 = vmatpush1.bf16.msra.mxu0 0
    %350 = vmatprep.subr.bf16.mxu0 0
    %351 = vmatpush1.bf16.msra.mxu0 0
    %352 = vmatprep.subr.bf16.mxu0 0
    %353 = vmatpush1.bf16.msra.mxu0 0
    %354 = vmatprep.subr.bf16.mxu0 0
    %355 = vmatpush1.bf16.msra.mxu0 0
    %356 = vmatprep.subr.bf16.mxu0 0
    %357 = vmatpush1.bf16.msra.mxu0 0
    %358 = vmatprep.subr.bf16.mxu0 0
    %359 = vmatpush1.bf16.msra.mxu0 0
    %360 = vmatprep.subr.bf16.mxu0 0
    %361 = vmatpush1.bf16.msra.mxu0 0
    %362 = vmatprep.subr.bf16.mxu0 0
    %363 = vmatpush1.bf16.msra.mxu0 0
    %364 = vmatprep.mubr.bf16.mxu0 0
    %365 = vmatmul.mubr.bf16.gmra.mrb[0].mxu0 %v164
    %v366 = vpop.f32.mrb[0].mxu0
    %v367 = vadd.f32 %v131, %v366
    %v368 = vpop.f32.mrb[0].mxu0
    %v369 = vadd.f32 %v135, %v368
    %v370 = vpop.f32.mrb[0].mxu0
    %v371 = vadd.f32 %v131, %v370
    %v372 = vpop.f32.mrb[0].mxu0
    %v373 = vadd.f32 %v135, %v372
    %374 = vmatprep.mubr.bf16.mxu0 0
    %375 = vmatmul.mubr.bf16.gmra.mrb[0].mxu0 %v165
    %v376 = vpop.f32.mrb[0].mxu0
    %v377 = vadd.f32 %v131, %v376
    %v378 = vpop.f32.mrb[0].mxu0
    %v379 = vadd.f32 %v135, %v378
    %v380 = vpop.f32.mrb[0].mxu0
    %v381 = vadd.f32 %v131, %v380
    %v382 = vpop.f32.mrb[0].mxu0
    %v383 = vadd.f32 %v135, %v382
    %384 = vmatprep.mubr.bf16.mxu0 0
    %385 = vmatmul.mubr.bf16.gmra.mrb[0].mxu0 %v166
    %v386 = vpop.f32.mrb[0].mxu0
    %v387 = vadd.f32 %v131, %v386
    %v388 = vpop.f32.mrb[0].mxu0
    %v389 = vadd.f32 %v135, %v388
    %v390 = vpop.f32.mrb[0].mxu0
    %v391 = vadd.f32 %v131, %v390
    %v392 = vpop.f32.mrb[0].mxu0
    %v393 = vadd.f32 %v135, %v392
    %394 = vmatprep.mubr.bf16.mxu0 0
    %395 = vmatmul.mubr.bf16.gmra.mrb[0].mxu0 %v167
    %v396 = vpop.f32.mrb[0].mxu0
    %v397 = vadd.f32 %v131, %v396
    %v398 = vpop.f32.mrb[0].mxu0
    %v399 = vadd.f32 %v135, %v398
    %v400 = vpop.f32.mrb[0].mxu0
    %v401 = vadd.f32 %v131, %v400
    %v402 = vpop.f32.mrb[0].mxu0
    %v403 = vadd.f32 %v135, %v402
    %404 = vdwg.mxu0
    %405 = vmatprep.subr.bf16.mxu0 %v271
    %406 = vmatpush1.bf16.msra.mxu0 %v270
    %407 = vmatprep.subr.bf16.mxu0 %v275
    %408 = vmatpush1.bf16.msra.mxu0 %v274
    %409 = vmatprep.subr.bf16.mxu0 %v279
    %410 = vmatpush1.bf16.msra.mxu0 %v278
    %411 = vmatprep.subr.bf16.mxu0 %v283
    %412 = vmatpush1.bf16.msra.mxu0 %v282
    %413 = vmatprep.subr.bf16.mxu0 %v287
    %414 = vmatpush1.bf16.msra.mxu0 %v286
    %415 = vmatprep.subr.bf16.mxu0 %v291
    %416 = vmatpush1.bf16.msra.mxu0 %v290
    %417 = vmatprep.subr.bf16.mxu0 %v295
    %418 = vmatpush1.bf16.msra.mxu0 %v294
    %419 = vmatprep.subr.bf16.mxu0 %v299
    %420 = vmatpush1.bf16.msra.mxu0 %v298
    %421 = vmatprep.subr.bf16.mxu0 0
    %422 = vmatpush1.bf16.msra.mxu0 0
    %423 = vmatprep.subr.bf16.mxu0 0
    %424 = vmatpush1.bf16.msra.mxu0 0
    %425 = vmatprep.subr.bf16.mxu0 0
    %426 = vmatpush1.bf16.msra.mxu0 0
    %427 = vmatprep.subr.bf16.mxu0 0
    %428 = vmatpush1.bf16.msra.mxu0 0
    %429 = vmatprep.subr.bf16.mxu0 0
    %430 = vmatpush1.bf16.msra.mxu0 0
    %431 = vmatprep.subr.bf16.mxu0 0
    %432 = vmatpush1.bf16.msra.mxu0 0
    %433 = vmatprep.subr.bf16.mxu0 0
    %434 = vmatpush1.bf16.msra.mxu0 0
    %435 = vmatprep.subr.bf16.mxu0 0
    %436 = vmatpush1.bf16.msra.mxu0 0
    %437 = vmatprep.mubr.bf16.mxu0 0
    %438 = vmatmul.mubr.bf16.gmra.mrb[0].mxu0 %v164
    %v439 = vpop.f32.mrb[0].mxu0
    %v440 = vadd.f32 %v139, %v439
    %v441 = vpop.f32.mrb[0].mxu0
    %v442 = vadd.f32 %v143, %v441
    %v443 = vpop.f32.mrb[0].mxu0
    %v444 = vadd.f32 %v139, %v443
    %v445 = vpop.f32.mrb[0].mxu0
    %v446 = vadd.f32 %v143, %v445
    %447 = vmatprep.mubr.bf16.mxu0 0
    %448 = vmatmul.mubr.bf16.gmra.mrb[0].mxu0 %v165
    %v449 = vpop.f32.mrb[0].mxu0
    %v450 = vadd.f32 %v139, %v449
    %v451 = vpop.f32.mrb[0].mxu0
    %v452 = vadd.f32 %v143, %v451
    %v453 = vpop.f32.mrb[0].mxu0
    %v454 = vadd.f32 %v139, %v453
    %v455 = vpop.f32.mrb[0].mxu0
    %v456 = vadd.f32 %v143, %v455
    %457 = vmatprep.mubr.bf16.mxu0 0
    %458 = vmatmul.mubr.bf16.gmra.mrb[0].mxu0 %v166
    %v459 = vpop.f32.mrb[0].mxu0
    %v460 = vadd.f32 %v139, %v459
    %v461 = vpop.f32.mrb[0].mxu0
    %v462 = vadd.f32 %v143, %v461
    %v463 = vpop.f32.mrb[0].mxu0
    %v464 = vadd.f32 %v139, %v463
    %v465 = vpop.f32.mrb[0].mxu0
    %v466 = vadd.f32 %v143, %v465
    %467 = vmatprep.mubr.bf16.mxu0 0
    %468 = vmatmul.mubr.bf16.gmra.mrb[0].mxu0 %v167
    %v469 = vpop.f32.mrb[0].mxu0
    %v470 = vadd.f32 %v139, %v469
    %v471 = vpop.f32.mrb[0].mxu0
    %v472 = vadd.f32 %v143, %v471
    %v473 = vpop.f32.mrb[0].mxu0
    %v474 = vadd.f32 %v139, %v473
    %v475 = vpop.f32.mrb[0].mxu0
    %v476 = vadd.f32 %v143, %v475
    %477 = vdwg.mxu0
    %478 = vst [vmem:[#allocation2] sm:$0xff] %v367
    %479 = vst [vmem:[#allocation2 + $0x8] sm:$0xff] %v369
    %480 = vst [vmem:[#allocation2 + $0x10] sm:$0xff] %v440
    %481 = vst [vmem:[#allocation2 + $0x18] sm:$0xff] %v442
    %482 = vst [vmem:[#allocation2 + $0x20] sm:$0xff] %v371
    %483 = vst [vmem:[#allocation2 + $0x28] sm:$0xff] %v373
    %484 = vst [vmem:[#allocation2 + $0x30] sm:$0xff] %v444
    %485 = vst [vmem:[#allocation2 + $0x38] sm:$0xff] %v446
    %486 = vst [vmem:[#allocation2 + $0x40] sm:$0xff] %v377
    %487 = vst [vmem:[#allocation2 + $0x48] sm:$0xff] %v379
    %488 = vst [vmem:[#allocation2 + $0x50] sm:$0xff] %v450
    %489 = vst [vmem:[#allocation2 + $0x58] sm:$0xff] %v452
    %490 = vst [vmem:[#allocation2 + $0x60] sm:$0xff] %v381
    %491 = vst [vmem:[#allocation2 + $0x68] sm:$0xff] %v383
    %492 = vst [vmem:[#allocation2 + $0x70] sm:$0xff] %v454
    %493 = vst [vmem:[#allocation2 + $0x78] sm:$0xff] %v456
    %494 = vst [vmem:[#allocation2 + $0x80] sm:$0xff] %v387
    %495 = vst [vmem:[#allocation2 + $0x88] sm:$0xff] %v389
    %496 = vst [vmem:[#allocation2 + $0x90] sm:$0xff] %v460
    %497 = vst [vmem:[#allocation2 + $0x98] sm:$0xff] %v462
    %498 = vst [vmem:[#allocation2 + $0xa0] sm:$0xff] %v391
    %499 = vst [vmem:[#allocation2 + $0xa8] sm:$0xff] %v393
    %500 = vst [vmem:[#allocation2 + $0xb0] sm:$0xff] %v464
    %501 = vst [vmem:[#allocation2 + $0xb8] sm:$0xff] %v466
    %502 = vst [vmem:[#allocation2 + $0xc0] sm:$0xff] %v397
    %503 = vst [vmem:[#allocation2 + $0xc8] sm:$0xff] %v399
    %504 = vst [vmem:[#allocation2 + $0xd0] sm:$0xff] %v470
    %505 = vst [vmem:[#allocation2 + $0xd8] sm:$0xff] %v472
    %506 = vst [vmem:[#allocation2 + $0xe0] sm:$0xff] %v401
    %507 = vst [vmem:[#allocation2 + $0xe8] sm:$0xff] %v403
    %508 = vst [vmem:[#allocation2 + $0xf0] sm:$0xff] %v474
    %509 = vst [vmem:[#allocation2 + $0xf8] sm:$0xff] %v476
    %v510 = vld [vmem:[#allocation4] sm:$0xff]
    %v511 = vld [vmem:[#allocation5] sm:$0xff]
    %v512 = vld [vmem:[#allocation2] sm:$0xff]
    %v513 = vld [vmem:[#allocation2 + $0x8] sm:$0xff]
    %v514 = vld [vmem:[#allocation2 + $0x10] sm:$0xff]
    %v515 = vld [vmem:[#allocation2 + $0x18] sm:$0xff]
    %v516 = vpack.c.bf16 %v510, %v510
    %v517 = vld [vmem:[#allocation11] sm:$0xff]
    %v518 = vld [vmem:[#allocation11 + $0x8] sm:$0xff]
    %v519 = vld [vmem:[#allocation11 + $0x10] sm:$0xff]
    %v520 = vld [vmem:[#allocation11 + $0x18] sm:$0xff]
    %v521 = vld [vmem:[#allocation11 + $0x20] sm:$0xff]
    %v522 = vld [vmem:[#allocation11 + $0x28] sm:$0xff]
    %v523 = vld [vmem:[#allocation11 + $0x30] sm:$0xff]
    %v524 = vld [vmem:[#allocation11 + $0x38] sm:$0xff]
    %v525 = vld [vmem:[#allocation11 + $0x40] sm:$0xff]
    %v526 = vld [vmem:[#allocation11 + $0x48] sm:$0xff]
    %v527 = vld [vmem:[#allocation11 + $0x50] sm:$0xff]
    %v528 = vld [vmem:[#allocation11 + $0x58] sm:$0xff]
    %v529 = vld [vmem:[#allocation11 + $0x60] sm:$0xff]
    %v530 = vld [vmem:[#allocation11 + $0x68] sm:$0xff]
    %v531 = vld [vmem:[#allocation11 + $0x70] sm:$0xff]
    %v532 = vld [vmem:[#allocation11 + $0x78] sm:$0xff]
    %v533 = vld [vmem:[#allocation11 + $0x80] sm:$0xff]
    %v534 = vld [vmem:[#allocation11 + $0x88] sm:$0xff]
    %v535 = vld [vmem:[#allocation11 + $0x90] sm:$0xff]
    %v536 = vld [vmem:[#allocation11 + $0x98] sm:$0xff]
    %v537 = vld [vmem:[#allocation11 + $0xa0] sm:$0xff]
    %v538 = vld [vmem:[#allocation11 + $0xa8] sm:$0xff]
    %v539 = vld [vmem:[#allocation11 + $0xb0] sm:$0xff]
    %v540 = vld [vmem:[#allocation11 + $0xb8] sm:$0xff]
    %v541 = vld [vmem:[#allocation11 + $0xc0] sm:$0xff]
    %v542 = vld [vmem:[#allocation11 + $0xc8] sm:$0xff]
    %v543 = vld [vmem:[#allocation11 + $0xd0] sm:$0xff]
    %v544 = vld [vmem:[#allocation11 + $0xd8] sm:$0xff]
    %v545 = vld [vmem:[#allocation11 + $0xe0] sm:$0xff]
    %v546 = vld [vmem:[#allocation11 + $0xe8] sm:$0xff]
    %v547 = vld [vmem:[#allocation11 + $0xf0] sm:$0xff]
    %v548 = vld [vmem:[#allocation11 + $0xf8] sm:$0xff]
    %v581 = vunpack.c.l.b16 %v517
    %v582 = vunpack.c.h.b16 %v517
    %v583 = vunpack.c.l.b16 %v518
    %v584 = vunpack.c.h.b16 %v518
    %v585 = vunpack.c.l.b16 %v519
    %v586 = vunpack.c.h.b16 %v519
    %v587 = vunpack.c.l.b16 %v520
    %v588 = vunpack.c.h.b16 %v520
    %v589 = vunpack.c.l.b16 %v521
    %v590 = vunpack.c.h.b16 %v521
    %v591 = vunpack.c.l.b16 %v522
    %v592 = vunpack.c.h.b16 %v522
    %v593 = vunpack.c.l.b16 %v523
    %v594 = vunpack.c.h.b16 %v523
    %v595 = vunpack.c.l.b16 %v524
    %v596 = vunpack.c.h.b16 %v524
    %v597 = vunpack.c.l.b16 %v525
    %v598 = vunpack.c.h.b16 %v525
    %v599 = vunpack.c.l.b16 %v526
    %v600 = vunpack.c.h.b16 %v526
    %v601 = vunpack.c.l.b16 %v527
    %v602 = vunpack.c.h.b16 %v527
    %v603 = vunpack.c.l.b16 %v528
    %v604 = vunpack.c.h.b16 %v528
    %v605 = vunpack.c.l.b16 %v529
    %v606 = vunpack.c.h.b16 %v529
    %v607 = vunpack.c.l.b16 %v530
    %v608 = vunpack.c.h.b16 %v530
    %v609 = vunpack.c.l.b16 %v531
    %v610 = vunpack.c.h.b16 %v531
    %v611 = vunpack.c.l.b16 %v532
    %v612 = vunpack.c.h.b16 %v532
    %v613 = vunpack.c.l.b16 %v533
    %v614 = vunpack.c.h.b16 %v533
    %v615 = vunpack.c.l.b16 %v534
    %v616 = vunpack.c.h.b16 %v534
    %v617 = vunpack.c.l.b16 %v535
    %v618 = vunpack.c.h.b16 %v535
    %v619 = vunpack.c.l.b16 %v536
    %v620 = vunpack.c.h.b16 %v536
    %v621 = vunpack.c.l.b16 %v537
    %v622 = vunpack.c.h.b16 %v537
    %v623 = vunpack.c.l.b16 %v538
    %v624 = vunpack.c.h.b16 %v538
    %v625 = vunpack.c.l.b16 %v539
    %v626 = vunpack.c.h.b16 %v539
    %v627 = vunpack.c.l.b16 %v540
    %v628 = vunpack.c.h.b16 %v540
    %v629 = vunpack.c.l.b16 %v541
    %v630 = vunpack.c.h.b16 %v541
    %v631 = vunpack.c.l.b16 %v542
    %v632 = vunpack.c.h.b16 %v542
    %v633 = vunpack.c.l.b16 %v543
    %v634 = vunpack.c.h.b16 %v543
    %v635 = vunpack.c.l.b16 %v544
    %v636 = vunpack.c.h.b16 %v544
    %v637 = vunpack.c.l.b16 %v545
    %v638 = vunpack.c.h.b16 %v545
    %v639 = vunpack.c.l.b16 %v546
    %v640 = vunpack.c.h.b16 %v546
    %v641 = vunpack.c.l.b16 %v547
    %v642 = vunpack.c.h.b16 %v547
    %v643 = vunpack.c.l.b16 %v548
    %v644 = vunpack.c.h.b16 %v548
    %v645 = vpack.c.b16 %v585, %v581
    %v646 = vpack.c.b16 %v586, %v582
    %v647 = vpack.c.b16 %v587, %v583
    %v648 = vpack.c.b16 %v588, %v584
    %v649 = vpack.c.b16 %v593, %v589
    %v650 = vpack.c.b16 %v594, %v590
    %v651 = vpack.c.b16 %v595, %v591
    %v652 = vpack.c.b16 %v596, %v592
    %v653 = vpack.c.b16 %v601, %v597
    %v654 = vpack.c.b16 %v602, %v598
    %v655 = vpack.c.b16 %v603, %v599
    %v656 = vpack.c.b16 %v604, %v600
    %v657 = vpack.c.b16 %v609, %v605
    %v658 = vpack.c.b16 %v610, %v606
    %v659 = vpack.c.b16 %v611, %v607
    %v660 = vpack.c.b16 %v612, %v608
    %v661 = vpack.c.b16 %v617, %v613
    %v662 = vpack.c.b16 %v618, %v614
    %v663 = vpack.c.b16 %v619, %v615
    %v664 = vpack.c.b16 %v620, %v616
    %v665 = vpack.c.b16 %v625, %v621
    %v666 = vpack.c.b16 %v626, %v622
    %v667 = vpack.c.b16 %v627, %v623
    %v668 = vpack.c.b16 %v628, %v624
    %v669 = vpack.c.b16 %v633, %v629
    %v670 = vpack.c.b16 %v634, %v630
    %v671 = vpack.c.b16 %v635, %v631
    %v672 = vpack.c.b16 %v636, %v632
    %v673 = vpack.c.b16 %v641, %v637
    %v674 = vpack.c.b16 %v642, %v638
    %v675 = vpack.c.b16 %v643, %v639
    %v676 = vpack.c.b16 %v644, %v640
    %709 = vmatprep.subr.bf16.mxu0 %v646
    %710 = vmatpush1.bf16.msra.mxu0 %v645
    %711 = vmatprep.subr.bf16.mxu0 %v650
    %712 = vmatpush1.bf16.msra.mxu0 %v649
    %713 = vmatprep.subr.bf16.mxu0 %v654
    %714 = vmatpush1.bf16.msra.mxu0 %v653
    %715 = vmatprep.subr.bf16.mxu0 %v658
    %716 = vmatpush1.bf16.msra.mxu0 %v657
    %717 = vmatprep.subr.bf16.mxu0 %v662
    %718 = vmatpush1.bf16.msra.mxu0 %v661
    %719 = vmatprep.subr.bf16.mxu0 %v666
    %720 = vmatpush1.bf16.msra.mxu0 %v665
    %721 = vmatprep.subr.bf16.mxu0 %v670
    %722 = vmatpush1.bf16.msra.mxu0 %v669
    %723 = vmatprep.subr.bf16.mxu0 %v674
    %724 = vmatpush1.bf16.msra.mxu0 %v673
    %725 = vmatprep.subr.bf16.mxu0 0
    %726 = vmatpush1.bf16.msra.mxu0 0
    %727 = vmatprep.subr.bf16.mxu0 0
    %728 = vmatpush1.bf16.msra.mxu0 0
    %729 = vmatprep.subr.bf16.mxu0 0
    %730 = vmatpush1.bf16.msra.mxu0 0
    %731 = vmatprep.subr.bf16.mxu0 0
    %732 = vmatpush1.bf16.msra.mxu0 0
    %733 = vmatprep.subr.bf16.mxu0 0
    %734 = vmatpush1.bf16.msra.mxu0 0
    %735 = vmatprep.subr.bf16.mxu0 0
    %736 = vmatpush1.bf16.msra.mxu0 0
    %737 = vmatprep.subr.bf16.mxu0 0
    %738 = vmatpush1.bf16.msra.mxu0 0
    %739 = vmatprep.subr.bf16.mxu0 0
    %740 = vmatpush1.bf16.msra.mxu0 0
    %741 = vmatprep.mubr.bf16.mxu0 0
    %742 = vmatmul.mubr.bf16.gmra.mrb[0].mxu0 %v516
    %v743 = vpop.f32.mrb[0].mxu0
    %v744 = vadd.f32 0.0, %v743
    %v745 = vpop.f32.mrb[0].mxu0
    %v746 = vadd.f32 0.0, %v745
    %v747 = vpop.f32.mrb[0].mxu0
    %v748 = vpop.f32.mrb[0].mxu0
    %749 = vdwg.mxu0
    %750 = vmatprep.subr.bf16.mxu0 %v648
    %751 = vmatpush1.bf16.msra.mxu0 %v647
    %752 = vmatprep.subr.bf16.mxu0 %v652
    %753 = vmatpush1.bf16.msra.mxu0 %v651
    %754 = vmatprep.subr.bf16.mxu0 %v656
    %755 = vmatpush1.bf16.msra.mxu0 %v655
    %756 = vmatprep.subr.bf16.mxu0 %v660
    %757 = vmatpush1.bf16.msra.mxu0 %v659
    %758 = vmatprep.subr.bf16.mxu0 %v664
    %759 = vmatpush1.bf16.msra.mxu0 %v663
    %760 = vmatprep.subr.bf16.mxu0 %v668
    %761 = vmatpush1.bf16.msra.mxu0 %v667
    %762 = vmatprep.subr.bf16.mxu0 %v672
    %763 = vmatpush1.bf16.msra.mxu0 %v671
    %764 = vmatprep.subr.bf16.mxu0 %v676
    %765 = vmatpush1.bf16.msra.mxu0 %v675
    %766 = vmatprep.subr.bf16.mxu0 0
    %767 = vmatpush1.bf16.msra.mxu0 0
    %768 = vmatprep.subr.bf16.mxu0 0
    %769 = vmatpush1.bf16.msra.mxu0 0
    %770 = vmatprep.subr.bf16.mxu0 0
    %771 = vmatpush1.bf16.msra.mxu0 0
    %772 = vmatprep.subr.bf16.mxu0 0
    %773 = vmatpush1.bf16.msra.mxu0 0
    %774 = vmatprep.subr.bf16.mxu0 0
    %775 = vmatpush1.bf16.msra.mxu0 0
    %776 = vmatprep.subr.bf16.mxu0 0
    %777 = vmatpush1.bf16.msra.mxu0 0
    %778 = vmatprep.subr.bf16.mxu0 0
    %779 = vmatpush1.bf16.msra.mxu0 0
    %780 = vmatprep.subr.bf16.mxu0 0
    %781 = vmatpush1.bf16.msra.mxu0 0
    %782 = vmatprep.mubr.bf16.mxu0 0
    %783 = vmatmul.mubr.bf16.gmra.mrb[0].mxu0 %v516
    %v784 = vpop.f32.mrb[0].mxu0
    %v785 = vadd.f32 0.0, %v784
    %v786 = vpop.f32.mrb[0].mxu0
    %v787 = vadd.f32 0.0, %v786
    %v788 = vpop.f32.mrb[0].mxu0
    %v789 = vpop.f32.mrb[0].mxu0
    %790 = vdwg.mxu0
    %v791 = vadd.f32 %v512, %v744
    %v792 = vadd.f32 %v513, %v746
    %v793 = vadd.f32 %v514, %v785
    %v794 = vadd.f32 %v515, %v787
    %v795 = vmul.f32 %v791, 0.5
    %v796 = vtanh.pop %v795
    %v797 = vmul.f32 %v796, 0.5
    %v798 = vadd.f32 %v797, 0.5
    %v799 = vmul.f32 %v792, 0.5
    %v800 = vtanh.pop %v799
    %v801 = vmul.f32 %v800, 0.5
    %v802 = vadd.f32 %v801, 0.5
    %v803 = vtanh.pop %v793
    %v804 = vmul.f32 %v794, 0.5
    %v805 = vtanh.pop %v804
    %v806 = vmul.f32 %v805, 0.5
    %v807 = vadd.f32 %v806, 0.5
    %v808 = vmul.f32 %v511, %v802
    %v809 = vmul.f32 %v798, %v803
    %v810 = vadd.f32 %v808, %v809
    %v811 = vtanh.pop %v810
    %v812 = vmul.f32 %v807, %v811
    %813 = vst [vmem:[#allocation5] sm:$0xff] %v810
    %814 = vst [vmem:[#allocation4] sm:$0xff] %v812
    %815 = vst [vmem:[#allocation3] sm:$0xff] %v812
    %v816 = vld [vmem:[#allocation4] sm:$0xff]
    %v817 = vld [vmem:[#allocation5] sm:$0xff]
    %s818 = scalar_lea.vmem [#allocation2], 32
    %v819 = vld [vmem:[%s818] sm:$0xff]
    %v820 = vld [vmem:[%s818 + $0x8] sm:$0xff]
    %v821 = vld [vmem:[%s818 + $0x10] sm:$0xff]
    %v822 = vld [vmem:[%s818 + $0x18] sm:$0xff]
    %v823 = vpack.c.bf16 %v816, %v816
    %v824 = vld [vmem:[#allocation11] sm:$0xff]
    %v825 = vld [vmem:[#allocation11 + $0x8] sm:$0xff]
    %v826 = vld [vmem:[#allocation11 + $0x10] sm:$0xff]
    %v827 = vld [vmem:[#allocation11 + $0x18] sm:$0xff]
    %v828 = vld [vmem:[#allocation11 + $0x20] sm:$0xff]
    %v829 = vld [vmem:[#allocation11 + $0x28] sm:$0xff]
    %v830 = vld [vmem:[#allocation11 + $0x30] sm:$0xff]
    %v831 = vld [vmem:[#allocation11 + $0x38] sm:$0xff]
    %v832 = vld [vmem:[#allocation11 + $0x40] sm:$0xff]
    %v833 = vld [vmem:[#allocation11 + $0x48] sm:$0xff]
    %v834 = vld [vmem:[#allocation11 + $0x50] sm:$0xff]
    %v835 = vld [vmem:[#allocation11 + $0x58] sm:$0xff]
    %v836 = vld [vmem:[#allocation11 + $0x60] sm:$0xff]
    %v837 = vld [vmem:[#allocation11 + $0x68] sm:$0xff]
    %v838 = vld [vmem:[#allocation11 + $0x70] sm:$0xff]
    %v839 = vld [vmem:[#allocation11 + $0x78] sm:$0xff]
    %v840 = vld [vmem:[#allocation11 + $0x80] sm:$0xff]
    %v841 = vld [vmem:[#allocation11 + $0x88] sm:$0xff]
    %v842 = vld [vmem:[#allocation11 + $0x90] sm:$0xff]
    %v843 = vld [vmem:[#allocation11 + $0x98] sm:$0xff]
    %v844 = vld [vmem:[#allocation11 + $0xa0] sm:$0xff]
    %v845 = vld [vmem:[#allocation11 + $0xa8] sm:$0xff]
    %v846 = vld [vmem:[#allocation11 + $0xb0] sm:$0xff]
    %v847 = vld [vmem:[#allocation11 + $0xb8] sm:$0xff]
    %v848 = vld [vmem:[#allocation11 + $0xc0] sm:$0xff]
    %v849 = vld [vmem:[#allocation11 + $0xc8] sm:$0xff]
    %v850 = vld [vmem:[#allocation11 + $0xd0] sm:$0xff]
    %v851 = vld [vmem:[#allocation11 + $0xd8] sm:$0xff]
    %v852 = vld [vmem:[#allocation11 + $0xe0] sm:$0xff]
    %v853 = vld [vmem:[#allocation11 + $0xe8] sm:$0xff]
    %v854 = vld [vmem:[#allocation11 + $0xf0] sm:$0xff]
    %v855 = vld [vmem:[#allocation11 + $0xf8] sm:$0xff]
    %v888 = vunpack.c.l.b16 %v824
    %v889 = vunpack.c.h.b16 %v824
    %v890 = vunpack.c.l.b16 %v825
    %v891 = vunpack.c.h.b16 %v825
    %v892 = vunpack.c.l.b16 %v826
    %v893 = vunpack.c.h.b16 %v826
    %v894 = vunpack.c.l.b16 %v827
    %v895 = vunpack.c.h.b16 %v827
    %v896 = vunpack.c.l.b16 %v828
    %v897 = vunpack.c.h.b16 %v828
    %v898 = vunpack.c.l.b16 %v829
    %v899 = vunpack.c.h.b16 %v829
    %v900 = vunpack.c.l.b16 %v830
    %v901 = vunpack.c.h.b16 %v830
    %v902 = vunpack.c.l.b16 %v831
    %v903 = vunpack.c.h.b16 %v831
    %v904 = vunpack.c.l.b16 %v832
    %v905 = vunpack.c.h.b16 %v832
    %v906 = vunpack.c.l.b16 %v833
    %v907 = vunpack.c.h.b16 %v833
    %v908 = vunpack.c.l.b16 %v834
    %v909 = vunpack.c.h.b16 %v834
    %v910 = vunpack.c.l.b16 %v835
    %v911 = vunpack.c.h.b16 %v835
    %v912 = vunpack.c.l.b16 %v836
    %v913 = vunpack.c.h.b16 %v836
    %v914 = vunpack.c.l.b16 %v837
    %v915 = vunpack.c.h.b16 %v837
    %v916 = vunpack.c.l.b16 %v838
    %v917 = vunpack.c.h.b16 %v838
    %v918 = vunpack.c.l.b16 %v839
    %v919 = vunpack.c.h.b16 %v839
    %v920 = vunpack.c.l.b16 %v840
    %v921 = vunpack.c.h.b16 %v840
    %v922 = vunpack.c.l.b16 %v841
    %v923 = vunpack.c.h.b16 %v841
    %v924 = vunpack.c.l.b16 %v842
    %v925 = vunpack.c.h.b16 %v842
    %v926 = vunpack.c.l.b16 %v843
    %v927 = vunpack.c.h.b16 %v843
    %v928 = vunpack.c.l.b16 %v844
    %v929 = vunpack.c.h.b16 %v844
    %v930 = vunpack.c.l.b16 %v845
    %v931 = vunpack.c.h.b16 %v845
    %v932 = vunpack.c.l.b16 %v846
    %v933 = vunpack.c.h.b16 %v846
    %v934 = vunpack.c.l.b16 %v847
    %v935 = vunpack.c.h.b16 %v847
    %v936 = vunpack.c.l.b16 %v848
    %v937 = vunpack.c.h.b16 %v848
    %v938 = vunpack.c.l.b16 %v849
    %v939 = vunpack.c.h.b16 %v849
    %v940 = vunpack.c.l.b16 %v850
    %v941 = vunpack.c.h.b16 %v850
    %v942 = vunpack.c.l.b16 %v851
    %v943 = vunpack.c.h.b16 %v851
    %v944 = vunpack.c.l.b16 %v852
    %v945 = vunpack.c.h.b16 %v852
    %v946 = vunpack.c.l.b16 %v853
    %v947 = vunpack.c.h.b16 %v853
    %v948 = vunpack.c.l.b16 %v854
    %v949 = vunpack.c.h.b16 %v854
    %v950 = vunpack.c.l.b16 %v855
    %v951 = vunpack.c.h.b16 %v855
    %v952 = vpack.c.b16 %v892, %v888
    %v953 = vpack.c.b16 %v893, %v889
    %v954 = vpack.c.b16 %v894, %v890
    %v955 = vpack.c.b16 %v895, %v891
    %v956 = vpack.c.b16 %v900, %v896
    %v957 = vpack.c.b16 %v901, %v897
    %v958 = vpack.c.b16 %v902, %v898
    %v959 = vpack.c.b16 %v903, %v899
    %v960 = vpack.c.b16 %v908, %v904
    %v961 = vpack.c.b16 %v909, %v905
    %v962 = vpack.c.b16 %v910, %v906
    %v963 = vpack.c.b16 %v911, %v907
    %v964 = vpack.c.b16 %v916, %v912
    %v965 = vpack.c.b16 %v917, %v913
    %v966 = vpack.c.b16 %v918, %v914
    %v967 = vpack.c.b16 %v919, %v915
    %v968 = vpack.c.b16 %v924, %v920
    %v969 = vpack.c.b16 %v925, %v921
    %v970 = vpack.c.b16 %v926, %v922
    %v971 = vpack.c.b16 %v927, %v923
    %v972 = vpack.c.b16 %v932, %v928
    %v973 = vpack.c.b16 %v933, %v929
    %v974 = vpack.c.b16 %v934, %v930
    %v975 = vpack.c.b16 %v935, %v931
    %v976 = vpack.c.b16 %v940, %v936
    %v977 = vpack.c.b16 %v941, %v937
    %v978 = vpack.c.b16 %v942, %v938
    %v979 = vpack.c.b16 %v943, %v939
    %v980 = vpack.c.b16 %v948, %v944
    %v981 = vpack.c.b16 %v949, %v945
    %v982 = vpack.c.b16 %v950, %v946
    %v983 = vpack.c.b16 %v951, %v947
    %1016 = vmatprep.subr.bf16.mxu0 %v953
    %1017 = vmatpush1.bf16.msra.mxu0 %v952
    %1018 = vmatprep.subr.bf16.mxu0 %v957
    %1019 = vmatpush1.bf16.msra.mxu0 %v956
    %1020 = vmatprep.subr.bf16.mxu0 %v961
    %1021 = vmatpush1.bf16.msra.mxu0 %v960
    %1022 = vmatprep.subr.bf16.mxu0 %v965
    %1023 = vmatpush1.bf16.msra.mxu0 %v964
    %1024 = vmatprep.subr.bf16.mxu0 %v969
    %1025 = vmatpush1.bf16.msra.mxu0 %v968
    %1026 = vmatprep.subr.bf16.mxu0 %v973
    %1027 = vmatpush1.bf16.msra.mxu0 %v972
    %1028 = vmatprep.subr.bf16.mxu0 %v977
    %1029 = vmatpush1.bf16.msra.mxu0 %v976
    %1030 = vmatprep.subr.bf16.mxu0 %v981
    %1031 = vmatpush1.bf16.msra.mxu0 %v980
    %1032 = vmatprep.subr.bf16.mxu0 0
    %1033 = vmatpush1.bf16.msra.mxu0 0
    %1034 = vmatprep.subr.bf16.mxu0 0
    %1035 = vmatpush1.bf16.msra.mxu0 0
    %1036 = vmatprep.subr.bf16.mxu0 0
    %1037 = vmatpush1.bf16.msra.mxu0 0
    %1038 = vmatprep.subr.bf16.mxu0 0
    %1039 = vmatpush1.bf16.msra.mxu0 0
    %1040 = vmatprep.subr.bf16.mxu0 0
    %1041 = vmatpush1.bf16.msra.mxu0 0
    %1042 = vmatprep.subr.bf16.mxu0 0
    %1043 = vmatpush1.bf16.msra.mxu0 0
    %1044 = vmatprep.subr.bf16.mxu0 0
    %1045 = vmatpush1.bf16.msra.mxu0 0
    %1046 = vmatprep.subr.bf16.mxu0 0
    %1047 = vmatpush1.bf16.msra.mxu0 0
    %1048 = vmatprep.mubr.bf16.mxu0 0
    %1049 = vmatmul.mubr.bf16.gmra.mrb[0].mxu0 %v823
    %v1050 = vpop.f32.mrb[0].mxu0
    %v1051 = vadd.f32 0.0, %v1050
    %v1052 = vpop.f32.mrb[0].mxu0
    %v1053 = vadd.f32 0.0, %v1052
    %v1054 = vpop.f32.mrb[0].mxu0
    %v1055 = vpop.f32.mrb[0].mxu0
    %1056 = vdwg.mxu0
    %1057 = vmatprep.subr.bf16.mxu0 %v955
    %1058 = vmatpush1.bf16.msra.mxu0 %v954
    %1059 = vmatprep.subr.bf16.mxu0 %v959
    %1060 = vmatpush1.bf16.msra.mxu0 %v958
    %1061 = vmatprep.subr.bf16.mxu0 %v963
    %1062 = vmatpush1.bf16.msra.mxu0 %v962
    %1063 = vmatprep.subr.bf16.mxu0 %v967
    %1064 = vmatpush1.bf16.msra.mxu0 %v966
    %1065 = vmatprep.subr.bf16.mxu0 %v971
    %1066 = vmatpush1.bf16.msra.mxu0 %v970
    %1067 = vmatprep.subr.bf16.mxu0 %v975
    %1068 = vmatpush1.bf16.msra.mxu0 %v974
    %1069 = vmatprep.subr.bf16.mxu0 %v979
    %1070 = vmatpush1.bf16.msra.mxu0 %v978
    %1071 = vmatprep.subr.bf16.mxu0 %v983
    %1072 = vmatpush1.bf16.msra.mxu0 %v982
    %1073 = vmatprep.subr.bf16.mxu0 0
    %1074 = vmatpush1.bf16.msra.mxu0 0
    %1075 = vmatprep.subr.bf16.mxu0 0
    %1076 = vmatpush1.bf16.msra.mxu0 0
    %1077 = vmatprep.subr.bf16.mxu0 0
    %1078 = vmatpush1.bf16.msra.mxu0 0
    %1079 = vmatprep.subr.bf16.mxu0 0
    %1080 = vmatpush1.bf16.msra.mxu0 0
    %1081 = vmatprep.subr.bf16.mxu0 0
    %1082 = vmatpush1.bf16.msra.mxu0 0
    %1083 = vmatprep.subr.bf16.mxu0 0
    %1084 = vmatpush1.bf16.msra.mxu0 0
    %1085 = vmatprep.subr.bf16.mxu0 0
    %1086 = vmatpush1.bf16.msra.mxu0 0
    %1087 = vmatprep.subr.bf16.mxu0 0
    %1088 = vmatpush1.bf16.msra.mxu0 0
    %1089 = vmatprep.mubr.bf16.mxu0 0
    %1090 = vmatmul.mubr.bf16.gmra.mrb[0].mxu0 %v823
    %v1091 = vpop.f32.mrb[0].mxu0
    %v1092 = vadd.f32 0.0, %v1091
    %v1093 = vpop.f32.mrb[0].mxu0
    %v1094 = vadd.f32 0.0, %v1093
    %v1095 = vpop.f32.mrb[0].mxu0
    %v1096 = vpop.f32.mrb[0].mxu0
    %1097 = vdwg.mxu0
    %v1098 = vadd.f32 %v819, %v1051
    %v1099 = vadd.f32 %v820, %v1053
    %v1100 = vadd.f32 %v821, %v1092
    %v1101 = vadd.f32 %v822, %v1094
    %v1102 = vmul.f32 %v1098, 0.5
    %v1103 = vtanh.pop %v1102
    %v1104 = vmul.f32 %v1103, 0.5
    %v1105 = vadd.f32 %v1104, 0.5
    %v1106 = vmul.f32 %v1099, 0.5
    %v1107 = vtanh.pop %v1106
    %v1108 = vmul.f32 %v1107, 0.5
    %v1109 = vadd.f32 %v1108, 0.5
    %v1110 = vtanh.pop %v1100
    %v1111 = vmul.f32 %v1101, 0.5
    %v1112 = vtanh.pop %v1111
    %v1113 = vmul.f32 %v1112, 0.5
    %v1114 = vadd.f32 %v1113, 0.5
    %v1115 = vmul.f32 %v817, %v1109
    %v1116 = vmul.f32 %v1105, %v1110
    %v1117 = vadd.f32 %v1115, %v1116
    %v1118 = vtanh.pop %v1117
    %v1119 = vmul.f32 %v1114, %v1118
    %1120 = vst [vmem:[#allocation5] sm:$0xff] %v1117
    %1121 = vst [vmem:[#allocation4] sm:$0xff] %v1119
    %s1122 = scalar_lea.vmem [#allocation3], 8
    %1123 = vst [vmem:[%s1122] sm:$0xff] %v1119
    %v1124 = vld [vmem:[#allocation4] sm:$0xff]
    %v1125 = vld [vmem:[#allocation5] sm:$0xff]
    %s1126 = scalar_lea.vmem [#allocation2], 64
    %v1127 = vld [vmem:[%s1126] sm:$0xff]
    %v1128 = vld [vmem:[%s1126 + $0x8] sm:$0xff]
    %v1129 = vld [vmem:[%s1126 + $0x10] sm:$0xff]
    %v1130 = vld [vmem:[%s1126 + $0x18] sm:$0xff]
    %v1131 = vpack.c.bf16 %v1124, %v1124
    %v1132 = vld [vmem:[#allocation11] sm:$0xff]
    %v1133 = vld [vmem:[#allocation11 + $0x8] sm:$0xff]
    %v1134 = vld [vmem:[#allocation11 + $0x10] sm:$0xff]
    %v1135 = vld [vmem:[#allocation11 + $0x18] sm:$0xff]
    %v1136 = vld [vmem:[#allocation11 + $0x20] sm:$0xff]
    %v1137 = vld [vmem:[#allocation11 + $0x28] sm:$0xff]
    %v1138 = vld [vmem:[#allocation11 + $0x30] sm:$0xff]
    %v1139 = vld [vmem:[#allocation11 + $0x38] sm:$0xff]
    %v1140 = vld [vmem:[#allocation11 + $0x40] sm:$0xff]
    %v1141 = vld [vmem:[#allocation11 + $0x48] sm:$0xff]
    %v1142 = vld [vmem:[#allocation11 + $0x50] sm:$0xff]
    %v1143 = vld [vmem:[#allocation11 + $0x58] sm:$0xff]
    %v1144 = vld [vmem:[#allocation11 + $0x60] sm:$0xff]
    %v1145 = vld [vmem:[#allocation11 + $0x68] sm:$0xff]
    %v1146 = vld [vmem:[#allocation11 + $0x70] sm:$0xff]
    %v1147 = vld [vmem:[#allocation11 + $0x78] sm:$0xff]
    %v1148 = vld [vmem:[#allocation11 + $0x80] sm:$0xff]
    %v1149 = vld [vmem:[#allocation11 + $0x88] sm:$0xff]
    %v1150 = vld [vmem:[#allocation11 + $0x90] sm:$0xff]
    %v1151 = vld [vmem:[#allocation11 + $0x98] sm:$0xff]
    %v1152 = vld [vmem:[#allocation11 + $0xa0] sm:$0xff]
    %v1153 = vld [vmem:[#allocation11 + $0xa8] sm:$0xff]
    %v1154 = vld [vmem:[#allocation11 + $0xb0] sm:$0xff]
    %v1155 = vld [vmem:[#allocation11 + $0xb8] sm:$0xff]
    %v1156 = vld [vmem:[#allocation11 + $0xc0] sm:$0xff]
    %v1157 = vld [vmem:[#allocation11 + $0xc8] sm:$0xff]
    %v1158 = vld [vmem:[#allocation11 + $0xd0] sm:$0xff]
    %v1159 = vld [vmem:[#allocation11 + $0xd8] sm:$0xff]
    %v1160 = vld [vmem:[#allocation11 + $0xe0] sm:$0xff]
    %v1161 = vld [vmem:[#allocation11 + $0xe8] sm:$0xff]
    %v1162 = vld [vmem:[#allocation11 + $0xf0] sm:$0xff]
    %v1163 = vld [vmem:[#allocation11 + $0xf8] sm:$0xff]
    %v1196 = vunpack.c.l.b16 %v1132
    %v1197 = vunpack.c.h.b16 %v1132
    %v1198 = vunpack.c.l.b16 %v1133
    %v1199 = vunpack.c.h.b16 %v1133
    %v1200 = vunpack.c.l.b16 %v1134
    %v1201 = vunpack.c.h.b16 %v1134
    %v1202 = vunpack.c.l.b16 %v1135
    %v1203 = vunpack.c.h.b16 %v1135
    %v1204 = vunpack.c.l.b16 %v1136
    %v1205 = vunpack.c.h.b16 %v1136
    %v1206 = vunpack.c.l.b16 %v1137
    %v1207 = vunpack.c.h.b16 %v1137
    %v1208 = vunpack.c.l.b16 %v1138
    %v1209 = vunpack.c.h.b16 %v1138
    %v1210 = vunpack.c.l.b16 %v1139
    %v1211 = vunpack.c.h.b16 %v1139
    %v1212 = vunpack.c.l.b16 %v1140
    %v1213 = vunpack.c.h.b16 %v1140
    %v1214 = vunpack.c.l.b16 %v1141
    %v1215 = vunpack.c.h.b16 %v1141
    %v1216 = vunpack.c.l.b16 %v1142
    %v1217 = vunpack.c.h.b16 %v1142
    %v1218 = vunpack.c.l.b16 %v1143
    %v1219 = vunpack.c.h.b16 %v1143
    %v1220 = vunpack.c.l.b16 %v1144
    %v1221 = vunpack.c.h.b16 %v1144
    %v1222 = vunpack.c.l.b16 %v1145
    %v1223 = vunpack.c.h.b16 %v1145
    %v1224 = vunpack.c.l.b16 %v1146
    %v1225 = vunpack.c.h.b16 %v1146
    %v1226 = vunpack.c.l.b16 %v1147
    %v1227 = vunpack.c.h.b16 %v1147
    %v1228 = vunpack.c.l.b16 %v1148
    %v1229 = vunpack.c.h.b16 %v1148
    %v1230 = vunpack.c.l.b16 %v1149
    %v1231 = vunpack.c.h.b16 %v1149
    %v1232 = vunpack.c.l.b16 %v1150
    %v1233 = vunpack.c.h.b16 %v1150
    %v1234 = vunpack.c.l.b16 %v1151
    %v1235 = vunpack.c.h.b16 %v1151
    %v1236 = vunpack.c.l.b16 %v1152
    %v1237 = vunpack.c.h.b16 %v1152
    %v1238 = vunpack.c.l.b16 %v1153
    %v1239 = vunpack.c.h.b16 %v1153
    %v1240 = vunpack.c.l.b16 %v1154
    %v1241 = vunpack.c.h.b16 %v1154
    %v1242 = vunpack.c.l.b16 %v1155
    %v1243 = vunpack.c.h.b16 %v1155
    %v1244 = vunpack.c.l.b16 %v1156
    %v1245 = vunpack.c.h.b16 %v1156
    %v1246 = vunpack.c.l.b16 %v1157
    %v1247 = vunpack.c.h.b16 %v1157
    %v1248 = vunpack.c.l.b16 %v1158
    %v1249 = vunpack.c.h.b16 %v1158
    %v1250 = vunpack.c.l.b16 %v1159
    %v1251 = vunpack.c.h.b16 %v1159
    %v1252 = vunpack.c.l.b16 %v1160
    %v1253 = vunpack.c.h.b16 %v1160
    %v1254 = vunpack.c.l.b16 %v1161
    %v1255 = vunpack.c.h.b16 %v1161
    %v1256 = vunpack.c.l.b16 %v1162
    %v1257 = vunpack.c.h.b16 %v1162
    %v1258 = vunpack.c.l.b16 %v1163
    %v1259 = vunpack.c.h.b16 %v1163
    %v1260 = vpack.c.b16 %v1200, %v1196
    %v1261 = vpack.c.b16 %v1201, %v1197
    %v1262 = vpack.c.b16 %v1202, %v1198
    %v1263 = vpack.c.b16 %v1203, %v1199
    %v1264 = vpack.c.b16 %v1208, %v1204
    %v1265 = vpack.c.b16 %v1209, %v1205
    %v1266 = vpack.c.b16 %v1210, %v1206
    %v1267 = vpack.c.b16 %v1211, %v1207
    %v1268 = vpack.c.b16 %v1216, %v1212
    %v1269 = vpack.c.b16 %v1217, %v1213
    %v1270 = vpack.c.b16 %v1218, %v1214
    %v1271 = vpack.c.b16 %v1219, %v1215
    %v1272 = vpack.c.b16 %v1224, %v1220
    %v1273 = vpack.c.b16 %v1225, %v1221
    %v1274 = vpack.c.b16 %v1226, %v1222
    %v1275 = vpack.c.b16 %v1227, %v1223
    %v1276 = vpack.c.b16 %v1232, %v1228
    %v1277 = vpack.c.b16 %v1233, %v1229
    %v1278 = vpack.c.b16 %v1234, %v1230
    %v1279 = vpack.c.b16 %v1235, %v1231
    %v1280 = vpack.c.b16 %v1240, %v1236
    %v1281 = vpack.c.b16 %v1241, %v1237
    %v1282 = vpack.c.b16 %v1242, %v1238
    %v1283 = vpack.c.b16 %v1243, %v1239
    %v1284 = vpack.c.b16 %v1248, %v1244
    %v1285 = vpack.c.b16 %v1249, %v1245
    %v1286 = vpack.c.b16 %v1250, %v1246
    %v1287 = vpack.c.b16 %v1251, %v1247
    %v1288 = vpack.c.b16 %v1256, %v1252
    %v1289 = vpack.c.b16 %v1257, %v1253
    %v1290 = vpack.c.b16 %v1258, %v1254
    %v1291 = vpack.c.b16 %v1259, %v1255
    %1324 = vmatprep.subr.bf16.mxu0 %v1261
    %1325 = vmatpush1.bf16.msra.mxu0 %v1260
    %1326 = vmatprep.subr.bf16.mxu0 %v1265
    %1327 = vmatpush1.bf16.msra.mxu0 %v1264
    %1328 = vmatprep.subr.bf16.mxu0 %v1269
    %1329 = vmatpush1.bf16.msra.mxu0 %v1268
    %1330 = vmatprep.subr.bf16.mxu0 %v1273
    %1331 = vmatpush1.bf16.msra.mxu0 %v1272
    %1332 = vmatprep.subr.bf16.mxu0 %v1277
    %1333 = vmatpush1.bf16.msra.mxu0 %v1276
    %1334 = vmatprep.subr.bf16.mxu0 %v1281
    %1335 = vmatpush1.bf16.msra.mxu0 %v1280
    %1336 = vmatprep.subr.bf16.mxu0 %v1285
    %1337 = vmatpush1.bf16.msra.mxu0 %v1284
    %1338 = vmatprep.subr.bf16.mxu0 %v1289
    %1339 = vmatpush1.bf16.msra.mxu0 %v1288
    %1340 = vmatprep.subr.bf16.mxu0 0
    %1341 = vmatpush1.bf16.msra.mxu0 0
    %1342 = vmatprep.subr.bf16.mxu0 0
    %1343 = vmatpush1.bf16.msra.mxu0 0
    %1344 = vmatprep.subr.bf16.mxu0 0
    %1345 = vmatpush1.bf16.msra.mxu0 0
    %1346 = vmatprep.subr.bf16.mxu0 0
    %1347 = vmatpush1.bf16.msra.mxu0 0
    %1348 = vmatprep.subr.bf16.mxu0 0
    %1349 = vmatpush1.bf16.msra.mxu0 0
    %1350 = vmatprep.subr.bf16.mxu0 0
    %1351 = vmatpush1.bf16.msra.mxu0 0
    %1352 = vmatprep.subr.bf16.mxu0 0
    %1353 = vmatpush1.bf16.msra.mxu0 0
    %1354 = vmatprep.subr.bf16.mxu0 0
    %1355 = vmatpush1.bf16.msra.mxu0 0
    %1356 = vmatprep.mubr.bf16.mxu0 0
    %1357 = vmatmul.mubr.bf16.gmra.mrb[0].mxu0 %v1131
    %v1358 = vpop.f32.mrb[0].mxu0
    %v1359 = vadd.f32 0.0, %v1358
    %v1360 = vpop.f32.mrb[0].mxu0
    %v1361 = vadd.f32 0.0, %v1360
    %v1362 = vpop.f32.mrb[0].mxu0
    %v1363 = vpop.f32.mrb[0].mxu0
    %1364 = vdwg.mxu0
    %1365 = vmatprep.subr.bf16.mxu0 %v1263
    %1366 = vmatpush1.bf16.msra.mxu0 %v1262
    %1367 = vmatprep.subr.bf16.mxu0 %v1267
    %1368 = vmatpush1.bf16.msra.mxu0 %v1266
    %1369 = vmatprep.subr.bf16.mxu0 %v1271
    %1370 = vmatpush1.bf16.msra.mxu0 %v1270
    %1371 = vmatprep.subr.bf16.mxu0 %v1275
    %1372 = vmatpush1.bf16.msra.mxu0 %v1274
    %1373 = vmatprep.subr.bf16.mxu0 %v1279
    %1374 = vmatpush1.bf16.msra.mxu0 %v1278
    %1375 = vmatprep.subr.bf16.mxu0 %v1283
    %1376 = vmatpush1.bf16.msra.mxu0 %v1282
    %1377 = vmatprep.subr.bf16.mxu0 %v1287
    %1378 = vmatpush1.bf16.msra.mxu0 %v1286
    %1379 = vmatprep.subr.bf16.mxu0 %v1291
    %1380 = vmatpush1.bf16.msra.mxu0 %v1290
    %1381 = vmatprep.subr.bf16.mxu0 0
    %1382 = vmatpush1.bf16.msra.mxu0 0
    %1383 = vmatprep.subr.bf16.mxu0 0
    %1384 = vmatpush1.bf16.msra.mxu0 0
    %1385 = vmatprep.subr.bf16.mxu0 0
    %1386 = vmatpush1.bf16.msra.mxu0 0
    %1387 = vmatprep.subr.bf16.mxu0 0
    %1388 = vmatpush1.bf16.msra.mxu0 0
    %1389 = vmatprep.subr.bf16.mxu0 0
    %1390 = vmatpush1.bf16.msra.mxu0 0
    %1391 = vmatprep.subr.bf16.mxu0 0
    %1392 = vmatpush1.bf16.msra.mxu0 0
    %1393 = vmatprep.subr.bf16.mxu0 0
    %1394 = vmatpush1.bf16.msra.mxu0 0
    %1395 = vmatprep.subr.bf16.mxu0 0
    %1396 = vmatpush1.bf16.msra.mxu0 0
    %1397 = vmatprep.mubr.bf16.mxu0 0
    %1398 = vmatmul.mubr.bf16.gmra.mrb[0].mxu0 %v1131
    %v1399 = vpop.f32.mrb[0].mxu0
    %v1400 = vadd.f32 0.0, %v1399
    %v1401 = vpop.f32.mrb[0].mxu0
    %v1402 = vadd.f32 0.0, %v1401
    %v1403 = vpop.f32.mrb[0].mxu0
    %v1404 = vpop.f32.mrb[0].mxu0
    %1405 = vdwg.mxu0
    %v1406 = vadd.f32 %v1127, %v1359
    %v1407 = vadd.f32 %v1128, %v1361
    %v1408 = vadd.f32 %v1129, %v1400
    %v1409 = vadd.f32 %v1130, %v1402
    %v1410 = vmul.f32 %v1406, 0.5
    %v1411 = vtanh.pop %v1410
    %v1412 = vmul.f32 %v1411, 0.5
    %v1413 = vadd.f32 %v1412, 0.5
    %v1414 = vmul.f32 %v1407, 0.5
    %v1415 = vtanh.pop %v1414
    %v1416 = vmul.f32 %v1415, 0.5
    %v1417 = vadd.f32 %v1416, 0.5
    %v1418 = vtanh.pop %v1408
    %v1419 = vmul.f32 %v1409, 0.5
    %v1420 = vtanh.pop %v1419
    %v1421 = vmul.f32 %v1420, 0.5
    %v1422 = vadd.f32 %v1421, 0.5
    %v1423 = vmul.f32 %v1125, %v1417
    %v1424 = vmul.f32 %v1413, %v1418
    %v1425 = vadd.f32 %v1423, %v1424
    %v1426 = vtanh.pop %v1425
    %v1427 = vmul.f32 %v1422, %v1426
    %1428 = vst [vmem:[#allocation5] sm:$0xff] %v1425
    %1429 = vst [vmem:[#allocation4] sm:$0xff] %v1427
    %s1430 = scalar_lea.vmem [#allocation3], 16
    %1431 = vst [vmem:[%s1430] sm:$0xff] %v1427
    %v1432 = vld [vmem:[#allocation4] sm:$0xff]
    %v1433 = vld [vmem:[#allocation5] sm:$0xff]
    %s1434 = scalar_lea.vmem [#allocation2], 96
    %v1435 = vld [vmem:[%s1434] sm:$0xff]
    %v1436 = vld [vmem:[%s1434 + $0x8] sm:$0xff]
    %v1437 = vld [vmem:[%s1434 + $0x10] sm:$0xff]
    %v1438 = vld [vmem:[%s1434 + $0x18] sm:$0xff]
    %v1439 = vpack.c.bf16 %v1432, %v1432
    %v1440 = vld [vmem:[#allocation11] sm:$0xff]
    %v1441 = vld [vmem:[#allocation11 + $0x8] sm:$0xff]
    %v1442 = vld [vmem:[#allocation11 + $0x10] sm:$0xff]
    %v1443 = vld [vmem:[#allocation11 + $0x18] sm:$0xff]
    %v1444 = vld [vmem:[#allocation11 + $0x20] sm:$0xff]
    %v1445 = vld [vmem:[#allocation11 + $0x28] sm:$0xff]
    %v1446 = vld [vmem:[#allocation11 + $0x30] sm:$0xff]
    %v1447 = vld [vmem:[#allocation11 + $0x38] sm:$0xff]
    %v1448 = vld [vmem:[#allocation11 + $0x40] sm:$0xff]
    %v1449 = vld [vmem:[#allocation11 + $0x48] sm:$0xff]
    %v1450 = vld [vmem:[#allocation11 + $0x50] sm:$0xff]
    %v1451 = vld [vmem:[#allocation11 + $0x58] sm:$0xff]
    %v1452 = vld [vmem:[#allocation11 + $0x60] sm:$0xff]
    %v1453 = vld [vmem:[#allocation11 + $0x68] sm:$0xff]
    %v1454 = vld [vmem:[#allocation11 + $0x70] sm:$0xff]
    %v1455 = vld [vmem:[#allocation11 + $0x78] sm:$0xff]
    %v1456 = vld [vmem:[#allocation11 + $0x80] sm:$0xff]
    %v1457 = vld [vmem:[#allocation11 + $0x88] sm:$0xff]
    %v1458 = vld [vmem:[#allocation11 + $0x90] sm:$0xff]
    %v1459 = vld [vmem:[#allocation11 + $0x98] sm:$0xff]
    %v1460 = vld [vmem:[#allocation11 + $0xa0] sm:$0xff]
    %v1461 = vld [vmem:[#allocation11 + $0xa8] sm:$0xff]
    %v1462 = vld [vmem:[#allocation11 + $0xb0] sm:$0xff]
    %v1463 = vld [vmem:[#allocation11 + $0xb8] sm:$0xff]
    %v1464 = vld [vmem:[#allocation11 + $0xc0] sm:$0xff]
    %v1465 = vld [vmem:[#allocation11 + $0xc8] sm:$0xff]
    %v1466 = vld [vmem:[#allocation11 + $0xd0] sm:$0xff]
    %v1467 = vld [vmem:[#allocation11 + $0xd8] sm:$0xff]
    %v1468 = vld [vmem:[#allocation11 + $0xe0] sm:$0xff]
    %v1469 = vld [vmem:[#allocation11 + $0xe8] sm:$0xff]
    %v1470 = vld [vmem:[#allocation11 + $0xf0] sm:$0xff]
    %v1471 = vld [vmem:[#allocation11 + $0xf8] sm:$0xff]
    %v1504 = vunpack.c.l.b16 %v1440
    %v1505 = vunpack.c.h.b16 %v1440
    %v1506 = vunpack.c.l.b16 %v1441
    %v1507 = vunpack.c.h.b16 %v1441
    %v1508 = vunpack.c.l.b16 %v1442
    %v1509 = vunpack.c.h.b16 %v1442
    %v1510 = vunpack.c.l.b16 %v1443
    %v1511 = vunpack.c.h.b16 %v1443
    %v1512 = vunpack.c.l.b16 %v1444
    %v1513 = vunpack.c.h.b16 %v1444
    %v1514 = vunpack.c.l.b16 %v1445
    %v1515 = vunpack.c.h.b16 %v1445
    %v1516 = vunpack.c.l.b16 %v1446
    %v1517 = vunpack.c.h.b16 %v1446
    %v1518 = vunpack.c.l.b16 %v1447
    %v1519 = vunpack.c.h.b16 %v1447
    %v1520 = vunpack.c.l.b16 %v1448
    %v1521 = vunpack.c.h.b16 %v1448
    %v1522 = vunpack.c.l.b16 %v1449
    %v1523 = vunpack.c.h.b16 %v1449
    %v1524 = vunpack.c.l.b16 %v1450
    %v1525 = vunpack.c.h.b16 %v1450
    %v1526 = vunpack.c.l.b16 %v1451
    %v1527 = vunpack.c.h.b16 %v1451
    %v1528 = vunpack.c.l.b16 %v1452
    %v1529 = vunpack.c.h.b16 %v1452
    %v1530 = vunpack.c.l.b16 %v1453
    %v1531 = vunpack.c.h.b16 %v1453
    %v1532 = vunpack.c.l.b16 %v1454
    %v1533 = vunpack.c.h.b16 %v1454
    %v1534 = vunpack.c.l.b16 %v1455
    %v1535 = vunpack.c.h.b16 %v1455
    %v1536 = vunpack.c.l.b16 %v1456
    %v1537 = vunpack.c.h.b16 %v1456
    %v1538 = vunpack.c.l.b16 %v1457
    %v1539 = vunpack.c.h.b16 %v1457
    %v1540 = vunpack.c.l.b16 %v1458
    %v1541 = vunpack.c.h.b16 %v1458
    %v1542 = vunpack.c.l.b16 %v1459
    %v1543 = vunpack.c.h.b16 %v1459
    %v1544 = vunpack.c.l.b16 %v1460
    %v1545 = vunpack.c.h.b16 %v1460
    %v1546 = vunpack.c.l.b16 %v1461
    %v1547 = vunpack.c.h.b16 %v1461
    %v1548 = vunpack.c.l.b16 %v1462
    %v1549 = vunpack.c.h.b16 %v1462
    %v1550 = vunpack.c.l.b16 %v1463
    %v1551 = vunpack.c.h.b16 %v1463
    %v1552 = vunpack.c.l.b16 %v1464
    %v1553 = vunpack.c.h.b16 %v1464
    %v1554 = vunpack.c.l.b16 %v1465
    %v1555 = vunpack.c.h.b16 %v1465
    %v1556 = vunpack.c.l.b16 %v1466
    %v1557 = vunpack.c.h.b16 %v1466
    %v1558 = vunpack.c.l.b16 %v1467
    %v1559 = vunpack.c.h.b16 %v1467
    %v1560 = vunpack.c.l.b16 %v1468
    %v1561 = vunpack.c.h.b16 %v1468
    %v1562 = vunpack.c.l.b16 %v1469
    %v1563 = vunpack.c.h.b16 %v1469
    %v1564 = vunpack.c.l.b16 %v1470
    %v1565 = vunpack.c.h.b16 %v1470
    %v1566 = vunpack.c.l.b16 %v1471
    %v1567 = vunpack.c.h.b16 %v1471
    %v1568 = vpack.c.b16 %v1508, %v1504
    %v1569 = vpack.c.b16 %v1509, %v1505
    %v1570 = vpack.c.b16 %v1510, %v1506
    %v1571 = vpack.c.b16 %v1511, %v1507
    %v1572 = vpack.c.b16 %v1516, %v1512
    %v1573 = vpack.c.b16 %v1517, %v1513
    %v1574 = vpack.c.b16 %v1518, %v1514
    %v1575 = vpack.c.b16 %v1519, %v1515
    %v1576 = vpack.c.b16 %v1524, %v1520
    %v1577 = vpack.c.b16 %v1525, %v1521
    %v1578 = vpack.c.b16 %v1526, %v1522
    %v1579 = vpack.c.b16 %v1527, %v1523
    %v1580 = vpack.c.b16 %v1532, %v1528
    %v1581 = vpack.c.b16 %v1533, %v1529
    %v1582 = vpack.c.b16 %v1534, %v1530
    %v1583 = vpack.c.b16 %v1535, %v1531
    %v1584 = vpack.c.b16 %v1540, %v1536
    %v1585 = vpack.c.b16 %v1541, %v1537
    %v1586 = vpack.c.b16 %v1542, %v1538
    %v1587 = vpack.c.b16 %v1543, %v1539
    %v1588 = vpack.c.b16 %v1548, %v1544
    %v1589 = vpack.c.b16 %v1549, %v1545
    %v1590 = vpack.c.b16 %v1550, %v1546
    %v1591 = vpack.c.b16 %v1551, %v1547
    %v1592 = vpack.c.b16 %v1556, %v1552
    %v1593 = vpack.c.b16 %v1557, %v1553
    %v1594 = vpack.c.b16 %v1558, %v1554
    %v1595 = vpack.c.b16 %v1559, %v1555
    %v1596 = vpack.c.b16 %v1564, %v1560
    %v1597 = vpack.c.b16 %v1565, %v1561
    %v1598 = vpack.c.b16 %v1566, %v1562
    %v1599 = vpack.c.b16 %v1567, %v1563
    %1632 = vmatprep.subr.bf16.mxu0 %v1569
    %1633 = vmatpush1.bf16.msra.mxu0 %v1568
    %1634 = vmatprep.subr.bf16.mxu0 %v1573
    %1635 = vmatpush1.bf16.msra.mxu0 %v1572
    %1636 = vmatprep.subr.bf16.mxu0 %v1577
    %1637 = vmatpush1.bf16.msra.mxu0 %v1576
    %1638 = vmatprep.subr.bf16.mxu0 %v1581
    %1639 = vmatpush1.bf16.msra.mxu0 %v1580
    %1640 = vmatprep.subr.bf16.mxu0 %v1585
    %1641 = vmatpush1.bf16.msra.mxu0 %v1584
    %1642 = vmatprep.subr.bf16.mxu0 %v1589
    %1643 = vmatpush1.bf16.msra.mxu0 %v1588
    %1644 = vmatprep.subr.bf16.mxu0 %v1593
    %1645 = vmatpush1.bf16.msra.mxu0 %v1592
    %1646 = vmatprep.subr.bf16.mxu0 %v1597
    %1647 = vmatpush1.bf16.msra.mxu0 %v1596
    %1648 = vmatprep.subr.bf16.mxu0 0
    %1649 = vmatpush1.bf16.msra.mxu0 0
    %1650 = vmatprep.subr.bf16.mxu0 0
    %1651 = vmatpush1.bf16.msra.mxu0 0
    %1652 = vmatprep.subr.bf16.mxu0 0
    %1653 = vmatpush1.bf16.msra.mxu0 0
    %1654 = vmatprep.subr.bf16.mxu0 0
    %1655 = vmatpush1.bf16.msra.mxu0 0
    %1656 = vmatprep.subr.bf16.mxu0 0
    %1657 = vmatpush1.bf16.msra.mxu0 0
    %1658 = vmatprep.subr.bf16.mxu0 0
    %1659 = vmatpush1.bf16.msra.mxu0 0
    %1660 = vmatprep.subr.bf16.mxu0 0
    %1661 = vmatpush1.bf16.msra.mxu0 0
    %1662 = vmatprep.subr.bf16.mxu0 0
    %1663 = vmatpush1.bf16.msra.mxu0 0
    %1664 = vmatprep.mubr.bf16.mxu0 0
    %1665 = vmatmul.mubr.bf16.gmra.mrb[0].mxu0 %v1439
    %v1666 = vpop.f32.mrb[0].mxu0
    %v1667 = vadd.f32 0.0, %v1666
    %v1668 = vpop.f32.mrb[0].mxu0
    %v1669 = vadd.f32 0.0, %v1668
    %v1670 = vpop.f32.mrb[0].mxu0
    %v1671 = vpop.f32.mrb[0].mxu0
    %1672 = vdwg.mxu0
    %1673 = vmatprep.subr.bf16.mxu0 %v1571
    %1674 = vmatpush1.bf16.msra.mxu0 %v1570
    %1675 = vmatprep.subr.bf16.mxu0 %v1575
    %1676 = vmatpush1.bf16.msra.mxu0 %v1574
    %1677 = vmatprep.subr.bf16.mxu0 %v1579
    %1678 = vmatpush1.bf16.msra.mxu0 %v1578
    %1679 = vmatprep.subr.bf16.mxu0 %v1583
    %1680 = vmatpush1.bf16.msra.mxu0 %v1582
    %1681 = vmatprep.subr.bf16.mxu0 %v1587
    %1682 = vmatpush1.bf16.msra.mxu0 %v1586
    %1683 = vmatprep.subr.bf16.mxu0 %v1591
    %1684 = vmatpush1.bf16.msra.mxu0 %v1590
    %1685 = vmatprep.subr.bf16.mxu0 %v1595
    %1686 = vmatpush1.bf16.msra.mxu0 %v1594
    %1687 = vmatprep.subr.bf16.mxu0 %v1599
    %1688 = vmatpush1.bf16.msra.mxu0 %v1598
    %1689 = vmatprep.subr.bf16.mxu0 0
    %1690 = vmatpush1.bf16.msra.mxu0 0
    %1691 = vmatprep.subr.bf16.mxu0 0
    %1692 = vmatpush1.bf16.msra.mxu0 0
    %1693 = vmatprep.subr.bf16.mxu0 0
    %1694 = vmatpush1.bf16.msra.mxu0 0
    %1695 = vmatprep.subr.bf16.mxu0 0
    %1696 = vmatpush1.bf16.msra.mxu0 0
    %1697 = vmatprep.subr.bf16.mxu0 0
    %1698 = vmatpush1.bf16.msra.mxu0 0
    %1699 = vmatprep.subr.bf16.mxu0 0
    %1700 = vmatpush1.bf16.msra.mxu0 0
    %1701 = vmatprep.subr.bf16.mxu0 0
    %1702 = vmatpush1.bf16.msra.mxu0 0
    %1703 = vmatprep.subr.bf16.mxu0 0
    %1704 = vmatpush1.bf16.msra.mxu0 0
    %1705 = vmatprep.mubr.bf16.mxu0 0
    %1706 = vmatmul.mubr.bf16.gmra.mrb[0].mxu0 %v1439
    %v1707 = vpop.f32.mrb[0].mxu0
    %v1708 = vadd.f32 0.0, %v1707
    %v1709 = vpop.f32.mrb[0].mxu0
    %v1710 = vadd.f32 0.0, %v1709
    %v1711 = vpop.f32.mrb[0].mxu0
    %v1712 = vpop.f32.mrb[0].mxu0
    %1713 = vdwg.mxu0
    %v1714 = vadd.f32 %v1435, %v1667
    %v1715 = vadd.f32 %v1436, %v1669
    %v1716 = vadd.f32 %v1437, %v1708
    %v1717 = vadd.f32 %v1438, %v1710
    %v1718 = vmul.f32 %v1714, 0.5
    %v1719 = vtanh.pop %v1718
    %v1720 = vmul.f32 %v1719, 0.5
    %v1721 = vadd.f32 %v1720, 0.5
    %v1722 = vmul.f32 %v1715, 0.5
    %v1723 = vtanh.pop %v1722
    %v1724 = vmul.f32 %v1723, 0.5
    %v1725 = vadd.f32 %v1724, 0.5
    %v1726 = vtanh.pop %v1716
    %v1727 = vmul.f32 %v1717, 0.5
    %v1728 = vtanh.pop %v1727
    %v1729 = vmul.f32 %v1728, 0.5
    %v1730 = vadd.f32 %v1729, 0.5
    %v1731 = vmul.f32 %v1433, %v1725
    %v1732 = vmul.f32 %v1721, %v1726
    %v1733 = vadd.f32 %v1731, %v1732
    %v1734 = vtanh.pop %v1733
    %v1735 = vmul.f32 %v1730, %v1734
    %1736 = vst [vmem:[#allocation5] sm:$0xff] %v1733
    %1737 = vst [vmem:[#allocation4] sm:$0xff] %v1735
    %s1738 = scalar_lea.vmem [#allocation3], 24
    %1739 = vst [vmem:[%s1738] sm:$0xff] %v1735
    %v1740 = vld [vmem:[#allocation4] sm:$0xff]
    %v1741 = vld [vmem:[#allocation5] sm:$0xff]
    %s1742 = scalar_lea.vmem [#allocation2], 128
    %v1743 = vld [vmem:[%s1742] sm:$0xff]
    %v1744 = vld [vmem:[%s1742 + $0x8] sm:$0xff]
    %v1745 = vld [vmem:[%s1742 + $0x10] sm:$0xff]
    %v1746 = vld [vmem:[%s1742 + $0x18] sm:$0xff]
    %v1747 = vpack.c.bf16 %v1740, %v1740
    %v1748 = vld [vmem:[#allocation11] sm:$0xff]
    %v1749 = vld [vmem:[#allocation11 + $0x8] sm:$0xff]
    %v1750 = vld [vmem:[#allocation11 + $0x10] sm:$0xff]
    %v1751 = vld [vmem:[#allocation11 + $0x18] sm:$0xff]
    %v1752 = vld [vmem:[#allocation11 + $0x20] sm:$0xff]
    %v1753 = vld [vmem:[#allocation11 + $0x28] sm:$0xff]
    %v1754 = vld [vmem:[#allocation11 + $0x30] sm:$0xff]
    %v1755 = vld [vmem:[#allocation11 + $0x38] sm:$0xff]
    %v1756 = vld [vmem:[#allocation11 + $0x40] sm:$0xff]
    %v1757 = vld [vmem:[#allocation11 + $0x48] sm:$0xff]
    %v1758 = vld [vmem:[#allocation11 + $0x50] sm:$0xff]
    %v1759 = vld [vmem:[#allocation11 + $0x58] sm:$0xff]
    %v1760 = vld [vmem:[#allocation11 + $0x60] sm:$0xff]
    %v1761 = vld [vmem:[#allocation11 + $0x68] sm:$0xff]
    %v1762 = vld [vmem:[#allocation11 + $0x70] sm:$0xff]
    %v1763 = vld [vmem:[#allocation11 + $0x78] sm:$0xff]
    %v1764 = vld [vmem:[#allocation11 + $0x80] sm:$0xff]
    %v1765 = vld [vmem:[#allocation11 + $0x88] sm:$0xff]
    %v1766 = vld [vmem:[#allocation11 + $0x90] sm:$0xff]
    %v1767 = vld [vmem:[#allocation11 + $0x98] sm:$0xff]
    %v1768 = vld [vmem:[#allocation11 + $0xa0] sm:$0xff]
    %v1769 = vld [vmem:[#allocation11 + $0xa8] sm:$0xff]
    %v1770 = vld [vmem:[#allocation11 + $0xb0] sm:$0xff]
    %v1771 = vld [vmem:[#allocation11 + $0xb8] sm:$0xff]
    %v1772 = vld [vmem:[#allocation11 + $0xc0] sm:$0xff]
    %v1773 = vld [vmem:[#allocation11 + $0xc8] sm:$0xff]
    %v1774 = vld [vmem:[#allocation11 + $0xd0] sm:$0xff]
    %v1775 = vld [vmem:[#allocation11 + $0xd8] sm:$0xff]
    %v1776 = vld [vmem:[#allocation11 + $0xe0] sm:$0xff]
    %v1777 = vld [vmem:[#allocation11 + $0xe8] sm:$0xff]
    %v1778 = vld [vmem:[#allocation11 + $0xf0] sm:$0xff]
    %v1779 = vld [vmem:[#allocation11 + $0xf8] sm:$0xff]
    %v1812 = vunpack.c.l.b16 %v1748
    %v1813 = vunpack.c.h.b16 %v1748
    %v1814 = vunpack.c.l.b16 %v1749
    %v1815 = vunpack.c.h.b16 %v1749
    %v1816 = vunpack.c.l.b16 %v1750
    %v1817 = vunpack.c.h.b16 %v1750
    %v1818 = vunpack.c.l.b16 %v1751
    %v1819 = vunpack.c.h.b16 %v1751
    %v1820 = vunpack.c.l.b16 %v1752
    %v1821 = vunpack.c.h.b16 %v1752
    %v1822 = vunpack.c.l.b16 %v1753
    %v1823 = vunpack.c.h.b16 %v1753
    %v1824 = vunpack.c.l.b16 %v1754
    %v1825 = vunpack.c.h.b16 %v1754
    %v1826 = vunpack.c.l.b16 %v1755
    %v1827 = vunpack.c.h.b16 %v1755
    %v1828 = vunpack.c.l.b16 %v1756
    %v1829 = vunpack.c.h.b16 %v1756
    %v1830 = vunpack.c.l.b16 %v1757
    %v1831 = vunpack.c.h.b16 %v1757
    %v1832 = vunpack.c.l.b16 %v1758
    %v1833 = vunpack.c.h.b16 %v1758
    %v1834 = vunpack.c.l.b16 %v1759
    %v1835 = vunpack.c.h.b16 %v1759
    %v1836 = vunpack.c.l.b16 %v1760
    %v1837 = vunpack.c.h.b16 %v1760
    %v1838 = vunpack.c.l.b16 %v1761
    %v1839 = vunpack.c.h.b16 %v1761
    %v1840 = vunpack.c.l.b16 %v1762
    %v1841 = vunpack.c.h.b16 %v1762
    %v1842 = vunpack.c.l.b16 %v1763
    %v1843 = vunpack.c.h.b16 %v1763
    %v1844 = vunpack.c.l.b16 %v1764
    %v1845 = vunpack.c.h.b16 %v1764
    %v1846 = vunpack.c.l.b16 %v1765
    %v1847 = vunpack.c.h.b16 %v1765
    %v1848 = vunpack.c.l.b16 %v1766
    %v1849 = vunpack.c.h.b16 %v1766
    %v1850 = vunpack.c.l.b16 %v1767
    %v1851 = vunpack.c.h.b16 %v1767
    %v1852 = vunpack.c.l.b16 %v1768
    %v1853 = vunpack.c.h.b16 %v1768
    %v1854 = vunpack.c.l.b16 %v1769
    %v1855 = vunpack.c.h.b16 %v1769
    %v1856 = vunpack.c.l.b16 %v1770
    %v1857 = vunpack.c.h.b16 %v1770
    %v1858 = vunpack.c.l.b16 %v1771
    %v1859 = vunpack.c.h.b16 %v1771
    %v1860 = vunpack.c.l.b16 %v1772
    %v1861 = vunpack.c.h.b16 %v1772
    %v1862 = vunpack.c.l.b16 %v1773
    %v1863 = vunpack.c.h.b16 %v1773
    %v1864 = vunpack.c.l.b16 %v1774
    %v1865 = vunpack.c.h.b16 %v1774
    %v1866 = vunpack.c.l.b16 %v1775
    %v1867 = vunpack.c.h.b16 %v1775
    %v1868 = vunpack.c.l.b16 %v1776
    %v1869 = vunpack.c.h.b16 %v1776
    %v1870 = vunpack.c.l.b16 %v1777
    %v1871 = vunpack.c.h.b16 %v1777
    %v1872 = vunpack.c.l.b16 %v1778
    %v1873 = vunpack.c.h.b16 %v1778
    %v1874 = vunpack.c.l.b16 %v1779
    %v1875 = vunpack.c.h.b16 %v1779
    %v1876 = vpack.c.b16 %v1816, %v1812
    %v1877 = vpack.c.b16 %v1817, %v1813
    %v1878 = vpack.c.b16 %v1818, %v1814
    %v1879 = vpack.c.b16 %v1819, %v1815
    %v1880 = vpack.c.b16 %v1824, %v1820
    %v1881 = vpack.c.b16 %v1825, %v1821
    %v1882 = vpack.c.b16 %v1826, %v1822
    %v1883 = vpack.c.b16 %v1827, %v1823
    %v1884 = vpack.c.b16 %v1832, %v1828
    %v1885 = vpack.c.b16 %v1833, %v1829
    %v1886 = vpack.c.b16 %v1834, %v1830
    %v1887 = vpack.c.b16 %v1835, %v1831
    %v1888 = vpack.c.b16 %v1840, %v1836
    %v1889 = vpack.c.b16 %v1841, %v1837
    %v1890 = vpack.c.b16 %v1842, %v1838
    %v1891 = vpack.c.b16 %v1843, %v1839
    %v1892 = vpack.c.b16 %v1848, %v1844
    %v1893 = vpack.c.b16 %v1849, %v1845
    %v1894 = vpack.c.b16 %v1850, %v1846
    %v1895 = vpack.c.b16 %v1851, %v1847
    %v1896 = vpack.c.b16 %v1856, %v1852
    %v1897 = vpack.c.b16 %v1857, %v1853
    %v1898 = vpack.c.b16 %v1858, %v1854
    %v1899 = vpack.c.b16 %v1859, %v1855
    %v1900 = vpack.c.b16 %v1864, %v1860
    %v1901 = vpack.c.b16 %v1865, %v1861
    %v1902 = vpack.c.b16 %v1866, %v1862
    %v1903 = vpack.c.b16 %v1867, %v1863
    %v1904 = vpack.c.b16 %v1872, %v1868
    %v1905 = vpack.c.b16 %v1873, %v1869
    %v1906 = vpack.c.b16 %v1874, %v1870
    %v1907 = vpack.c.b16 %v1875, %v1871
    %1940 = vmatprep.subr.bf16.mxu0 %v1877
    %1941 = vmatpush1.bf16.msra.mxu0 %v1876
    %1942 = vmatprep.subr.bf16.mxu0 %v1881
    %1943 = vmatpush1.bf16.msra.mxu0 %v1880
    %1944 = vmatprep.subr.bf16.mxu0 %v1885
    %1945 = vmatpush1.bf16.msra.mxu0 %v1884
    %1946 = vmatprep.subr.bf16.mxu0 %v1889
    %1947 = vmatpush1.bf16.msra.mxu0 %v1888
    %1948 = vmatprep.subr.bf16.mxu0 %v1893
    %1949 = vmatpush1.bf16.msra.mxu0 %v1892
    %1950 = vmatprep.subr.bf16.mxu0 %v1897
    %1951 = vmatpush1.bf16.msra.mxu0 %v1896
    %1952 = vmatprep.subr.bf16.mxu0 %v1901
    %1953 = vmatpush1.bf16.msra.mxu0 %v1900
    %1954 = vmatprep.subr.bf16.mxu0 %v1905
    %1955 = vmatpush1.bf16.msra.mxu0 %v1904
    %1956 = vmatprep.subr.bf16.mxu0 0
    %1957 = vmatpush1.bf16.msra.mxu0 0
    %1958 = vmatprep.subr.bf16.mxu0 0
    %1959 = vmatpush1.bf16.msra.mxu0 0
    %1960 = vmatprep.subr.bf16.mxu0 0
    %1961 = vmatpush1.bf16.msra.mxu0 0
    %1962 = vmatprep.subr.bf16.mxu0 0
    %1963 = vmatpush1.bf16.msra.mxu0 0
    %1964 = vmatprep.subr.bf16.mxu0 0
    %1965 = vmatpush1.bf16.msra.mxu0 0
    %1966 = vmatprep.subr.bf16.mxu0 0
    %1967 = vmatpush1.bf16.msra.mxu0 0
    %1968 = vmatprep.subr.bf16.mxu0 0
    %1969 = vmatpush1.bf16.msra.mxu0 0
    %1970 = vmatprep.subr.bf16.mxu0 0
    %1971 = vmatpush1.bf16.msra.mxu0 0
    %1972 = vmatprep.mubr.bf16.mxu0 0
    %1973 = vmatmul.mubr.bf16.gmra.mrb[0].mxu0 %v1747
    %v1974 = vpop.f32.mrb[0].mxu0
    %v1975 = vadd.f32 0.0, %v1974
    %v1976 = vpop.f32.mrb[0].mxu0
    %v1977 = vadd.f32 0.0, %v1976
    %v1978 = vpop.f32.mrb[0].mxu0
    %v1979 = vpop.f32.mrb[0].mxu0
    %1980 = vdwg.mxu0
    %1981 = vmatprep.subr.bf16.mxu0 %v1879
    %1982 = vmatpush1.bf16.msra.mxu0 %v1878
    %1983 = vmatprep.subr.bf16.mxu0 %v1883
    %1984 = vmatpush1.bf16.msra.mxu0 %v1882
    %1985 = vmatprep.subr.bf16.mxu0 %v1887
    %1986 = vmatpush1.bf16.msra.mxu0 %v1886
    %1987 = vmatprep.subr.bf16.mxu0 %v1891
    %1988 = vmatpush1.bf16.msra.mxu0 %v1890
    %1989 = vmatprep.subr.bf16.mxu0 %v1895
    %1990 = vmatpush1.bf16.msra.mxu0 %v1894
    %1991 = vmatprep.subr.bf16.mxu0 %v1899
    %1992 = vmatpush1.bf16.msra.mxu0 %v1898
    %1993 = vmatprep.subr.bf16.mxu0 %v1903
    %1994 = vmatpush1.bf16.msra.mxu0 %v1902
    %1995 = vmatprep.subr.bf16.mxu0 %v1907
    %1996 = vmatpush1.bf16.msra.mxu0 %v1906
    %1997 = vmatprep.subr.bf16.mxu0 0
    %1998 = vmatpush1.bf16.msra.mxu0 0
    %1999 = vmatprep.subr.bf16.mxu0 0
    %2000 = vmatpush1.bf16.msra.mxu0 0
    %2001 = vmatprep.subr.bf16.mxu0 0
    %2002 = vmatpush1.bf16.msra.mxu0 0
    %2003 = vmatprep.subr.bf16.mxu0 0
    %2004 = vmatpush1.bf16.msra.mxu0 0
    %2005 = vmatprep.subr.bf16.mxu0 0
    %2006 = vmatpush1.bf16.msra.mxu0 0
    %2007 = vmatprep.subr.bf16.mxu0 0
    %2008 = vmatpush1.bf16.msra.mxu0 0
    %2009 = vmatprep.subr.bf16.mxu0 0
    %2010 = vmatpush1.bf16.msra.mxu0 0
    %2011 = vmatprep.subr.bf16.mxu0 0
    %2012 = vmatpush1.bf16.msra.mxu0 0
    %2013 = vmatprep.mubr.bf16.mxu0 0
    %2014 = vmatmul.mubr.bf16.gmra.mrb[0].mxu0 %v1747
    %v2015 = vpop.f32.mrb[0].mxu0
    %v2016 = vadd.f32 0.0, %v2015
    %v2017 = vpop.f32.mrb[0].mxu0
    %v2018 = vadd.f32 0.0, %v2017
    %v2019 = vpop.f32.mrb[0].mxu0
    %v2020 = vpop.f32.mrb[0].mxu0
    %2021 = vdwg.mxu0
    %v2022 = vadd.f32 %v1743, %v1975
    %v2023 = vadd.f32 %v1744, %v1977
    %v2024 = vadd.f32 %v1745, %v2016
    %v2025 = vadd.f32 %v1746, %v2018
    %v2026 = vmul.f32 %v2022, 0.5
    %v2027 = vtanh.pop %v2026
    %v2028 = vmul.f32 %v2027, 0.5
    %v2029 = vadd.f32 %v2028, 0.5
    %v2030 = vmul.f32 %v2023, 0.5
    %v2031 = vtanh.pop %v2030
    %v2032 = vmul.f32 %v2031, 0.5
    %v2033 = vadd.f32 %v2032, 0.5
    %v2034 = vtanh.pop %v2024
    %v2035 = vmul.f32 %v2025, 0.5
    %v2036 = vtanh.pop %v2035
    %v2037 = vmul.f32 %v2036, 0.5
    %v2038 = vadd.f32 %v2037, 0.5
    %v2039 = vmul.f32 %v1741, %v2033
    %v2040 = vmul.f32 %v2029, %v2034
    %v2041 = vadd.f32 %v2039, %v2040
    %v2042 = vtanh.pop %v2041
    %v2043 = vmul.f32 %v2038, %v2042
    %2044 = vst [vmem:[#allocation5] sm:$0xff] %v2041
    %2045 = vst [vmem:[#allocation4] sm:$0xff] %v2043
    %s2046 = scalar_lea.vmem [#allocation3], 32
    %2047 = vst [vmem:[%s2046] sm:$0xff] %v2043
    %v2048 = vld [vmem:[#allocation4] sm:$0xff]
    %v2049 = vld [vmem:[#allocation5] sm:$0xff]
    %s2050 = scalar_lea.vmem [#allocation2], 160
    %v2051 = vld [vmem:[%s2050] sm:$0xff]
    %v2052 = vld [vmem:[%s2050 + $0x8] sm:$0xff]
    %v2053 = vld [vmem:[%s2050 + $0x10] sm:$0xff]
    %v2054 = vld [vmem:[%s2050 + $0x18] sm:$0xff]
    %v2055 = vpack.c.bf16 %v2048, %v2048
    %v2056 = vld [vmem:[#allocation11] sm:$0xff]
    %v2057 = vld [vmem:[#allocation11 + $0x8] sm:$0xff]
    %v2058 = vld [vmem:[#allocation11 + $0x10] sm:$0xff]
    %v2059 = vld [vmem:[#allocation11 + $0x18] sm:$0xff]
    %v2060 = vld [vmem:[#allocation11 + $0x20] sm:$0xff]
    %v2061 = vld [vmem:[#allocation11 + $0x28] sm:$0xff]
    %v2062 = vld [vmem:[#allocation11 + $0x30] sm:$0xff]
    %v2063 = vld [vmem:[#allocation11 + $0x38] sm:$0xff]
    %v2064 = vld [vmem:[#allocation11 + $0x40] sm:$0xff]
    %v2065 = vld [vmem:[#allocation11 + $0x48] sm:$0xff]
    %v2066 = vld [vmem:[#allocation11 + $0x50] sm:$0xff]
    %v2067 = vld [vmem:[#allocation11 + $0x58] sm:$0xff]
    %v2068 = vld [vmem:[#allocation11 + $0x60] sm:$0xff]
    %v2069 = vld [vmem:[#allocation11 + $0x68] sm:$0xff]
    %v2070 = vld [vmem:[#allocation11 + $0x70] sm:$0xff]
    %v2071 = vld [vmem:[#allocation11 + $0x78] sm:$0xff]
    %v2072 = vld [vmem:[#allocation11 + $0x80] sm:$0xff]
    %v2073 = vld [vmem:[#allocation11 + $0x88] sm:$0xff]
    %v2074 = vld [vmem:[#allocation11 + $0x90] sm:$0xff]
    %v2075 = vld [vmem:[#allocation11 + $0x98] sm:$0xff]
    %v2076 = vld [vmem:[#allocation11 + $0xa0] sm:$0xff]
    %v2077 = vld [vmem:[#allocation11 + $0xa8] sm:$0xff]
    %v2078 = vld [vmem:[#allocation11 + $0xb0] sm:$0xff]
    %v2079 = vld [vmem:[#allocation11 + $0xb8] sm:$0xff]
    %v2080 = vld [vmem:[#allocation11 + $0xc0] sm:$0xff]
    %v2081 = vld [vmem:[#allocation11 + $0xc8] sm:$0xff]
    %v2082 = vld [vmem:[#allocation11 + $0xd0] sm:$0xff]
    %v2083 = vld [vmem:[#allocation11 + $0xd8] sm:$0xff]
    %v2084 = vld [vmem:[#allocation11 + $0xe0] sm:$0xff]
    %v2085 = vld [vmem:[#allocation11 + $0xe8] sm:$0xff]
    %v2086 = vld [vmem:[#allocation11 + $0xf0] sm:$0xff]
    %v2087 = vld [vmem:[#allocation11 + $0xf8] sm:$0xff]
    %v2120 = vunpack.c.l.b16 %v2056
    %v2121 = vunpack.c.h.b16 %v2056
    %v2122 = vunpack.c.l.b16 %v2057
    %v2123 = vunpack.c.h.b16 %v2057
    %v2124 = vunpack.c.l.b16 %v2058
    %v2125 = vunpack.c.h.b16 %v2058
    %v2126 = vunpack.c.l.b16 %v2059
    %v2127 = vunpack.c.h.b16 %v2059
    %v2128 = vunpack.c.l.b16 %v2060
    %v2129 = vunpack.c.h.b16 %v2060
    %v2130 = vunpack.c.l.b16 %v2061
    %v2131 = vunpack.c.h.b16 %v2061
    %v2132 = vunpack.c.l.b16 %v2062
    %v2133 = vunpack.c.h.b16 %v2062
    %v2134 = vunpack.c.l.b16 %v2063
    %v2135 = vunpack.c.h.b16 %v2063
    %v2136 = vunpack.c.l.b16 %v2064
    %v2137 = vunpack.c.h.b16 %v2064
    %v2138 = vunpack.c.l.b16 %v2065
    %v2139 = vunpack.c.h.b16 %v2065
    %v2140 = vunpack.c.l.b16 %v2066
    %v2141 = vunpack.c.h.b16 %v2066
    %v2142 = vunpack.c.l.b16 %v2067
    %v2143 = vunpack.c.h.b16 %v2067
    %v2144 = vunpack.c.l.b16 %v2068
    %v2145 = vunpack.c.h.b16 %v2068
    %v2146 = vunpack.c.l.b16 %v2069
    %v2147 = vunpack.c.h.b16 %v2069
    %v2148 = vunpack.c.l.b16 %v2070
    %v2149 = vunpack.c.h.b16 %v2070
    %v2150 = vunpack.c.l.b16 %v2071
    %v2151 = vunpack.c.h.b16 %v2071
    %v2152 = vunpack.c.l.b16 %v2072
    %v2153 = vunpack.c.h.b16 %v2072
    %v2154 = vunpack.c.l.b16 %v2073
    %v2155 = vunpack.c.h.b16 %v2073
    %v2156 = vunpack.c.l.b16 %v2074
    %v2157 = vunpack.c.h.b16 %v2074
    %v2158 = vunpack.c.l.b16 %v2075
    %v2159 = vunpack.c.h.b16 %v2075
    %v2160 = vunpack.c.l.b16 %v2076
    %v2161 = vunpack.c.h.b16 %v2076
    %v2162 = vunpack.c.l.b16 %v2077
    %v2163 = vunpack.c.h.b16 %v2077
    %v2164 = vunpack.c.l.b16 %v2078
    %v2165 = vunpack.c.h.b16 %v2078
    %v2166 = vunpack.c.l.b16 %v2079
    %v2167 = vunpack.c.h.b16 %v2079
    %v2168 = vunpack.c.l.b16 %v2080
    %v2169 = vunpack.c.h.b16 %v2080
    %v2170 = vunpack.c.l.b16 %v2081
    %v2171 = vunpack.c.h.b16 %v2081
    %v2172 = vunpack.c.l.b16 %v2082
    %v2173 = vunpack.c.h.b16 %v2082
    %v2174 = vunpack.c.l.b16 %v2083
    %v2175 = vunpack.c.h.b16 %v2083
    %v2176 = vunpack.c.l.b16 %v2084
    %v2177 = vunpack.c.h.b16 %v2084
    %v2178 = vunpack.c.l.b16 %v2085
    %v2179 = vunpack.c.h.b16 %v2085
    %v2180 = vunpack.c.l.b16 %v2086
    %v2181 = vunpack.c.h.b16 %v2086
    %v2182 = vunpack.c.l.b16 %v2087
    %v2183 = vunpack.c.h.b16 %v2087
    %v2184 = vpack.c.b16 %v2124, %v2120
    %v2185 = vpack.c.b16 %v2125, %v2121
    %v2186 = vpack.c.b16 %v2126, %v2122
    %v2187 = vpack.c.b16 %v2127, %v2123
    %v2188 = vpack.c.b16 %v2132, %v2128
    %v2189 = vpack.c.b16 %v2133, %v2129
    %v2190 = vpack.c.b16 %v2134, %v2130
    %v2191 = vpack.c.b16 %v2135, %v2131
    %v2192 = vpack.c.b16 %v2140, %v2136
    %v2193 = vpack.c.b16 %v2141, %v2137
    %v2194 = vpack.c.b16 %v2142, %v2138
    %v2195 = vpack.c.b16 %v2143, %v2139
    %v2196 = vpack.c.b16 %v2148, %v2144
    %v2197 = vpack.c.b16 %v2149, %v2145
    %v2198 = vpack.c.b16 %v2150, %v2146
    %v2199 = vpack.c.b16 %v2151, %v2147
    %v2200 = vpack.c.b16 %v2156, %v2152
    %v2201 = vpack.c.b16 %v2157, %v2153
    %v2202 = vpack.c.b16 %v2158, %v2154
    %v2203 = vpack.c.b16 %v2159, %v2155
    %v2204 = vpack.c.b16 %v2164, %v2160
    %v2205 = vpack.c.b16 %v2165, %v2161
    %v2206 = vpack.c.b16 %v2166, %v2162
    %v2207 = vpack.c.b16 %v2167, %v2163
    %v2208 = vpack.c.b16 %v2172, %v2168
    %v2209 = vpack.c.b16 %v2173, %v2169
    %v2210 = vpack.c.b16 %v2174, %v2170
    %v2211 = vpack.c.b16 %v2175, %v2171
    %v2212 = vpack.c.b16 %v2180, %v2176
    %v2213 = vpack.c.b16 %v2181, %v2177
    %v2214 = vpack.c.b16 %v2182, %v2178
    %v2215 = vpack.c.b16 %v2183, %v2179
    %2248 = vmatprep.subr.bf16.mxu0 %v2185
    %2249 = vmatpush1.bf16.msra.mxu0 %v2184
    %2250 = vmatprep.subr.bf16.mxu0 %v2189
    %2251 = vmatpush1.bf16.msra.mxu0 %v2188
    %2252 = vmatprep.subr.bf16.mxu0 %v2193
    %2253 = vmatpush1.bf16.msra.mxu0 %v2192
    %2254 = vmatprep.subr.bf16.mxu0 %v2197
    %2255 = vmatpush1.bf16.msra.mxu0 %v2196
    %2256 = vmatprep.subr.bf16.mxu0 %v2201
    %2257 = vmatpush1.bf16.msra.mxu0 %v2200
    %2258 = vmatprep.subr.bf16.mxu0 %v2205
    %2259 = vmatpush1.bf16.msra.mxu0 %v2204
    %2260 = vmatprep.subr.bf16.mxu0 %v2209
    %2261 = vmatpush1.bf16.msra.mxu0 %v2208
    %2262 = vmatprep.subr.bf16.mxu0 %v2213
    %2263 = vmatpush1.bf16.msra.mxu0 %v2212
    %2264 = vmatprep.subr.bf16.mxu0 0
    %2265 = vmatpush1.bf16.msra.mxu0 0
    %2266 = vmatprep.subr.bf16.mxu0 0
    %2267 = vmatpush1.bf16.msra.mxu0 0
    %2268 = vmatprep.subr.bf16.mxu0 0
    %2269 = vmatpush1.bf16.msra.mxu0 0
    %2270 = vmatprep.subr.bf16.mxu0 0
    %2271 = vmatpush1.bf16.msra.mxu0 0
    %2272 = vmatprep.subr.bf16.mxu0 0
    %2273 = vmatpush1.bf16.msra.mxu0 0
    %2274 = vmatprep.subr.bf16.mxu0 0
    %2275 = vmatpush1.bf16.msra.mxu0 0
    %2276 = vmatprep.subr.bf16.mxu0 0
    %2277 = vmatpush1.bf16.msra.mxu0 0
    %2278 = vmatprep.subr.bf16.mxu0 0
    %2279 = vmatpush1.bf16.msra.mxu0 0
    %2280 = vmatprep.mubr.bf16.mxu0 0
    %2281 = vmatmul.mubr.bf16.gmra.mrb[0].mxu0 %v2055
    %v2282 = vpop.f32.mrb[0].mxu0
    %v2283 = vadd.f32 0.0, %v2282
    %v2284 = vpop.f32.mrb[0].mxu0
    %v2285 = vadd.f32 0.0, %v2284
    %v2286 = vpop.f32.mrb[0].mxu0
    %v2287 = vpop.f32.mrb[0].mxu0
    %2288 = vdwg.mxu0
    %2289 = vmatprep.subr.bf16.mxu0 %v2187
    %2290 = vmatpush1.bf16.msra.mxu0 %v2186
    %2291 = vmatprep.subr.bf16.mxu0 %v2191
    %2292 = vmatpush1.bf16.msra.mxu0 %v2190
    %2293 = vmatprep.subr.bf16.mxu0 %v2195
    %2294 = vmatpush1.bf16.msra.mxu0 %v2194
    %2295 = vmatprep.subr.bf16.mxu0 %v2199
    %2296 = vmatpush1.bf16.msra.mxu0 %v2198
    %2297 = vmatprep.subr.bf16.mxu0 %v2203
    %2298 = vmatpush1.bf16.msra.mxu0 %v2202
    %2299 = vmatprep.subr.bf16.mxu0 %v2207
    %2300 = vmatpush1.bf16.msra.mxu0 %v2206
    %2301 = vmatprep.subr.bf16.mxu0 %v2211
    %2302 = vmatpush1.bf16.msra.mxu0 %v2210
    %2303 = vmatprep.subr.bf16.mxu0 %v2215
    %2304 = vmatpush1.bf16.msra.mxu0 %v2214
    %2305 = vmatprep.subr.bf16.mxu0 0
    %2306 = vmatpush1.bf16.msra.mxu0 0
    %2307 = vmatprep.subr.bf16.mxu0 0
    %2308 = vmatpush1.bf16.msra.mxu0 0
    %2309 = vmatprep.subr.bf16.mxu0 0
    %2310 = vmatpush1.bf16.msra.mxu0 0
    %2311 = vmatprep.subr.bf16.mxu0 0
    %2312 = vmatpush1.bf16.msra.mxu0 0
    %2313 = vmatprep.subr.bf16.mxu0 0
    %2314 = vmatpush1.bf16.msra.mxu0 0
    %2315 = vmatprep.subr.bf16.mxu0 0
    %2316 = vmatpush1.bf16.msra.mxu0 0
    %2317 = vmatprep.subr.bf16.mxu0 0
    %2318 = vmatpush1.bf16.msra.mxu0 0
    %2319 = vmatprep.subr.bf16.mxu0 0
    %2320 = vmatpush1.bf16.msra.mxu0 0
    %2321 = vmatprep.mubr.bf16.mxu0 0
    %2322 = vmatmul.mubr.bf16.gmra.mrb[0].mxu0 %v2055
    %v2323 = vpop.f32.mrb[0].mxu0
    %v2324 = vadd.f32 0.0, %v2323
    %v2325 = vpop.f32.mrb[0].mxu0
    %v2326 = vadd.f32 0.0, %v2325
    %v2327 = vpop.f32.mrb[0].mxu0
    %v2328 = vpop.f32.mrb[0].mxu0
    %2329 = vdwg.mxu0
    %v2330 = vadd.f32 %v2051, %v2283
    %v2331 = vadd.f32 %v2052, %v2285
    %v2332 = vadd.f32 %v2053, %v2324
    %v2333 = vadd.f32 %v2054, %v2326
    %v2334 = vmul.f32 %v2330, 0.5
    %v2335 = vtanh.pop %v2334
    %v2336 = vmul.f32 %v2335, 0.5
    %v2337 = vadd.f32 %v2336, 0.5
    %v2338 = vmul.f32 %v2331, 0.5
    %v2339 = vtanh.pop %v2338
    %v2340 = vmul.f32 %v2339, 0.5
    %v2341 = vadd.f32 %v2340, 0.5
    %v2342 = vtanh.pop %v2332
    %v2343 = vmul.f32 %v2333, 0.5
    %v2344 = vtanh.pop %v2343
    %v2345 = vmul.f32 %v2344, 0.5
    %v2346 = vadd.f32 %v2345, 0.5
    %v2347 = vmul.f32 %v2049, %v2341
    %v2348 = vmul.f32 %v2337, %v2342
    %v2349 = vadd.f32 %v2347, %v2348
    %v2350 = vtanh.pop %v2349
    %v2351 = vmul.f32 %v2346, %v2350
    %2352 = vst [vmem:[#allocation5] sm:$0xff] %v2349
    %2353 = vst [vmem:[#allocation4] sm:$0xff] %v2351
    %s2354 = scalar_lea.vmem [#allocation3], 40
    %2355 = vst [vmem:[%s2354] sm:$0xff] %v2351
    %v2356 = vld [vmem:[#allocation4] sm:$0xff]
    %v2357 = vld [vmem:[#allocation5] sm:$0xff]
    %s2358 = scalar_lea.vmem [#allocation2], 192
    %v2359 = vld [vmem:[%s2358] sm:$0xff]
    %v2360 = vld [vmem:[%s2358 + $0x8] sm:$0xff]
    %v2361 = vld [vmem:[%s2358 + $0x10] sm:$0xff]
    %v2362 = vld [vmem:[%s2358 + $0x18] sm:$0xff]
    %v2363 = vpack.c.bf16 %v2356, %v2356
    %v2364 = vld [vmem:[#allocation11] sm:$0xff]
    %v2365 = vld [vmem:[#allocation11 + $0x8] sm:$0xff]
    %v2366 = vld [vmem:[#allocation11 + $0x10] sm:$0xff]
    %v2367 = vld [vmem:[#allocation11 + $0x18] sm:$0xff]
    %v2368 = vld [vmem:[#allocation11 + $0x20] sm:$0xff]
    %v2369 = vld [vmem:[#allocation11 + $0x28] sm:$0xff]
    %v2370 = vld [vmem:[#allocation11 + $0x30] sm:$0xff]
    %v2371 = vld [vmem:[#allocation11 + $0x38] sm:$0xff]
    %v2372 = vld [vmem:[#allocation11 + $0x40] sm:$0xff]
    %v2373 = vld [vmem:[#allocation11 + $0x48] sm:$0xff]
    %v2374 = vld [vmem:[#allocation11 + $0x50] sm:$0xff]
    %v2375 = vld [vmem:[#allocation11 + $0x58] sm:$0xff]
    %v2376 = vld [vmem:[#allocation11 + $0x60] sm:$0xff]
    %v2377 = vld [vmem:[#allocation11 + $0x68] sm:$0xff]
    %v2378 = vld [vmem:[#allocation11 + $0x70] sm:$0xff]
    %v2379 = vld [vmem:[#allocation11 + $0x78] sm:$0xff]
    %v2380 = vld [vmem:[#allocation11 + $0x80] sm:$0xff]
    %v2381 = vld [vmem:[#allocation11 + $0x88] sm:$0xff]
    %v2382 = vld [vmem:[#allocation11 + $0x90] sm:$0xff]
    %v2383 = vld [vmem:[#allocation11 + $0x98] sm:$0xff]
    %v2384 = vld [vmem:[#allocation11 + $0xa0] sm:$0xff]
    %v2385 = vld [vmem:[#allocation11 + $0xa8] sm:$0xff]
    %v2386 = vld [vmem:[#allocation11 + $0xb0] sm:$0xff]
    %v2387 = vld [vmem:[#allocation11 + $0xb8] sm:$0xff]
    %v2388 = vld [vmem:[#allocation11 + $0xc0] sm:$0xff]
    %v2389 = vld [vmem:[#allocation11 + $0xc8] sm:$0xff]
    %v2390 = vld [vmem:[#allocation11 + $0xd0] sm:$0xff]
    %v2391 = vld [vmem:[#allocation11 + $0xd8] sm:$0xff]
    %v2392 = vld [vmem:[#allocation11 + $0xe0] sm:$0xff]
    %v2393 = vld [vmem:[#allocation11 + $0xe8] sm:$0xff]
    %v2394 = vld [vmem:[#allocation11 + $0xf0] sm:$0xff]
    %v2395 = vld [vmem:[#allocation11 + $0xf8] sm:$0xff]
    %v2428 = vunpack.c.l.b16 %v2364
    %v2429 = vunpack.c.h.b16 %v2364
    %v2430 = vunpack.c.l.b16 %v2365
    %v2431 = vunpack.c.h.b16 %v2365
    %v2432 = vunpack.c.l.b16 %v2366
    %v2433 = vunpack.c.h.b16 %v2366
    %v2434 = vunpack.c.l.b16 %v2367
    %v2435 = vunpack.c.h.b16 %v2367
    %v2436 = vunpack.c.l.b16 %v2368
    %v2437 = vunpack.c.h.b16 %v2368
    %v2438 = vunpack.c.l.b16 %v2369
    %v2439 = vunpack.c.h.b16 %v2369
    %v2440 = vunpack.c.l.b16 %v2370
    %v2441 = vunpack.c.h.b16 %v2370
    %v2442 = vunpack.c.l.b16 %v2371
    %v2443 = vunpack.c.h.b16 %v2371
    %v2444 = vunpack.c.l.b16 %v2372
    %v2445 = vunpack.c.h.b16 %v2372
    %v2446 = vunpack.c.l.b16 %v2373
    %v2447 = vunpack.c.h.b16 %v2373
    %v2448 = vunpack.c.l.b16 %v2374
    %v2449 = vunpack.c.h.b16 %v2374
    %v2450 = vunpack.c.l.b16 %v2375
    %v2451 = vunpack.c.h.b16 %v2375
    %v2452 = vunpack.c.l.b16 %v2376
    %v2453 = vunpack.c.h.b16 %v2376
    %v2454 = vunpack.c.l.b16 %v2377
    %v2455 = vunpack.c.h.b16 %v2377
    %v2456 = vunpack.c.l.b16 %v2378
    %v2457 = vunpack.c.h.b16 %v2378
    %v2458 = vunpack.c.l.b16 %v2379
    %v2459 = vunpack.c.h.b16 %v2379
    %v2460 = vunpack.c.l.b16 %v2380
    %v2461 = vunpack.c.h.b16 %v2380
    %v2462 = vunpack.c.l.b16 %v2381
    %v2463 = vunpack.c.h.b16 %v2381
    %v2464 = vunpack.c.l.b16 %v2382
    %v2465 = vunpack.c.h.b16 %v2382
    %v2466 = vunpack.c.l.b16 %v2383
    %v2467 = vunpack.c.h.b16 %v2383
    %v2468 = vunpack.c.l.b16 %v2384
    %v2469 = vunpack.c.h.b16 %v2384
    %v2470 = vunpack.c.l.b16 %v2385
    %v2471 = vunpack.c.h.b16 %v2385
    %v2472 = vunpack.c.l.b16 %v2386
    %v2473 = vunpack.c.h.b16 %v2386
    %v2474 = vunpack.c.l.b16 %v2387
    %v2475 = vunpack.c.h.b16 %v2387
    %v2476 = vunpack.c.l.b16 %v2388
    %v2477 = vunpack.c.h.b16 %v2388
    %v2478 = vunpack.c.l.b16 %v2389
    %v2479 = vunpack.c.h.b16 %v2389
    %v2480 = vunpack.c.l.b16 %v2390
    %v2481 = vunpack.c.h.b16 %v2390
    %v2482 = vunpack.c.l.b16 %v2391
    %v2483 = vunpack.c.h.b16 %v2391
    %v2484 = vunpack.c.l.b16 %v2392
    %v2485 = vunpack.c.h.b16 %v2392
    %v2486 = vunpack.c.l.b16 %v2393
    %v2487 = vunpack.c.h.b16 %v2393
    %v2488 = vunpack.c.l.b16 %v2394
    %v2489 = vunpack.c.h.b16 %v2394
    %v2490 = vunpack.c.l.b16 %v2395
    %v2491 = vunpack.c.h.b16 %v2395
    %v2492 = vpack.c.b16 %v2432, %v2428
    %v2493 = vpack.c.b16 %v2433, %v2429
    %v2494 = vpack.c.b16 %v2434, %v2430
    %v2495 = vpack.c.b16 %v2435, %v2431
    %v2496 = vpack.c.b16 %v2440, %v2436
    %v2497 = vpack.c.b16 %v2441, %v2437
    %v2498 = vpack.c.b16 %v2442, %v2438
    %v2499 = vpack.c.b16 %v2443, %v2439
    %v2500 = vpack.c.b16 %v2448, %v2444
    %v2501 = vpack.c.b16 %v2449, %v2445
    %v2502 = vpack.c.b16 %v2450, %v2446
    %v2503 = vpack.c.b16 %v2451, %v2447
    %v2504 = vpack.c.b16 %v2456, %v2452
    %v2505 = vpack.c.b16 %v2457, %v2453
    %v2506 = vpack.c.b16 %v2458, %v2454
    %v2507 = vpack.c.b16 %v2459, %v2455
    %v2508 = vpack.c.b16 %v2464, %v2460
    %v2509 = vpack.c.b16 %v2465, %v2461
    %v2510 = vpack.c.b16 %v2466, %v2462
    %v2511 = vpack.c.b16 %v2467, %v2463
    %v2512 = vpack.c.b16 %v2472, %v2468
    %v2513 = vpack.c.b16 %v2473, %v2469
    %v2514 = vpack.c.b16 %v2474, %v2470
    %v2515 = vpack.c.b16 %v2475, %v2471
    %v2516 = vpack.c.b16 %v2480, %v2476
    %v2517 = vpack.c.b16 %v2481, %v2477
    %v2518 = vpack.c.b16 %v2482, %v2478
    %v2519 = vpack.c.b16 %v2483, %v2479
    %v2520 = vpack.c.b16 %v2488, %v2484
    %v2521 = vpack.c.b16 %v2489, %v2485
    %v2522 = vpack.c.b16 %v2490, %v2486
    %v2523 = vpack.c.b16 %v2491, %v2487
    %2556 = vmatprep.subr.bf16.mxu0 %v2493
    %2557 = vmatpush1.bf16.msra.mxu0 %v2492
    %2558 = vmatprep.subr.bf16.mxu0 %v2497
    %2559 = vmatpush1.bf16.msra.mxu0 %v2496
    %2560 = vmatprep.subr.bf16.mxu0 %v2501
    %2561 = vmatpush1.bf16.msra.mxu0 %v2500
    %2562 = vmatprep.subr.bf16.mxu0 %v2505
    %2563 = vmatpush1.bf16.msra.mxu0 %v2504
    %2564 = vmatprep.subr.bf16.mxu0 %v2509
    %2565 = vmatpush1.bf16.msra.mxu0 %v2508
    %2566 = vmatprep.subr.bf16.mxu0 %v2513
    %2567 = vmatpush1.bf16.msra.mxu0 %v2512
    %2568 = vmatprep.subr.bf16.mxu0 %v2517
    %2569 = vmatpush1.bf16.msra.mxu0 %v2516
    %2570 = vmatprep.subr.bf16.mxu0 %v2521
    %2571 = vmatpush1.bf16.msra.mxu0 %v2520
    %2572 = vmatprep.subr.bf16.mxu0 0
    %2573 = vmatpush1.bf16.msra.mxu0 0
    %2574 = vmatprep.subr.bf16.mxu0 0
    %2575 = vmatpush1.bf16.msra.mxu0 0
    %2576 = vmatprep.subr.bf16.mxu0 0
    %2577 = vmatpush1.bf16.msra.mxu0 0
    %2578 = vmatprep.subr.bf16.mxu0 0
    %2579 = vmatpush1.bf16.msra.mxu0 0
    %2580 = vmatprep.subr.bf16.mxu0 0
    %2581 = vmatpush1.bf16.msra.mxu0 0
    %2582 = vmatprep.subr.bf16.mxu0 0
    %2583 = vmatpush1.bf16.msra.mxu0 0
    %2584 = vmatprep.subr.bf16.mxu0 0
    %2585 = vmatpush1.bf16.msra.mxu0 0
    %2586 = vmatprep.subr.bf16.mxu0 0
    %2587 = vmatpush1.bf16.msra.mxu0 0
    %2588 = vmatprep.mubr.bf16.mxu0 0
    %2589 = vmatmul.mubr.bf16.gmra.mrb[0].mxu0 %v2363
    %v2590 = vpop.f32.mrb[0].mxu0
    %v2591 = vadd.f32 0.0, %v2590
    %v2592 = vpop.f32.mrb[0].mxu0
    %v2593 = vadd.f32 0.0, %v2592
    %v2594 = vpop.f32.mrb[0].mxu0
    %v2595 = vpop.f32.mrb[0].mxu0
    %2596 = vdwg.mxu0
    %2597 = vmatprep.subr.bf16.mxu0 %v2495
    %2598 = vmatpush1.bf16.msra.mxu0 %v2494
    %2599 = vmatprep.subr.bf16.mxu0 %v2499
    %2600 = vmatpush1.bf16.msra.mxu0 %v2498
    %2601 = vmatprep.subr.bf16.mxu0 %v2503
    %2602 = vmatpush1.bf16.msra.mxu0 %v2502
    %2603 = vmatprep.subr.bf16.mxu0 %v2507
    %2604 = vmatpush1.bf16.msra.mxu0 %v2506
    %2605 = vmatprep.subr.bf16.mxu0 %v2511
    %2606 = vmatpush1.bf16.msra.mxu0 %v2510
    %2607 = vmatprep.subr.bf16.mxu0 %v2515
    %2608 = vmatpush1.bf16.msra.mxu0 %v2514
    %2609 = vmatprep.subr.bf16.mxu0 %v2519
    %2610 = vmatpush1.bf16.msra.mxu0 %v2518
    %2611 = vmatprep.subr.bf16.mxu0 %v2523
    %2612 = vmatpush1.bf16.msra.mxu0 %v2522
    %2613 = vmatprep.subr.bf16.mxu0 0
    %2614 = vmatpush1.bf16.msra.mxu0 0
    %2615 = vmatprep.subr.bf16.mxu0 0
    %2616 = vmatpush1.bf16.msra.mxu0 0
    %2617 = vmatprep.subr.bf16.mxu0 0
    %2618 = vmatpush1.bf16.msra.mxu0 0
    %2619 = vmatprep.subr.bf16.mxu0 0
    %2620 = vmatpush1.bf16.msra.mxu0 0
    %2621 = vmatprep.subr.bf16.mxu0 0
    %2622 = vmatpush1.bf16.msra.mxu0 0
    %2623 = vmatprep.subr.bf16.mxu0 0
    %2624 = vmatpush1.bf16.msra.mxu0 0
    %2625 = vmatprep.subr.bf16.mxu0 0
    %2626 = vmatpush1.bf16.msra.mxu0 0
    %2627 = vmatprep.subr.bf16.mxu0 0
    %2628 = vmatpush1.bf16.msra.mxu0 0
    %2629 = vmatprep.mubr.bf16.mxu0 0
    %2630 = vmatmul.mubr.bf16.gmra.mrb[0].mxu0 %v2363
    %v2631 = vpop.f32.mrb[0].mxu0
    %v2632 = vadd.f32 0.0, %v2631
    %v2633 = vpop.f32.mrb[0].mxu0
    %v2634 = vadd.f32 0.0, %v2633
    %v2635 = vpop.f32.mrb[0].mxu0
    %v2636 = vpop.f32.mrb[0].mxu0
    %2637 = vdwg.mxu0
    %v2638 = vadd.f32 %v2359, %v2591
    %v2639 = vadd.f32 %v2360, %v2593
    %v2640 = vadd.f32 %v2361, %v2632
    %v2641 = vadd.f32 %v2362, %v2634
    %v2642 = vmul.f32 %v2638, 0.5
    %v2643 = vtanh.pop %v2642
    %v2644 = vmul.f32 %v2643, 0.5
    %v2645 = vadd.f32 %v2644, 0.5
    %v2646 = vmul.f32 %v2639, 0.5
    %v2647 = vtanh.pop %v2646
    %v2648 = vmul.f32 %v2647, 0.5
    %v2649 = vadd.f32 %v2648, 0.5
    %v2650 = vtanh.pop %v2640
    %v2651 = vmul.f32 %v2641, 0.5
    %v2652 = vtanh.pop %v2651
    %v2653 = vmul.f32 %v2652, 0.5
    %v2654 = vadd.f32 %v2653, 0.5
    %v2655 = vmul.f32 %v2357, %v2649
    %v2656 = vmul.f32 %v2645, %v2650
    %v2657 = vadd.f32 %v2655, %v2656
    %v2658 = vtanh.pop %v2657
    %v2659 = vmul.f32 %v2654, %v2658
    %2660 = vst [vmem:[#allocation5] sm:$0xff] %v2657
    %2661 = vst [vmem:[#allocation4] sm:$0xff] %v2659
    %s2662 = scalar_lea.vmem [#allocation3], 48
    %2663 = vst [vmem:[%s2662] sm:$0xff] %v2659
    %v2664 = vld [vmem:[#allocation4] sm:$0xff]
    %v2665 = vld [vmem:[#allocation5] sm:$0xff]
    %s2666 = scalar_lea.vmem [#allocation2], 224
    %v2667 = vld [vmem:[%s2666] sm:$0xff]
    %v2668 = vld [vmem:[%s2666 + $0x8] sm:$0xff]
    %v2669 = vld [vmem:[%s2666 + $0x10] sm:$0xff]
    %v2670 = vld [vmem:[%s2666 + $0x18] sm:$0xff]
    %v2671 = vpack.c.bf16 %v2664, %v2664
    %v2672 = vld [vmem:[#allocation11] sm:$0xff]
    %v2673 = vld [vmem:[#allocation11 + $0x8] sm:$0xff]
    %v2674 = vld [vmem:[#allocation11 + $0x10] sm:$0xff]
    %v2675 = vld [vmem:[#allocation11 + $0x18] sm:$0xff]
    %v2676 = vld [vmem:[#allocation11 + $0x20] sm:$0xff]
    %v2677 = vld [vmem:[#allocation11 + $0x28] sm:$0xff]
    %v2678 = vld [vmem:[#allocation11 + $0x30] sm:$0xff]
    %v2679 = vld [vmem:[#allocation11 + $0x38] sm:$0xff]
    %v2680 = vld [vmem:[#allocation11 + $0x40] sm:$0xff]
    %v2681 = vld [vmem:[#allocation11 + $0x48] sm:$0xff]
    %v2682 = vld [vmem:[#allocation11 + $0x50] sm:$0xff]
    %v2683 = vld [vmem:[#allocation11 + $0x58] sm:$0xff]
    %v2684 = vld [vmem:[#allocation11 + $0x60] sm:$0xff]
    %v2685 = vld [vmem:[#allocation11 + $0x68] sm:$0xff]
    %v2686 = vld [vmem:[#allocation11 + $0x70] sm:$0xff]
    %v2687 = vld [vmem:[#allocation11 + $0x78] sm:$0xff]
    %v2688 = vld [vmem:[#allocation11 + $0x80] sm:$0xff]
    %v2689 = vld [vmem:[#allocation11 + $0x88] sm:$0xff]
    %v2690 = vld [vmem:[#allocation11 + $0x90] sm:$0xff]
    %v2691 = vld [vmem:[#allocation11 + $0x98] sm:$0xff]
    %v2692 = vld [vmem:[#allocation11 + $0xa0] sm:$0xff]
    %v2693 = vld [vmem:[#allocation11 + $0xa8] sm:$0xff]
    %v2694 = vld [vmem:[#allocation11 + $0xb0] sm:$0xff]
    %v2695 = vld [vmem:[#allocation11 + $0xb8] sm:$0xff]
    %v2696 = vld [vmem:[#allocation11 + $0xc0] sm:$0xff]
    %v2697 = vld [vmem:[#allocation11 + $0xc8] sm:$0xff]
    %v2698 = vld [vmem:[#allocation11 + $0xd0] sm:$0xff]
    %v2699 = vld [vmem:[#allocation11 + $0xd8] sm:$0xff]
    %v2700 = vld [vmem:[#allocation11 + $0xe0] sm:$0xff]
    %v2701 = vld [vmem:[#allocation11 + $0xe8] sm:$0xff]
    %v2702 = vld [vmem:[#allocation11 + $0xf0] sm:$0xff]
    %v2703 = vld [vmem:[#allocation11 + $0xf8] sm:$0xff]
    %v2736 = vunpack.c.l.b16 %v2672
    %v2737 = vunpack.c.h.b16 %v2672
    %v2738 = vunpack.c.l.b16 %v2673
    %v2739 = vunpack.c.h.b16 %v2673
    %v2740 = vunpack.c.l.b16 %v2674
    %v2741 = vunpack.c.h.b16 %v2674
    %v2742 = vunpack.c.l.b16 %v2675
    %v2743 = vunpack.c.h.b16 %v2675
    %v2744 = vunpack.c.l.b16 %v2676
    %v2745 = vunpack.c.h.b16 %v2676
    %v2746 = vunpack.c.l.b16 %v2677
    %v2747 = vunpack.c.h.b16 %v2677
    %v2748 = vunpack.c.l.b16 %v2678
    %v2749 = vunpack.c.h.b16 %v2678
    %v2750 = vunpack.c.l.b16 %v2679
    %v2751 = vunpack.c.h.b16 %v2679
    %v2752 = vunpack.c.l.b16 %v2680
    %v2753 = vunpack.c.h.b16 %v2680
    %v2754 = vunpack.c.l.b16 %v2681
    %v2755 = vunpack.c.h.b16 %v2681
    %v2756 = vunpack.c.l.b16 %v2682
    %v2757 = vunpack.c.h.b16 %v2682
    %v2758 = vunpack.c.l.b16 %v2683
    %v2759 = vunpack.c.h.b16 %v2683
    %v2760 = vunpack.c.l.b16 %v2684
    %v2761 = vunpack.c.h.b16 %v2684
    %v2762 = vunpack.c.l.b16 %v2685
    %v2763 = vunpack.c.h.b16 %v2685
    %v2764 = vunpack.c.l.b16 %v2686
    %v2765 = vunpack.c.h.b16 %v2686
    %v2766 = vunpack.c.l.b16 %v2687
    %v2767 = vunpack.c.h.b16 %v2687
    %v2768 = vunpack.c.l.b16 %v2688
    %v2769 = vunpack.c.h.b16 %v2688
    %v2770 = vunpack.c.l.b16 %v2689
    %v2771 = vunpack.c.h.b16 %v2689
    %v2772 = vunpack.c.l.b16 %v2690
    %v2773 = vunpack.c.h.b16 %v2690
    %v2774 = vunpack.c.l.b16 %v2691
    %v2775 = vunpack.c.h.b16 %v2691
    %v2776 = vunpack.c.l.b16 %v2692
    %v2777 = vunpack.c.h.b16 %v2692
    %v2778 = vunpack.c.l.b16 %v2693
    %v2779 = vunpack.c.h.b16 %v2693
    %v2780 = vunpack.c.l.b16 %v2694
    %v2781 = vunpack.c.h.b16 %v2694
    %v2782 = vunpack.c.l.b16 %v2695
    %v2783 = vunpack.c.h.b16 %v2695
    %v2784 = vunpack.c.l.b16 %v2696
    %v2785 = vunpack.c.h.b16 %v2696
    %v2786 = vunpack.c.l.b16 %v2697
    %v2787 = vunpack.c.h.b16 %v2697
    %v2788 = vunpack.c.l.b16 %v2698
    %v2789 = vunpack.c.h.b16 %v2698
    %v2790 = vunpack.c.l.b16 %v2699
    %v2791 = vunpack.c.h.b16 %v2699
    %v2792 = vunpack.c.l.b16 %v2700
    %v2793 = vunpack.c.h.b16 %v2700
    %v2794 = vunpack.c.l.b16 %v2701
    %v2795 = vunpack.c.h.b16 %v2701
    %v2796 = vunpack.c.l.b16 %v2702
    %v2797 = vunpack.c.h.b16 %v2702
    %v2798 = vunpack.c.l.b16 %v2703
    %v2799 = vunpack.c.h.b16 %v2703
    %v2800 = vpack.c.b16 %v2740, %v2736
    %v2801 = vpack.c.b16 %v2741, %v2737
    %v2802 = vpack.c.b16 %v2742, %v2738
    %v2803 = vpack.c.b16 %v2743, %v2739
    %v2804 = vpack.c.b16 %v2748, %v2744
    %v2805 = vpack.c.b16 %v2749, %v2745
    %v2806 = vpack.c.b16 %v2750, %v2746
    %v2807 = vpack.c.b16 %v2751, %v2747
    %v2808 = vpack.c.b16 %v2756, %v2752
    %v2809 = vpack.c.b16 %v2757, %v2753
    %v2810 = vpack.c.b16 %v2758, %v2754
    %v2811 = vpack.c.b16 %v2759, %v2755
    %v2812 = vpack.c.b16 %v2764, %v2760
    %v2813 = vpack.c.b16 %v2765, %v2761
    %v2814 = vpack.c.b16 %v2766, %v2762
    %v2815 = vpack.c.b16 %v2767, %v2763
    %v2816 = vpack.c.b16 %v2772, %v2768
    %v2817 = vpack.c.b16 %v2773, %v2769
    %v2818 = vpack.c.b16 %v2774, %v2770
    %v2819 = vpack.c.b16 %v2775, %v2771
    %v2820 = vpack.c.b16 %v2780, %v2776
    %v2821 = vpack.c.b16 %v2781, %v2777
    %v2822 = vpack.c.b16 %v2782, %v2778
    %v2823 = vpack.c.b16 %v2783, %v2779
    %v2824 = vpack.c.b16 %v2788, %v2784
    %v2825 = vpack.c.b16 %v2789, %v2785
    %v2826 = vpack.c.b16 %v2790, %v2786
    %v2827 = vpack.c.b16 %v2791, %v2787
    %v2828 = vpack.c.b16 %v2796, %v2792
    %v2829 = vpack.c.b16 %v2797, %v2793
    %v2830 = vpack.c.b16 %v2798, %v2794
    %v2831 = vpack.c.b16 %v2799, %v2795
    %2864 = vmatprep.subr.bf16.mxu0 %v2801
    %2865 = vmatpush1.bf16.msra.mxu0 %v2800
    %2866 = vmatprep.subr.bf16.mxu0 %v2805
    %2867 = vmatpush1.bf16.msra.mxu0 %v2804
    %2868 = vmatprep.subr.bf16.mxu0 %v2809
    %2869 = vmatpush1.bf16.msra.mxu0 %v2808
    %2870 = vmatprep.subr.bf16.mxu0 %v2813
    %2871 = vmatpush1.bf16.msra.mxu0 %v2812
    %2872 = vmatprep.subr.bf16.mxu0 %v2817
    %2873 = vmatpush1.bf16.msra.mxu0 %v2816
    %2874 = vmatprep.subr.bf16.mxu0 %v2821
    %2875 = vmatpush1.bf16.msra.mxu0 %v2820
    %2876 = vmatprep.subr.bf16.mxu0 %v2825
    %2877 = vmatpush1.bf16.msra.mxu0 %v2824
    %2878 = vmatprep.subr.bf16.mxu0 %v2829
    %2879 = vmatpush1.bf16.msra.mxu0 %v2828
    %2880 = vmatprep.subr.bf16.mxu0 0
    %2881 = vmatpush1.bf16.msra.mxu0 0
    %2882 = vmatprep.subr.bf16.mxu0 0
    %2883 = vmatpush1.bf16.msra.mxu0 0
    %2884 = vmatprep.subr.bf16.mxu0 0
    %2885 = vmatpush1.bf16.msra.mxu0 0
    %2886 = vmatprep.subr.bf16.mxu0 0
    %2887 = vmatpush1.bf16.msra.mxu0 0
    %2888 = vmatprep.subr.bf16.mxu0 0
    %2889 = vmatpush1.bf16.msra.mxu0 0
    %2890 = vmatprep.subr.bf16.mxu0 0
    %2891 = vmatpush1.bf16.msra.mxu0 0
    %2892 = vmatprep.subr.bf16.mxu0 0
    %2893 = vmatpush1.bf16.msra.mxu0 0
    %2894 = vmatprep.subr.bf16.mxu0 0
    %2895 = vmatpush1.bf16.msra.mxu0 0
    %2896 = vmatprep.mubr.bf16.mxu0 0
    %2897 = vmatmul.mubr.bf16.gmra.mrb[0].mxu0 %v2671
    %v2898 = vpop.f32.mrb[0].mxu0
    %v2899 = vadd.f32 0.0, %v2898
    %v2900 = vpop.f32.mrb[0].mxu0
    %v2901 = vadd.f32 0.0, %v2900
    %v2902 = vpop.f32.mrb[0].mxu0
    %v2903 = vpop.f32.mrb[0].mxu0
    %2904 = vdwg.mxu0
    %2905 = vmatprep.subr.bf16.mxu0 %v2803
    %2906 = vmatpush1.bf16.msra.mxu0 %v2802
    %2907 = vmatprep.subr.bf16.mxu0 %v2807
    %2908 = vmatpush1.bf16.msra.mxu0 %v2806
    %2909 = vmatprep.subr.bf16.mxu0 %v2811
    %2910 = vmatpush1.bf16.msra.mxu0 %v2810
    %2911 = vmatprep.subr.bf16.mxu0 %v2815
    %2912 = vmatpush1.bf16.msra.mxu0 %v2814
    %2913 = vmatprep.subr.bf16.mxu0 %v2819
    %2914 = vmatpush1.bf16.msra.mxu0 %v2818
    %2915 = vmatprep.subr.bf16.mxu0 %v2823
    %2916 = vmatpush1.bf16.msra.mxu0 %v2822
    %2917 = vmatprep.subr.bf16.mxu0 %v2827
    %2918 = vmatpush1.bf16.msra.mxu0 %v2826
    %2919 = vmatprep.subr.bf16.mxu0 %v2831
    %2920 = vmatpush1.bf16.msra.mxu0 %v2830
    %2921 = vmatprep.subr.bf16.mxu0 0
    %2922 = vmatpush1.bf16.msra.mxu0 0
    %2923 = vmatprep.subr.bf16.mxu0 0
    %2924 = vmatpush1.bf16.msra.mxu0 0
    %2925 = vmatprep.subr.bf16.mxu0 0
    %2926 = vmatpush1.bf16.msra.mxu0 0
    %2927 = vmatprep.subr.bf16.mxu0 0
    %2928 = vmatpush1.bf16.msra.mxu0 0
    %2929 = vmatprep.subr.bf16.mxu0 0
    %2930 = vmatpush1.bf16.msra.mxu0 0
    %2931 = vmatprep.subr.bf16.mxu0 0
    %2932 = vmatpush1.bf16.msra.mxu0 0
    %2933 = vmatprep.subr.bf16.mxu0 0
    %2934 = vmatpush1.bf16.msra.mxu0 0
    %2935 = vmatprep.subr.bf16.mxu0 0
    %2936 = vmatpush1.bf16.msra.mxu0 0
    %2937 = vmatprep.mubr.bf16.mxu0 0
    %2938 = vmatmul.mubr.bf16.gmra.mrb[0].mxu0 %v2671
    %v2939 = vpop.f32.mrb[0].mxu0
    %v2940 = vadd.f32 0.0, %v2939
    %v2941 = vpop.f32.mrb[0].mxu0
    %v2942 = vadd.f32 0.0, %v2941
    %v2943 = vpop.f32.mrb[0].mxu0
    %v2944 = vpop.f32.mrb[0].mxu0
    %2945 = vdwg.mxu0
    %v2946 = vadd.f32 %v2667, %v2899
    %v2947 = vadd.f32 %v2668, %v2901
    %v2948 = vadd.f32 %v2669, %v2940
    %v2949 = vadd.f32 %v2670, %v2942
    %v2950 = vmul.f32 %v2946, 0.5
    %v2951 = vtanh.pop %v2950
    %v2952 = vmul.f32 %v2951, 0.5
    %v2953 = vadd.f32 %v2952, 0.5
    %v2954 = vmul.f32 %v2947, 0.5
    %v2955 = vtanh.pop %v2954
    %v2956 = vmul.f32 %v2955, 0.5
    %v2957 = vadd.f32 %v2956, 0.5
    %v2958 = vtanh.pop %v2948
    %v2959 = vmul.f32 %v2949, 0.5
    %v2960 = vtanh.pop %v2959
    %v2961 = vmul.f32 %v2960, 0.5
    %v2962 = vadd.f32 %v2961, 0.5
    %v2963 = vmul.f32 %v2665, %v2957
    %v2964 = vmul.f32 %v2953, %v2958
    %v2965 = vadd.f32 %v2963, %v2964
    %v2966 = vtanh.pop %v2965
    %v2967 = vmul.f32 %v2962, %v2966
    %2968 = vst [vmem:[#allocation5] sm:$0xff] %v2965
    %2969 = vst [vmem:[#allocation4] sm:$0xff] %v2967
    %s2970 = scalar_lea.vmem [#allocation3], 56
    %2971 = vst [vmem:[%s2970] sm:$0xff] %v2967
    %v2972 = vld [vmem:[#allocation3] sm:$0xff]
    %v2973 = vld [vmem:[#allocation3 + $0x8] sm:$0xff]
    %v2974 = vld [vmem:[#allocation3 + $0x10] sm:$0xff]
    %v2975 = vld [vmem:[#allocation3 + $0x18] sm:$0xff]
    %v2976 = vld [vmem:[#allocation3 + $0x20] sm:$0xff]
    %v2977 = vld [vmem:[#allocation3 + $0x28] sm:$0xff]
    %v2978 = vld [vmem:[#allocation3 + $0x30] sm:$0xff]
    %v2979 = vld [vmem:[#allocation3 + $0x38] sm:$0xff]
    %v2980 = vpack.c.bf16 %v2973, %v2972
    %v2981 = vpack.c.bf16 %v2975, %v2974
    %v2982 = vpack.c.bf16 %v2977, %v2976
    %v2983 = vpack.c.bf16 %v2979, %v2978
    %v2984 = vld [vmem:[#allocation12] sm:$0xf]
    %v2985 = vld [vmem:[#allocation12 + $0x4] sm:$0xf]
    %v2986 = vld [vmem:[#allocation12 + $0x8] sm:$0xf]
    %v2987 = vld [vmem:[#allocation12 + $0xc] sm:$0xf]
    %v2988 = vld [vmem:[#allocation12 + $0x10] sm:$0xf]
    %v2989 = vld [vmem:[#allocation12 + $0x14] sm:$0xf]
    %v2990 = vld [vmem:[#allocation12 + $0x18] sm:$0xf]
    %v2991 = vld [vmem:[#allocation12 + $0x1c] sm:$0xf]
    %v2992 = vld [vmem:[#allocation12 + $0x20] sm:$0xf]
    %v2993 = vld [vmem:[#allocation12 + $0x24] sm:$0xf]
    %v2994 = vld [vmem:[#allocation12 + $0x28] sm:$0xf]
    %v2995 = vld [vmem:[#allocation12 + $0x2c] sm:$0xf]
    %v2996 = vld [vmem:[#allocation12 + $0x30] sm:$0xf]
    %v2997 = vld [vmem:[#allocation12 + $0x34] sm:$0xf]
    %v2998 = vld [vmem:[#allocation12 + $0x38] sm:$0xf]
    %v2999 = vld [vmem:[#allocation12 + $0x3c] sm:$0xf]
    %v3000 = vld [vmem:[%s5] sm:$0x1]
    %v3002 = vlaneseq
    %v3003 = vshrl.u32 %v3002, 7
    %v3004 = vsub.s32 0, %v3003
    %v3005 = vrot.slane %v3000, %v3004
    %v3023 = vunpack.c.l.b16 %v2984
    %v3024 = vunpack.c.l.b16 %v2985
    %v3025 = vunpack.c.l.b16 %v2986
    %v3026 = vunpack.c.l.b16 %v2987
    %v3027 = vunpack.c.l.b16 %v2988
    %v3028 = vunpack.c.l.b16 %v2989
    %v3029 = vunpack.c.l.b16 %v2990
    %v3030 = vunpack.c.l.b16 %v2991
    %v3031 = vunpack.c.l.b16 %v2992
    %v3032 = vunpack.c.l.b16 %v2993
    %v3033 = vunpack.c.l.b16 %v2994
    %v3034 = vunpack.c.l.b16 %v2995
    %v3035 = vunpack.c.l.b16 %v2996
    %v3036 = vunpack.c.l.b16 %v2997
    %v3037 = vunpack.c.l.b16 %v2998
    %v3038 = vunpack.c.l.b16 %v2999
    %v3039 = vpack.c.b16 %v3024, %v3023
    %v3040 = vpack.c.b16 %v3026, %v3025
    %v3041 = vpack.c.b16 %v3028, %v3027
    %v3042 = vpack.c.b16 %v3030, %v3029
    %v3043 = vpack.c.b16 %v3032, %v3031
    %v3044 = vpack.c.b16 %v3034, %v3033
    %v3045 = vpack.c.b16 %v3036, %v3035
    %v3046 = vpack.c.b16 %v3038, %v3037
    %3055 = vmatprep.subr.bf16.mxu0 0
    %3056 = vmatpush1.bf16.msra.mxu0 %v3039
    %3057 = vmatprep.subr.bf16.mxu0 0
    %3058 = vmatpush1.bf16.msra.mxu0 %v3040
    %3059 = vmatprep.subr.bf16.mxu0 0
    %3060 = vmatpush1.bf16.msra.mxu0 %v3041
    %3061 = vmatprep.subr.bf16.mxu0 0
    %3062 = vmatpush1.bf16.msra.mxu0 %v3042
    %3063 = vmatprep.subr.bf16.mxu0 0
    %3064 = vmatpush1.bf16.msra.mxu0 %v3043
    %3065 = vmatprep.subr.bf16.mxu0 0
    %3066 = vmatpush1.bf16.msra.mxu0 %v3044
    %3067 = vmatprep.subr.bf16.mxu0 0
    %3068 = vmatpush1.bf16.msra.mxu0 %v3045
    %3069 = vmatprep.subr.bf16.mxu0 0
    %3070 = vmatpush1.bf16.msra.mxu0 %v3046
    %3071 = vmatprep.subr.bf16.mxu0 0
    %3072 = vmatpush1.bf16.msra.mxu0 0
    %3073 = vmatprep.subr.bf16.mxu0 0
    %3074 = vmatpush1.bf16.msra.mxu0 0
    %3075 = vmatprep.subr.bf16.mxu0 0
    %3076 = vmatpush1.bf16.msra.mxu0 0
    %3077 = vmatprep.subr.bf16.mxu0 0
    %3078 = vmatpush1.bf16.msra.mxu0 0
    %3079 = vmatprep.subr.bf16.mxu0 0
    %3080 = vmatpush1.bf16.msra.mxu0 0
    %3081 = vmatprep.subr.bf16.mxu0 0
    %3082 = vmatpush1.bf16.msra.mxu0 0
    %3083 = vmatprep.subr.bf16.mxu0 0
    %3084 = vmatpush1.bf16.msra.mxu0 0
    %3085 = vmatprep.subr.bf16.mxu0 0
    %3086 = vmatpush1.bf16.msra.mxu0 0
    %3087 = vmatprep.mubr.bf16.mxu0 0
    %3088 = vmatmul.mubr.bf16.gmra.mrb[0].mxu0 %v2980
    %v3089 = vpop.f32.mrb[0].mxu0
    %v3090 = vadd.f32 %v3005, %v3089
    %v3091 = vpop.f32.mrb[0].mxu0
    %v3092 = vpop.f32.mrb[0].mxu0
    %v3093 = vadd.f32 %v3005, %v3092
    %v3094 = vpop.f32.mrb[0].mxu0
    %3095 = vmatprep.mubr.bf16.mxu0 0
    %3096 = vmatmul.mubr.bf16.gmra.mrb[0].mxu0 %v2981
    %v3097 = vpop.f32.mrb[0].mxu0
    %v3098 = vadd.f32 %v3005, %v3097
    %v3099 = vpop.f32.mrb[0].mxu0
    %v3100 = vpop.f32.mrb[0].mxu0
    %v3101 = vadd.f32 %v3005, %v3100
    %v3102 = vpop.f32.mrb[0].mxu0
    %3103 = vmatprep.mubr.bf16.mxu0 0
    %3104 = vmatmul.mubr.bf16.gmra.mrb[0].mxu0 %v2982
    %v3105 = vpop.f32.mrb[0].mxu0
    %v3106 = vadd.f32 %v3005, %v3105
    %v3107 = vpop.f32.mrb[0].mxu0
    %v3108 = vpop.f32.mrb[0].mxu0
    %v3109 = vadd.f32 %v3005, %v3108
    %v3110 = vpop.f32.mrb[0].mxu0
    %3111 = vmatprep.mubr.bf16.mxu0 0
    %3112 = vmatmul.mubr.bf16.gmra.mrb[0].mxu0 %v2983
    %v3113 = vpop.f32.mrb[0].mxu0
    %v3114 = vadd.f32 %v3005, %v3113
    %v3115 = vpop.f32.mrb[0].mxu0
    %v3116 = vpop.f32.mrb[0].mxu0
    %v3117 = vadd.f32 %v3005, %v3116
    %v3118 = vpop.f32.mrb[0].mxu0
    %3119 = vdwg.mxu0
    %3120 = vst [vmem:[#allocation14] sm:$0xff] %v3090
    %3121 = vst [vmem:[#allocation14 + $0x8] sm:$0xff] %v3093
    %3122 = vst [vmem:[#allocation14 + $0x10] sm:$0xff] %v3098
    %3123 = vst [vmem:[#allocation14 + $0x18] sm:$0xff] %v3101
    %3124 = vst [vmem:[#allocation14 + $0x20] sm:$0xff] %v3106
    %3125 = vst [vmem:[#allocation14 + $0x28] sm:$0xff] %v3109
    %3126 = vst [vmem:[#allocation14 + $0x30] sm:$0xff] %v3114
    %3127 = vst [vmem:[#allocation14 + $0x38] sm:$0xff] %v3117
    // Predicated region
    $region46: #{tpu_custom_call.1} parent=1 // pred_check
      _
    $region47: #{tpu_custom_call.1} parent=1 // pred_check_branch
      %3129 = sbr.rel (0) target = $region49
    $region48: #{tpu_custom_call.1} parent=1 // pred_region
      %s3131 = ssub.s32 1024, 1024
      %3132 = vsyncadd [#allocation8], %s3131
      %s3133 = sshll.u32 [#allocation14], 4
      %s3134 = int_to_ptr.vmem [resolvable:$true] %s3133
      %3139 = dma.vmem_to_hbm [thread:$0]  %s3134, 1024, %s6, [#allocation8], 128, 128, 8
    $region49: #{tpu_custom_call.1} parent=1 // pred_fallthru
      _
    // Predicated region
    $region50: #{tpu_custom_call.1} parent=1 // pred_check
      _
    $region51: #{tpu_custom_call.1} parent=1 // pred_check_branch
      %3141 = sbr.rel (0) target = $region53
    $region52: #{tpu_custom_call.1} parent=1 // pred_region
      %3142 = dma.done [#allocation8], 1024
    $region53: #{tpu_custom_call.1} parent=1 // pred_fallthru
      _
    %3143 = vsyncpa [#allocation7], 1
    %3144 = vsyncpa [#allocation10], 1
    %3145 = vsyncpa [#allocation13], 1
    %3146 = vsyncpa [#allocation8], 1

</llo_original>
